<compile_context>
chip_gen: v5e
topology: v5e:2x2
jax: 0.10.0
libtpu: 0.0.40
codegen_flags: <defaults>
</compile_context>

<pallas_src>
import functools
import math

import jax
import jax.numpy as jnp
from jax import lax
from jax.experimental import pallas as pl
from jax.experimental.pallas import tpu as pltpu

# ----------------------------- config (tiny synthetic BERT) -----------------
BATCH = 2
SEQ = 8
HIDDEN = 32           # bert hidden_size
NUM_HEADS = 2
HEAD_DIM = HIDDEN // NUM_HEADS
INTERMEDIATE = 64
NUM_LAYERS = 2
VOCAB = 100
MAX_POS = 16
TYPE_VOCAB = 2
LSTM_HIDDEN = 16
TS_LEN = 12
NUM_LABELS = 3
LN_EPS = 1e-12


def _sigmoid(x):
    return 1.0 / (1.0 + jnp.exp(-x))


def _gelu_tanh(x):
    # TODO(synk): HF BERT uses exact erf-GELU; tanh approximation used here.
    return 0.5 * x * (1.0 + jnp.tanh(0.7978845608028654 * (x + 0.044715 * x * x * x)))


def _layer_norm(x, g, b, eps):
    mu = jnp.mean(x, axis=-1, keepdims=True)
    var = jnp.mean(jnp.square(x - mu), axis=-1, keepdims=True)
    return (x - mu) * lax.rsqrt(var + eps) * g + b


# --------------------- single fused forward kernel --------------------------
def _fused_forward_kernel(emb_ref, mask_ref, emb_g_ref, emb_b_ref,
                          wqkv_ref, bqkv_ref, wo_ref, bo_ref,
                          ln1g_ref, ln1b_ref,
                          w1_ref, b1_ref, w2_ref, b2_ref,
                          ln2g_ref, ln2b_ref,
                          pool_w_ref, pool_b_ref,
                          ts_ref, wih_ref, whh_ref, lstm_b_ref,
                          fcw_bert_ref, fcw_lstm_ref, fc_b_ref,
                          out_ref,
                          *, num_layers, batch, seq, hidden, num_heads,
                          head_dim, ts_len, lstm_hidden, eps):
    # ---- embedding LayerNorm (raw embedding sum read from HBM exactly once) ----
    x = _layer_norm(emb_ref[...], emb_g_ref[...], emb_b_ref[...], eps)   # (B*S, H)

    mask3 = mask_ref[...][:, None, :]                                    # (B, 1, S)
    mask_hb = jnp.concatenate([mask3] * num_heads, axis=0)               # (nH*B, 1, S)
    scale = 1.0 / math.sqrt(head_dim)

    # ---- BERT encoder: all layers in one invocation, weights VMEM-resident ----
    for l in range(num_layers):                                          # static unroll
        # Fused QKV projection: one (H, 3H) matmul -> 96 output lanes per row.
        qkv = jnp.dot(x, wqkv_ref[l], preferred_element_type=jnp.float32) + bqkv_ref[l]
        qkv3 = qkv.reshape(batch, seq, 3 * hidden)                       # (B, S, 3H)

        # Stack heads into the einsum batch dim -> one batched dot for scores
        # and one for the context instead of a per-head Python loop.
        def heads(base):
            return jnp.concatenate(
                [qkv3[:, :, base + h * head_dim: base + (h + 1) * head_dim]
                 for h in range(num_heads)], axis=0)                     # (nH*B, S, Dh)

        q = heads(0)
        k = heads(hidden)
        v = heads(2 * hidden)

        s = jnp.einsum('bqd,bkd->bqk', q, k,
                       preferred_element_type=jnp.float32) * scale + mask_hb
        s = s - jnp.max(s, axis=-1, keepdims=True)
        p = jnp.exp(s)
        p = p / jnp.sum(p, axis=-1, keepdims=True)                       # exact softmax
        ctx = jnp.einsum('bqk,bkd->bqd', p, v,
                         preferred_element_type=jnp.float32)             # (nH*B, S, Dh)

        # Re-merge heads onto the lane dim and run a single output projection.
        ctx2d = jnp.concatenate(
            [ctx[h * batch:(h + 1) * batch].reshape(batch * seq, head_dim)
             for h in range(num_heads)], axis=-1)                        # (B*S, H)
        attn = jnp.dot(ctx2d, wo_ref[l],
                       preferred_element_type=jnp.float32) + bo_ref[l]

        # Add & LayerNorm 1, FFN (GELU), Add & LayerNorm 2 — all in VMEM.
        x = _layer_norm(attn + x, ln1g_ref[l], ln1b_ref[l], eps)
        ffn = _gelu_tanh(jnp.dot(x, w1_ref[l],
                                 preferred_element_type=jnp.float32) + b1_ref[l])
        ffn = jnp.dot(ffn, w2_ref[l],
                      preferred_element_type=jnp.float32) + b2_ref[l]
        x = _layer_norm(ffn + x, ln2g_ref[l], ln2b_ref[l], eps)

    # ---- BERT pooler: tanh([CLS] @ Wp + bp) ----
    cls_tok = x.reshape(batch, seq, hidden)[:, 0, :]                     # (B, H)
    pooled = jnp.tanh(jnp.dot(cls_tok, pool_w_ref[...],
                              preferred_element_type=jnp.float32) + pool_b_ref[...])

    # ---- LSTM over the time series (input_size == 1) ----
    ts = ts_ref[...]                                                     # (B, T)
    w_hh = whh_ref[...]                                                  # (H, 4H)
    # Hoist the input contribution off the serial path as one (B, T, 4H) tensor.
    gin = ts[:, :, None] * wih_ref[...] + lstm_b_ref[...]                # (B, T, 4H)

    h = jnp.zeros((batch, lstm_hidden), jnp.float32)
    c = jnp.zeros((batch, lstm_hidden), jnp.float32)
    for t in range(ts_len):                                              # fully unrolled
        gates = gin[:, t, :] + jnp.dot(h, w_hh, preferred_element_type=jnp.float32)
        sig = _sigmoid(gates)                                            # one EUP push
        tnh = jnp.tanh(gates)                                            # one EUP push
        i_g = sig[:, 0 * lstm_hidden:1 * lstm_hidden]                    # PyTorch order i,f,g,o
        f_g = sig[:, 1 * lstm_hidden:2 * lstm_hidden]
        g_g = tnh[:, 2 * lstm_hidden:3 * lstm_hidden]
        o_g = sig[:, 3 * lstm_hidden:4 * lstm_hidden]
        c = f_g * c + i_g * g_g
        h = o_g * jnp.tanh(c)

    # ---- classifier on concat(pooled, h), concat avoided by pre-split fc_w ----
    # TODO(synk): nn.Dropout(0.3) is identity in eval mode; training dropout not implemented.
    out_ref[...] = (jnp.dot(pooled, fcw_bert_ref[...], preferred_element_type=jnp.float32)
                    + jnp.dot(h, fcw_lstm_ref[...], preferred_element_type=jnp.float32)
                    + fc_b_ref[...])


# ----------------------------- parameters -----------------------------------
def init_params(key):
    keys = iter(jax.random.split(key, 16))

    def rnd(shape, scale=0.02):
        return jax.random.normal(next(keys), shape, jnp.float32) * scale

    L = NUM_LAYERS
    return {
        "word_emb": rnd((VOCAB, HIDDEN)),
        "pos_emb": rnd((MAX_POS, HIDDEN)),
        "type_emb": rnd((TYPE_VOCAB, HIDDEN)),
        "emb_ln_g": jnp.ones((1, HIDDEN), jnp.float32),
        "emb_ln_b": jnp.zeros((1, HIDDEN), jnp.float32),
        # per-layer weights stacked along a leading layer axis (all VMEM-resident)
        "wqkv": rnd((L, HIDDEN, 3 * HIDDEN)),
        "bqkv": jnp.zeros((L, 1, 3 * HIDDEN), jnp.float32),
        "wo": rnd((L, HIDDEN, HIDDEN)),
        "bo": jnp.zeros((L, 1, HIDDEN), jnp.float32),
        "ln1_g": jnp.ones((L, 1, HIDDEN), jnp.float32),
        "ln1_b": jnp.zeros((L, 1, HIDDEN), jnp.float32),
        "w1": rnd((L, HIDDEN, INTERMEDIATE)),
        "b1": jnp.zeros((L, 1, INTERMEDIATE), jnp.float32),
        "w2": rnd((L, INTERMEDIATE, HIDDEN)),
        "b2": jnp.zeros((L, 1, HIDDEN), jnp.float32),
        "ln2_g": jnp.ones((L, 1, HIDDEN), jnp.float32),
        "ln2_b": jnp.zeros((L, 1, HIDDEN), jnp.float32),
        "pool_w": rnd((HIDDEN, HIDDEN)),
        "pool_b": jnp.zeros((1, HIDDEN), jnp.float32),
        # LSTM in kernel layout: W_ih.T (1,4H), W_hh.T (H,4H), b_ih+b_hh (1,4H)
        "lstm_w_ih_t": rnd((1, 4 * LSTM_HIDDEN), 0.1),
        "lstm_w_hh_t": rnd((LSTM_HIDDEN, 4 * LSTM_HIDDEN), 0.1),
        "lstm_bias": jnp.zeros((1, 4 * LSTM_HIDDEN), jnp.float32),
        # classifier weight pre-split into BERT / LSTM halves (no per-call slicing)
        "fc_w_bert": rnd((HIDDEN, NUM_LABELS)),
        "fc_w_lstm": rnd((LSTM_HIDDEN, NUM_LABELS)),
        "fc_b": jnp.zeros((1, NUM_LABELS), jnp.float32),
    }


# ----------------------------- forward ---------------------------------------
def bert_lstm_forward(params, input_ids, attention_mask, time_series):
    b, s = input_ids.shape

    # BERT embeddings: table gathers are glue; the fused kernel applies the
    # embedding LayerNorm, all encoder layers, pooler, LSTM and classifier.
    # token_type_ids are all-zero (type_emb[0]), matching the reference default.
    emb = (params["word_emb"][input_ids]
           + params["pos_emb"][None, :s, :]
           + params["type_emb"][0][None, None, :])
    emb2d = emb.reshape(b * s, HIDDEN).astype(jnp.float32)
    mask_add = (1.0 - attention_mask.astype(jnp.float32)) * -10000.0      # (B, S)

    args = (emb2d, mask_add, params["emb_ln_g"], params["emb_ln_b"],
            params["wqkv"], params["bqkv"], params["wo"], params["bo"],
            params["ln1_g"], params["ln1_b"],
            params["w1"], params["b1"], params["w2"], params["b2"],
            params["ln2_g"], params["ln2_b"],
            params["pool_w"], params["pool_b"],
            time_series.astype(jnp.float32),
            params["lstm_w_ih_t"], params["lstm_w_hh_t"], params["lstm_bias"],
            params["fc_w_bert"], params["fc_w_lstm"], params["fc_b"])

    kernel = functools.partial(
        _fused_forward_kernel,
        num_layers=NUM_LAYERS, batch=b, seq=s, hidden=HIDDEN,
        num_heads=NUM_HEADS, head_dim=HEAD_DIM,
        ts_len=TS_LEN, lstm_hidden=LSTM_HIDDEN, eps=LN_EPS)

    # One gridless pallas_call: every operand is a whole VMEM-resident block
    # (total working set << 1 MiB on every TPU generation).
    return pl.pallas_call(
        kernel,
        out_shape=jax.ShapeDtypeStruct((b, NUM_LABELS), jnp.float32),
        in_specs=[pl.BlockSpec(memory_space=pltpu.MemorySpace.VMEM)] * len(args),
        out_specs=pl.BlockSpec(memory_space=pltpu.MemorySpace.VMEM),
    )(*args)


# ----------------------------- main -------------------------------------------
if __name__ == "__main__":
    key = jax.random.PRNGKey(0)
    k_ids, k_ts = jax.random.split(key)
    input_ids = jax.random.randint(k_ids, (BATCH, SEQ), 0, VOCAB, dtype=jnp.int32)
    attention_mask = jnp.ones((BATCH, SEQ), jnp.int32)
    time_series = jax.random.normal(k_ts, (BATCH, TS_LEN), jnp.float32)

    params = init_params(jax.random.PRNGKey(1))

    fwd = jax.jit(bert_lstm_forward)
    logits = fwd(params, input_ids, attention_mask, time_series)
    jax.block_until_ready(logits)
    assert logits.shape == (BATCH, NUM_LABELS)
    assert logits.dtype == jnp.float32
    print("KERNEL_OK")
</pallas_src>

<mosaic_0001>
module attributes {stable_mosaic.version = 11 : i64} {
  func.func @_fused_forward_kernel(%arg0: memref<16x32xf32, #tpu.memory_space<vmem>>, %arg1: memref<2x8xf32, #tpu.memory_space<vmem>>, %arg2: memref<1x32xf32, #tpu.memory_space<vmem>>, %arg3: memref<1x32xf32, #tpu.memory_space<vmem>>, %arg4: memref<2x32x96xf32, #tpu.memory_space<vmem>>, %arg5: memref<2x1x96xf32, #tpu.memory_space<vmem>>, %arg6: memref<2x32x32xf32, #tpu.memory_space<vmem>>, %arg7: memref<2x1x32xf32, #tpu.memory_space<vmem>>, %arg8: memref<2x1x32xf32, #tpu.memory_space<vmem>>, %arg9: memref<2x1x32xf32, #tpu.memory_space<vmem>>, %arg10: memref<2x32x64xf32, #tpu.memory_space<vmem>>, %arg11: memref<2x1x64xf32, #tpu.memory_space<vmem>>, %arg12: memref<2x64x32xf32, #tpu.memory_space<vmem>>, %arg13: memref<2x1x32xf32, #tpu.memory_space<vmem>>, %arg14: memref<2x1x32xf32, #tpu.memory_space<vmem>>, %arg15: memref<2x1x32xf32, #tpu.memory_space<vmem>>, %arg16: memref<32x32xf32, #tpu.memory_space<vmem>>, %arg17: memref<1x32xf32, #tpu.memory_space<vmem>>, %arg18: memref<2x12xf32, #tpu.memory_space<vmem>>, %arg19: memref<1x64xf32, #tpu.memory_space<vmem>>, %arg20: memref<16x64xf32, #tpu.memory_space<vmem>>, %arg21: memref<1x64xf32, #tpu.memory_space<vmem>>, %arg22: memref<32x3xf32, #tpu.memory_space<vmem>>, %arg23: memref<16x3xf32, #tpu.memory_space<vmem>>, %arg24: memref<1x3xf32, #tpu.memory_space<vmem>>, %arg25: memref<2x3xf32, #tpu.memory_space<vmem>>) attributes {dimension_semantics = [], scalar_prefetch = 0 : i64, scratch_operands = 0 : i64, tpu.core_type = #tpu.core_type<tc>} {
    %c0 = arith.constant 0 : index
    %c0_0 = arith.constant 0 : index
    %0 = vector.load %arg0[%c0, %c0_0] : memref<16x32xf32, #tpu.memory_space<vmem>>, vector<16x32xf32>
    %c0_1 = arith.constant 0 : index
    %c0_2 = arith.constant 0 : index
    %1 = vector.load %arg2[%c0_1, %c0_2] : memref<1x32xf32, #tpu.memory_space<vmem>>, vector<1x32xf32>
    %c0_3 = arith.constant 0 : index
    %c0_4 = arith.constant 0 : index
    %2 = vector.load %arg3[%c0_3, %c0_4] : memref<1x32xf32, #tpu.memory_space<vmem>>, vector<1x32xf32>
    %cst = arith.constant dense<0.000000e+00> : vector<16xf32>
    %3 = vector.multi_reduction <add>, %0, %cst [1] : vector<16x32xf32> to vector<16xf32>
    %4 = vector.shape_cast %3 : vector<16xf32> to vector<16x1xf32>
    %cst_5 = arith.constant 3.200000e+01 : f32
    %5 = vector.broadcast %cst_5 : f32 to vector<16x1xf32>
    %6 = arith.divf %4, %5 : vector<16x1xf32>
    %7 = vector.broadcast %6 : vector<16x1xf32> to vector<16x32xf32>
    %8 = arith.subf %0, %7 : vector<16x32xf32>
    %9 = arith.mulf %8, %8 : vector<16x32xf32>
    %cst_6 = arith.constant dense<0.000000e+00> : vector<16xf32>
    %10 = vector.multi_reduction <add>, %9, %cst_6 [1] : vector<16x32xf32> to vector<16xf32>
    %11 = vector.shape_cast %10 : vector<16xf32> to vector<16x1xf32>
    %cst_7 = arith.constant 3.200000e+01 : f32
    %12 = vector.broadcast %cst_7 : f32 to vector<16x1xf32>
    %13 = arith.divf %11, %12 : vector<16x1xf32>
    %14 = vector.broadcast %6 : vector<16x1xf32> to vector<16x32xf32>
    %15 = arith.subf %0, %14 : vector<16x32xf32>
    %cst_8 = arith.constant 9.99999996E-13 : f32
    %16 = vector.broadcast %cst_8 : f32 to vector<16x1xf32>
    %17 = arith.addf %13, %16 : vector<16x1xf32>
    %18 = math.rsqrt %17 : vector<16x1xf32>
    %19 = vector.broadcast %18 : vector<16x1xf32> to vector<16x32xf32>
    %20 = arith.mulf %15, %19 : vector<16x32xf32>
    %21 = vector.broadcast %1 : vector<1x32xf32> to vector<16x32xf32>
    %22 = arith.mulf %20, %21 : vector<16x32xf32>
    %23 = vector.broadcast %2 : vector<1x32xf32> to vector<16x32xf32>
    %24 = arith.addf %22, %23 : vector<16x32xf32>
    %c0_9 = arith.constant 0 : index
    %c0_10 = arith.constant 0 : index
    %25 = vector.load %arg1[%c0_9, %c0_10] : memref<2x8xf32, #tpu.memory_space<vmem>>, vector<2x8xf32>
    %26 = vector.shape_cast %25 : vector<2x8xf32> to vector<2x1x8xf32>
    %27 = tpu.concatenate %26, %26 in 0 : vector<2x1x8xf32>, vector<2x1x8xf32> -> vector<4x1x8xf32>
    %c0_11 = arith.constant 0 : index
    %c0_12 = arith.constant 0 : index
    %c0_13 = arith.constant 0 : index
    %28 = vector.load %arg4[%c0_11, %c0_12, %c0_13] : memref<2x32x96xf32, #tpu.memory_space<vmem>>, vector<1x32x96xf32>
    %29 = vector.shape_cast %28 : vector<1x32x96xf32> to vector<32x96xf32>
    %cst_14 = arith.constant dense<0.000000e+00> : vector<16x96xf32>
    %30 = tpu.matmul %24, %29, %cst_14 {dimension_numbers = #tpu.dot_dimension_numbers<[1], [0], [0], [1], [0, 0, 1, 1], [], []>} : vector<16x32xf32>, vector<32x96xf32>, vector<16x96xf32> -> vector<16x96xf32>
    %c0_15 = arith.constant 0 : index
    %c0_16 = arith.constant 0 : index
    %c0_17 = arith.constant 0 : index
    %31 = vector.load %arg5[%c0_15, %c0_16, %c0_17] : memref<2x1x96xf32, #tpu.memory_space<vmem>>, vector<1x1x96xf32>
    %32 = vector.shape_cast %31 : vector<1x1x96xf32> to vector<1x96xf32>
    %33 = vector.broadcast %32 : vector<1x96xf32> to vector<16x96xf32>
    %34 = arith.addf %30, %33 : vector<16x96xf32>
    %35 = vector.shape_cast %34 : vector<16x96xf32> to vector<2x8x96xf32>
    %36 = vector.extract_strided_slice %35 {offsets = [0, 0, 0], sizes = [2, 8, 16], strides = [1, 1, 1]} : vector<2x8x96xf32> to vector<2x8x16xf32>
    %37 = vector.extract_strided_slice %35 {offsets = [0, 0, 16], sizes = [2, 8, 16], strides = [1, 1, 1]} : vector<2x8x96xf32> to vector<2x8x16xf32>
    %38 = tpu.concatenate %36, %37 in 0 : vector<2x8x16xf32>, vector<2x8x16xf32> -> vector<4x8x16xf32>
    %39 = vector.extract_strided_slice %35 {offsets = [0, 0, 32], sizes = [2, 8, 16], strides = [1, 1, 1]} : vector<2x8x96xf32> to vector<2x8x16xf32>
    %40 = vector.extract_strided_slice %35 {offsets = [0, 0, 48], sizes = [2, 8, 16], strides = [1, 1, 1]} : vector<2x8x96xf32> to vector<2x8x16xf32>
    %41 = tpu.concatenate %39, %40 in 0 : vector<2x8x16xf32>, vector<2x8x16xf32> -> vector<4x8x16xf32>
    %42 = vector.extract_strided_slice %35 {offsets = [0, 0, 64], sizes = [2, 8, 16], strides = [1, 1, 1]} : vector<2x8x96xf32> to vector<2x8x16xf32>
    %43 = vector.extract_strided_slice %35 {offsets = [0, 0, 80], sizes = [2, 8, 16], strides = [1, 1, 1]} : vector<2x8x96xf32> to vector<2x8x16xf32>
    %44 = tpu.concatenate %42, %43 in 0 : vector<2x8x16xf32>, vector<2x8x16xf32> -> vector<4x8x16xf32>
    "tpu.trace_start"() <{level = 10 : i32, message = "bqd,bkd->bqk"}> : () -> ()
    %cst_18 = arith.constant dense<0.000000e+00> : vector<4x8x8xf32>
    %45 = tpu.matmul %38, %41, %cst_18 {dimension_numbers = #tpu.dot_dimension_numbers<[2], [2], [1], [1], [0, 0, 0, 1, 1, 1], [0], [0]>} : vector<4x8x16xf32>, vector<4x8x16xf32>, vector<4x8x8xf32> -> vector<4x8x8xf32>
    "tpu.trace_stop"() : () -> ()
    %cst_19 = arith.constant 2.500000e-01 : f32
    %46 = vector.broadcast %cst_19 : f32 to vector<4x8x8xf32>
    %47 = arith.mulf %45, %46 : vector<4x8x8xf32>
    %48 = vector.broadcast %27 : vector<4x1x8xf32> to vector<4x8x8xf32>
    %49 = arith.addf %47, %48 : vector<4x8x8xf32>
    %cst_20 = arith.constant dense<0xFF800000> : vector<4x8xf32>
    %50 = vector.multi_reduction <maximumf>, %49, %cst_20 [2] : vector<4x8x8xf32> to vector<4x8xf32>
    %51 = vector.shape_cast %50 : vector<4x8xf32> to vector<4x8x1xf32>
    %52 = vector.broadcast %51 : vector<4x8x1xf32> to vector<4x8x8xf32>
    %53 = arith.subf %49, %52 : vector<4x8x8xf32>
    %54 = math.exp %53 : vector<4x8x8xf32>
    %cst_21 = arith.constant dense<0.000000e+00> : vector<4x8xf32>
    %55 = vector.multi_reduction <add>, %54, %cst_21 [2] : vector<4x8x8xf32> to vector<4x8xf32>
    %56 = vector.shape_cast %55 : vector<4x8xf32> to vector<4x8x1xf32>
    %57 = vector.broadcast %56 : vector<4x8x1xf32> to vector<4x8x8xf32>
    %58 = arith.divf %54, %57 : vector<4x8x8xf32>
    "tpu.trace_start"() <{level = 10 : i32, message = "bqk,bkd->bqd"}> : () -> ()
    %cst_22 = arith.constant dense<0.000000e+00> : vector<4x8x16xf32>
    %59 = tpu.matmul %58, %44, %cst_22 {dimension_numbers = #tpu.dot_dimension_numbers<[2], [1], [1], [2], [0, 0, 0, 1, 1, 2], [0], [0]>} : vector<4x8x8xf32>, vector<4x8x16xf32>, vector<4x8x16xf32> -> vector<4x8x16xf32>
    "tpu.trace_stop"() : () -> ()
    %60 = vector.extract_strided_slice %59 {offsets = [0, 0, 0], sizes = [2, 8, 16], strides = [1, 1, 1]} : vector<4x8x16xf32> to vector<2x8x16xf32>
    %61 = vector.shape_cast %60 : vector<2x8x16xf32> to vector<16x16xf32>
    %62 = vector.extract_strided_slice %59 {offsets = [2, 0, 0], sizes = [2, 8, 16], strides = [1, 1, 1]} : vector<4x8x16xf32> to vector<2x8x16xf32>
    %63 = vector.shape_cast %62 : vector<2x8x16xf32> to vector<16x16xf32>
    %64 = tpu.concatenate %61, %63 in 1 : vector<16x16xf32>, vector<16x16xf32> -> vector<16x32xf32>
    %c0_23 = arith.constant 0 : index
    %c0_24 = arith.constant 0 : index
    %c0_25 = arith.constant 0 : index
    %65 = vector.load %arg6[%c0_23, %c0_24, %c0_25] : memref<2x32x32xf32, #tpu.memory_space<vmem>>, vector<1x32x32xf32>
    %66 = vector.shape_cast %65 : vector<1x32x32xf32> to vector<32x32xf32>
    %cst_26 = arith.constant dense<0.000000e+00> : vector<16x32xf32>
    %67 = tpu.matmul %64, %66, %cst_26 {dimension_numbers = #tpu.dot_dimension_numbers<[1], [0], [0], [1], [0, 0, 1, 1], [], []>} : vector<16x32xf32>, vector<32x32xf32>, vector<16x32xf32> -> vector<16x32xf32>
    %c0_27 = arith.constant 0 : index
    %c0_28 = arith.constant 0 : index
    %c0_29 = arith.constant 0 : index
    %68 = vector.load %arg7[%c0_27, %c0_28, %c0_29] : memref<2x1x32xf32, #tpu.memory_space<vmem>>, vector<1x1x32xf32>
    %69 = vector.shape_cast %68 : vector<1x1x32xf32> to vector<1x32xf32>
    %70 = vector.broadcast %69 : vector<1x32xf32> to vector<16x32xf32>
    %71 = arith.addf %67, %70 : vector<16x32xf32>
    %72 = arith.addf %71, %24 : vector<16x32xf32>
    %c0_30 = arith.constant 0 : index
    %c0_31 = arith.constant 0 : index
    %c0_32 = arith.constant 0 : index
    %73 = vector.load %arg8[%c0_30, %c0_31, %c0_32] : memref<2x1x32xf32, #tpu.memory_space<vmem>>, vector<1x1x32xf32>
    %74 = vector.shape_cast %73 : vector<1x1x32xf32> to vector<1x32xf32>
    %c0_33 = arith.constant 0 : index
    %c0_34 = arith.constant 0 : index
    %c0_35 = arith.constant 0 : index
    %75 = vector.load %arg9[%c0_33, %c0_34, %c0_35] : memref<2x1x32xf32, #tpu.memory_space<vmem>>, vector<1x1x32xf32>
    %76 = vector.shape_cast %75 : vector<1x1x32xf32> to vector<1x32xf32>
    %cst_36 = arith.constant dense<0.000000e+00> : vector<16xf32>
    %77 = vector.multi_reduction <add>, %72, %cst_36 [1] : vector<16x32xf32> to vector<16xf32>
    %78 = vector.shape_cast %77 : vector<16xf32> to vector<16x1xf32>
    %cst_37 = arith.constant 3.200000e+01 : f32
    %79 = vector.broadcast %cst_37 : f32 to vector<16x1xf32>
    %80 = arith.divf %78, %79 : vector<16x1xf32>
    %81 = vector.broadcast %80 : vector<16x1xf32> to vector<16x32xf32>
    %82 = arith.subf %72, %81 : vector<16x32xf32>
    %83 = arith.mulf %82, %82 : vector<16x32xf32>
    %cst_38 = arith.constant dense<0.000000e+00> : vector<16xf32>
    %84 = vector.multi_reduction <add>, %83, %cst_38 [1] : vector<16x32xf32> to vector<16xf32>
    %85 = vector.shape_cast %84 : vector<16xf32> to vector<16x1xf32>
    %cst_39 = arith.constant 3.200000e+01 : f32
    %86 = vector.broadcast %cst_39 : f32 to vector<16x1xf32>
    %87 = arith.divf %85, %86 : vector<16x1xf32>
    %88 = vector.broadcast %80 : vector<16x1xf32> to vector<16x32xf32>
    %89 = arith.subf %72, %88 : vector<16x32xf32>
    %cst_40 = arith.constant 9.99999996E-13 : f32
    %90 = vector.broadcast %cst_40 : f32 to vector<16x1xf32>
    %91 = arith.addf %87, %90 : vector<16x1xf32>
    %92 = math.rsqrt %91 : vector<16x1xf32>
    %93 = vector.broadcast %92 : vector<16x1xf32> to vector<16x32xf32>
    %94 = arith.mulf %89, %93 : vector<16x32xf32>
    %95 = vector.broadcast %74 : vector<1x32xf32> to vector<16x32xf32>
    %96 = arith.mulf %94, %95 : vector<16x32xf32>
    %97 = vector.broadcast %76 : vector<1x32xf32> to vector<16x32xf32>
    %98 = arith.addf %96, %97 : vector<16x32xf32>
    %c0_41 = arith.constant 0 : index
    %c0_42 = arith.constant 0 : index
    %c0_43 = arith.constant 0 : index
    %99 = vector.load %arg10[%c0_41, %c0_42, %c0_43] : memref<2x32x64xf32, #tpu.memory_space<vmem>>, vector<1x32x64xf32>
    %100 = vector.shape_cast %99 : vector<1x32x64xf32> to vector<32x64xf32>
    %cst_44 = arith.constant dense<0.000000e+00> : vector<16x64xf32>
    %101 = tpu.matmul %98, %100, %cst_44 {dimension_numbers = #tpu.dot_dimension_numbers<[1], [0], [0], [1], [0, 0, 1, 1], [], []>} : vector<16x32xf32>, vector<32x64xf32>, vector<16x64xf32> -> vector<16x64xf32>
    %c0_45 = arith.constant 0 : index
    %c0_46 = arith.constant 0 : index
    %c0_47 = arith.constant 0 : index
    %102 = vector.load %arg11[%c0_45, %c0_46, %c0_47] : memref<2x1x64xf32, #tpu.memory_space<vmem>>, vector<1x1x64xf32>
    %103 = vector.shape_cast %102 : vector<1x1x64xf32> to vector<1x64xf32>
    %104 = vector.broadcast %103 : vector<1x64xf32> to vector<16x64xf32>
    %105 = arith.addf %101, %104 : vector<16x64xf32>
    %cst_48 = arith.constant 5.000000e-01 : f32
    %106 = vector.broadcast %cst_48 : f32 to vector<16x64xf32>
    %107 = arith.mulf %106, %105 : vector<16x64xf32>
    %cst_49 = arith.constant 4.471500e-02 : f32
    %108 = vector.broadcast %cst_49 : f32 to vector<16x64xf32>
    %109 = arith.mulf %108, %105 : vector<16x64xf32>
    %110 = arith.mulf %109, %105 : vector<16x64xf32>
    %111 = arith.mulf %110, %105 : vector<16x64xf32>
    %112 = arith.addf %105, %111 : vector<16x64xf32>
    %cst_50 = arith.constant 0.797884583 : f32
    %113 = vector.broadcast %cst_50 : f32 to vector<16x64xf32>
    %114 = arith.mulf %113, %112 : vector<16x64xf32>
    %115 = math.tanh %114 : vector<16x64xf32>
    %cst_51 = arith.constant 1.000000e+00 : f32
    %116 = vector.broadcast %cst_51 : f32 to vector<16x64xf32>
    %117 = arith.addf %116, %115 : vector<16x64xf32>
    %118 = arith.mulf %107, %117 : vector<16x64xf32>
    %c0_52 = arith.constant 0 : index
    %c0_53 = arith.constant 0 : index
    %c0_54 = arith.constant 0 : index
    %119 = vector.load %arg12[%c0_52, %c0_53, %c0_54] : memref<2x64x32xf32, #tpu.memory_space<vmem>>, vector<1x64x32xf32>
    %120 = vector.shape_cast %119 : vector<1x64x32xf32> to vector<64x32xf32>
    %cst_55 = arith.constant dense<0.000000e+00> : vector<16x32xf32>
    %121 = tpu.matmul %118, %120, %cst_55 {dimension_numbers = #tpu.dot_dimension_numbers<[1], [0], [0], [1], [0, 0, 1, 1], [], []>} : vector<16x64xf32>, vector<64x32xf32>, vector<16x32xf32> -> vector<16x32xf32>
    %c0_56 = arith.constant 0 : index
    %c0_57 = arith.constant 0 : index
    %c0_58 = arith.constant 0 : index
    %122 = vector.load %arg13[%c0_56, %c0_57, %c0_58] : memref<2x1x32xf32, #tpu.memory_space<vmem>>, vector<1x1x32xf32>
    %123 = vector.shape_cast %122 : vector<1x1x32xf32> to vector<1x32xf32>
    %124 = vector.broadcast %123 : vector<1x32xf32> to vector<16x32xf32>
    %125 = arith.addf %121, %124 : vector<16x32xf32>
    %126 = arith.addf %125, %98 : vector<16x32xf32>
    %c0_59 = arith.constant 0 : index
    %c0_60 = arith.constant 0 : index
    %c0_61 = arith.constant 0 : index
    %127 = vector.load %arg14[%c0_59, %c0_60, %c0_61] : memref<2x1x32xf32, #tpu.memory_space<vmem>>, vector<1x1x32xf32>
    %128 = vector.shape_cast %127 : vector<1x1x32xf32> to vector<1x32xf32>
    %c0_62 = arith.constant 0 : index
    %c0_63 = arith.constant 0 : index
    %c0_64 = arith.constant 0 : index
    %129 = vector.load %arg15[%c0_62, %c0_63, %c0_64] : memref<2x1x32xf32, #tpu.memory_space<vmem>>, vector<1x1x32xf32>
    %130 = vector.shape_cast %129 : vector<1x1x32xf32> to vector<1x32xf32>
    %cst_65 = arith.constant dense<0.000000e+00> : vector<16xf32>
    %131 = vector.multi_reduction <add>, %126, %cst_65 [1] : vector<16x32xf32> to vector<16xf32>
    %132 = vector.shape_cast %131 : vector<16xf32> to vector<16x1xf32>
    %cst_66 = arith.constant 3.200000e+01 : f32
    %133 = vector.broadcast %cst_66 : f32 to vector<16x1xf32>
    %134 = arith.divf %132, %133 : vector<16x1xf32>
    %135 = vector.broadcast %134 : vector<16x1xf32> to vector<16x32xf32>
    %136 = arith.subf %126, %135 : vector<16x32xf32>
    %137 = arith.mulf %136, %136 : vector<16x32xf32>
    %cst_67 = arith.constant dense<0.000000e+00> : vector<16xf32>
    %138 = vector.multi_reduction <add>, %137, %cst_67 [1] : vector<16x32xf32> to vector<16xf32>
    %139 = vector.shape_cast %138 : vector<16xf32> to vector<16x1xf32>
    %cst_68 = arith.constant 3.200000e+01 : f32
    %140 = vector.broadcast %cst_68 : f32 to vector<16x1xf32>
    %141 = arith.divf %139, %140 : vector<16x1xf32>
    %142 = vector.broadcast %134 : vector<16x1xf32> to vector<16x32xf32>
    %143 = arith.subf %126, %142 : vector<16x32xf32>
    %cst_69 = arith.constant 9.99999996E-13 : f32
    %144 = vector.broadcast %cst_69 : f32 to vector<16x1xf32>
    %145 = arith.addf %141, %144 : vector<16x1xf32>
    %146 = math.rsqrt %145 : vector<16x1xf32>
    %147 = vector.broadcast %146 : vector<16x1xf32> to vector<16x32xf32>
    %148 = arith.mulf %143, %147 : vector<16x32xf32>
    %149 = vector.broadcast %128 : vector<1x32xf32> to vector<16x32xf32>
    %150 = arith.mulf %148, %149 : vector<16x32xf32>
    %151 = vector.broadcast %130 : vector<1x32xf32> to vector<16x32xf32>
    %152 = arith.addf %150, %151 : vector<16x32xf32>
    %c1 = arith.constant 1 : index
    %c0_70 = arith.constant 0 : index
    %c0_71 = arith.constant 0 : index
    %153 = vector.load %arg4[%c1, %c0_70, %c0_71] : memref<2x32x96xf32, #tpu.memory_space<vmem>>, vector<1x32x96xf32>
    %154 = vector.shape_cast %153 : vector<1x32x96xf32> to vector<32x96xf32>
    %cst_72 = arith.constant dense<0.000000e+00> : vector<16x96xf32>
    %155 = tpu.matmul %152, %154, %cst_72 {dimension_numbers = #tpu.dot_dimension_numbers<[1], [0], [0], [1], [0, 0, 1, 1], [], []>} : vector<16x32xf32>, vector<32x96xf32>, vector<16x96xf32> -> vector<16x96xf32>
    %c1_73 = arith.constant 1 : index
    %c0_74 = arith.constant 0 : index
    %c0_75 = arith.constant 0 : index
    %156 = vector.load %arg5[%c1_73, %c0_74, %c0_75] : memref<2x1x96xf32, #tpu.memory_space<vmem>>, vector<1x1x96xf32>
    %157 = vector.shape_cast %156 : vector<1x1x96xf32> to vector<1x96xf32>
    %158 = vector.broadcast %157 : vector<1x96xf32> to vector<16x96xf32>
    %159 = arith.addf %155, %158 : vector<16x96xf32>
    %160 = vector.shape_cast %159 : vector<16x96xf32> to vector<2x8x96xf32>
    %161 = vector.extract_strided_slice %160 {offsets = [0, 0, 0], sizes = [2, 8, 16], strides = [1, 1, 1]} : vector<2x8x96xf32> to vector<2x8x16xf32>
    %162 = vector.extract_strided_slice %160 {offsets = [0, 0, 16], sizes = [2, 8, 16], strides = [1, 1, 1]} : vector<2x8x96xf32> to vector<2x8x16xf32>
    %163 = tpu.concatenate %161, %162 in 0 : vector<2x8x16xf32>, vector<2x8x16xf32> -> vector<4x8x16xf32>
    %164 = vector.extract_strided_slice %160 {offsets = [0, 0, 32], sizes = [2, 8, 16], strides = [1, 1, 1]} : vector<2x8x96xf32> to vector<2x8x16xf32>
    %165 = vector.extract_strided_slice %160 {offsets = [0, 0, 48], sizes = [2, 8, 16], strides = [1, 1, 1]} : vector<2x8x96xf32> to vector<2x8x16xf32>
    %166 = tpu.concatenate %164, %165 in 0 : vector<2x8x16xf32>, vector<2x8x16xf32> -> vector<4x8x16xf32>
    %167 = vector.extract_strided_slice %160 {offsets = [0, 0, 64], sizes = [2, 8, 16], strides = [1, 1, 1]} : vector<2x8x96xf32> to vector<2x8x16xf32>
    %168 = vector.extract_strided_slice %160 {offsets = [0, 0, 80], sizes = [2, 8, 16], strides = [1, 1, 1]} : vector<2x8x96xf32> to vector<2x8x16xf32>
    %169 = tpu.concatenate %167, %168 in 0 : vector<2x8x16xf32>, vector<2x8x16xf32> -> vector<4x8x16xf32>
    "tpu.trace_start"() <{level = 10 : i32, message = "bqd,bkd->bqk"}> : () -> ()
    %cst_76 = arith.constant dense<0.000000e+00> : vector<4x8x8xf32>
    %170 = tpu.matmul %163, %166, %cst_76 {dimension_numbers = #tpu.dot_dimension_numbers<[2], [2], [1], [1], [0, 0, 0, 1, 1, 1], [0], [0]>} : vector<4x8x16xf32>, vector<4x8x16xf32>, vector<4x8x8xf32> -> vector<4x8x8xf32>
    "tpu.trace_stop"() : () -> ()
    %cst_77 = arith.constant 2.500000e-01 : f32
    %171 = vector.broadcast %cst_77 : f32 to vector<4x8x8xf32>
    %172 = arith.mulf %170, %171 : vector<4x8x8xf32>
    %173 = vector.broadcast %27 : vector<4x1x8xf32> to vector<4x8x8xf32>
    %174 = arith.addf %172, %173 : vector<4x8x8xf32>
    %cst_78 = arith.constant dense<0xFF800000> : vector<4x8xf32>
    %175 = vector.multi_reduction <maximumf>, %174, %cst_78 [2] : vector<4x8x8xf32> to vector<4x8xf32>
    %176 = vector.shape_cast %175 : vector<4x8xf32> to vector<4x8x1xf32>
    %177 = vector.broadcast %176 : vector<4x8x1xf32> to vector<4x8x8xf32>
    %178 = arith.subf %174, %177 : vector<4x8x8xf32>
    %179 = math.exp %178 : vector<4x8x8xf32>
    %cst_79 = arith.constant dense<0.000000e+00> : vector<4x8xf32>
    %180 = vector.multi_reduction <add>, %179, %cst_79 [2] : vector<4x8x8xf32> to vector<4x8xf32>
    %181 = vector.shape_cast %180 : vector<4x8xf32> to vector<4x8x1xf32>
    %182 = vector.broadcast %181 : vector<4x8x1xf32> to vector<4x8x8xf32>
    %183 = arith.divf %179, %182 : vector<4x8x8xf32>
    "tpu.trace_start"() <{level = 10 : i32, message = "bqk,bkd->bqd"}> : () -> ()
    %cst_80 = arith.constant dense<0.000000e+00> : vector<4x8x16xf32>
    %184 = tpu.matmul %183, %169, %cst_80 {dimension_numbers = #tpu.dot_dimension_numbers<[2], [1], [1], [2], [0, 0, 0, 1, 1, 2], [0], [0]>} : vector<4x8x8xf32>, vector<4x8x16xf32>, vector<4x8x16xf32> -> vector<4x8x16xf32>
    "tpu.trace_stop"() : () -> ()
    %185 = vector.extract_strided_slice %184 {offsets = [0, 0, 0], sizes = [2, 8, 16], strides = [1, 1, 1]} : vector<4x8x16xf32> to vector<2x8x16xf32>
    %186 = vector.shape_cast %185 : vector<2x8x16xf32> to vector<16x16xf32>
    %187 = vector.extract_strided_slice %184 {offsets = [2, 0, 0], sizes = [2, 8, 16], strides = [1, 1, 1]} : vector<4x8x16xf32> to vector<2x8x16xf32>
    %188 = vector.shape_cast %187 : vector<2x8x16xf32> to vector<16x16xf32>
    %189 = tpu.concatenate %186, %188 in 1 : vector<16x16xf32>, vector<16x16xf32> -> vector<16x32xf32>
    %c1_81 = arith.constant 1 : index
    %c0_82 = arith.constant 0 : index
    %c0_83 = arith.constant 0 : index
    %190 = vector.load %arg6[%c1_81, %c0_82, %c0_83] : memref<2x32x32xf32, #tpu.memory_space<vmem>>, vector<1x32x32xf32>
    %191 = vector.shape_cast %190 : vector<1x32x32xf32> to vector<32x32xf32>
    %cst_84 = arith.constant dense<0.000000e+00> : vector<16x32xf32>
    %192 = tpu.matmul %189, %191, %cst_84 {dimension_numbers = #tpu.dot_dimension_numbers<[1], [0], [0], [1], [0, 0, 1, 1], [], []>} : vector<16x32xf32>, vector<32x32xf32>, vector<16x32xf32> -> vector<16x32xf32>
    %c1_85 = arith.constant 1 : index
    %c0_86 = arith.constant 0 : index
    %c0_87 = arith.constant 0 : index
    %193 = vector.load %arg7[%c1_85, %c0_86, %c0_87] : memref<2x1x32xf32, #tpu.memory_space<vmem>>, vector<1x1x32xf32>
    %194 = vector.shape_cast %193 : vector<1x1x32xf32> to vector<1x32xf32>
    %195 = vector.broadcast %194 : vector<1x32xf32> to vector<16x32xf32>
    %196 = arith.addf %192, %195 : vector<16x32xf32>
    %197 = arith.addf %196, %152 : vector<16x32xf32>
    %c1_88 = arith.constant 1 : index
    %c0_89 = arith.constant 0 : index
    %c0_90 = arith.constant 0 : index
    %198 = vector.load %arg8[%c1_88, %c0_89, %c0_90] : memref<2x1x32xf32, #tpu.memory_space<vmem>>, vector<1x1x32xf32>
    %199 = vector.shape_cast %198 : vector<1x1x32xf32> to vector<1x32xf32>
    %c1_91 = arith.constant 1 : index
    %c0_92 = arith.constant 0 : index
    %c0_93 = arith.constant 0 : index
    %200 = vector.load %arg9[%c1_91, %c0_92, %c0_93] : memref<2x1x32xf32, #tpu.memory_space<vmem>>, vector<1x1x32xf32>
    %201 = vector.shape_cast %200 : vector<1x1x32xf32> to vector<1x32xf32>
    %cst_94 = arith.constant dense<0.000000e+00> : vector<16xf32>
    %202 = vector.multi_reduction <add>, %197, %cst_94 [1] : vector<16x32xf32> to vector<16xf32>
    %203 = vector.shape_cast %202 : vector<16xf32> to vector<16x1xf32>
    %cst_95 = arith.constant 3.200000e+01 : f32
    %204 = vector.broadcast %cst_95 : f32 to vector<16x1xf32>
    %205 = arith.divf %203, %204 : vector<16x1xf32>
    %206 = vector.broadcast %205 : vector<16x1xf32> to vector<16x32xf32>
    %207 = arith.subf %197, %206 : vector<16x32xf32>
    %208 = arith.mulf %207, %207 : vector<16x32xf32>
    %cst_96 = arith.constant dense<0.000000e+00> : vector<16xf32>
    %209 = vector.multi_reduction <add>, %208, %cst_96 [1] : vector<16x32xf32> to vector<16xf32>
    %210 = vector.shape_cast %209 : vector<16xf32> to vector<16x1xf32>
    %cst_97 = arith.constant 3.200000e+01 : f32
    %211 = vector.broadcast %cst_97 : f32 to vector<16x1xf32>
    %212 = arith.divf %210, %211 : vector<16x1xf32>
    %213 = vector.broadcast %205 : vector<16x1xf32> to vector<16x32xf32>
    %214 = arith.subf %197, %213 : vector<16x32xf32>
    %cst_98 = arith.constant 9.99999996E-13 : f32
    %215 = vector.broadcast %cst_98 : f32 to vector<16x1xf32>
    %216 = arith.addf %212, %215 : vector<16x1xf32>
    %217 = math.rsqrt %216 : vector<16x1xf32>
    %218 = vector.broadcast %217 : vector<16x1xf32> to vector<16x32xf32>
    %219 = arith.mulf %214, %218 : vector<16x32xf32>
    %220 = vector.broadcast %199 : vector<1x32xf32> to vector<16x32xf32>
    %221 = arith.mulf %219, %220 : vector<16x32xf32>
    %222 = vector.broadcast %201 : vector<1x32xf32> to vector<16x32xf32>
    %223 = arith.addf %221, %222 : vector<16x32xf32>
    %c1_99 = arith.constant 1 : index
    %c0_100 = arith.constant 0 : index
    %c0_101 = arith.constant 0 : index
    %224 = vector.load %arg10[%c1_99, %c0_100, %c0_101] : memref<2x32x64xf32, #tpu.memory_space<vmem>>, vector<1x32x64xf32>
    %225 = vector.shape_cast %224 : vector<1x32x64xf32> to vector<32x64xf32>
    %cst_102 = arith.constant dense<0.000000e+00> : vector<16x64xf32>
    %226 = tpu.matmul %223, %225, %cst_102 {dimension_numbers = #tpu.dot_dimension_numbers<[1], [0], [0], [1], [0, 0, 1, 1], [], []>} : vector<16x32xf32>, vector<32x64xf32>, vector<16x64xf32> -> vector<16x64xf32>
    %c1_103 = arith.constant 1 : index
    %c0_104 = arith.constant 0 : index
    %c0_105 = arith.constant 0 : index
    %227 = vector.load %arg11[%c1_103, %c0_104, %c0_105] : memref<2x1x64xf32, #tpu.memory_space<vmem>>, vector<1x1x64xf32>
    %228 = vector.shape_cast %227 : vector<1x1x64xf32> to vector<1x64xf32>
    %229 = vector.broadcast %228 : vector<1x64xf32> to vector<16x64xf32>
    %230 = arith.addf %226, %229 : vector<16x64xf32>
    %cst_106 = arith.constant 5.000000e-01 : f32
    %231 = vector.broadcast %cst_106 : f32 to vector<16x64xf32>
    %232 = arith.mulf %231, %230 : vector<16x64xf32>
    %cst_107 = arith.constant 4.471500e-02 : f32
    %233 = vector.broadcast %cst_107 : f32 to vector<16x64xf32>
    %234 = arith.mulf %233, %230 : vector<16x64xf32>
    %235 = arith.mulf %234, %230 : vector<16x64xf32>
    %236 = arith.mulf %235, %230 : vector<16x64xf32>
    %237 = arith.addf %230, %236 : vector<16x64xf32>
    %cst_108 = arith.constant 0.797884583 : f32
    %238 = vector.broadcast %cst_108 : f32 to vector<16x64xf32>
    %239 = arith.mulf %238, %237 : vector<16x64xf32>
    %240 = math.tanh %239 : vector<16x64xf32>
    %cst_109 = arith.constant 1.000000e+00 : f32
    %241 = vector.broadcast %cst_109 : f32 to vector<16x64xf32>
    %242 = arith.addf %241, %240 : vector<16x64xf32>
    %243 = arith.mulf %232, %242 : vector<16x64xf32>
    %c1_110 = arith.constant 1 : index
    %c0_111 = arith.constant 0 : index
    %c0_112 = arith.constant 0 : index
    %244 = vector.load %arg12[%c1_110, %c0_111, %c0_112] : memref<2x64x32xf32, #tpu.memory_space<vmem>>, vector<1x64x32xf32>
    %245 = vector.shape_cast %244 : vector<1x64x32xf32> to vector<64x32xf32>
    %cst_113 = arith.constant dense<0.000000e+00> : vector<16x32xf32>
    %246 = tpu.matmul %243, %245, %cst_113 {dimension_numbers = #tpu.dot_dimension_numbers<[1], [0], [0], [1], [0, 0, 1, 1], [], []>} : vector<16x64xf32>, vector<64x32xf32>, vector<16x32xf32> -> vector<16x32xf32>
    %c1_114 = arith.constant 1 : index
    %c0_115 = arith.constant 0 : index
    %c0_116 = arith.constant 0 : index
    %247 = vector.load %arg13[%c1_114, %c0_115, %c0_116] : memref<2x1x32xf32, #tpu.memory_space<vmem>>, vector<1x1x32xf32>
    %248 = vector.shape_cast %247 : vector<1x1x32xf32> to vector<1x32xf32>
    %249 = vector.broadcast %248 : vector<1x32xf32> to vector<16x32xf32>
    %250 = arith.addf %246, %249 : vector<16x32xf32>
    %251 = arith.addf %250, %223 : vector<16x32xf32>
    %c1_117 = arith.constant 1 : index
    %c0_118 = arith.constant 0 : index
    %c0_119 = arith.constant 0 : index
    %252 = vector.load %arg14[%c1_117, %c0_118, %c0_119] : memref<2x1x32xf32, #tpu.memory_space<vmem>>, vector<1x1x32xf32>
    %253 = vector.shape_cast %252 : vector<1x1x32xf32> to vector<1x32xf32>
    %c1_120 = arith.constant 1 : index
    %c0_121 = arith.constant 0 : index
    %c0_122 = arith.constant 0 : index
    %254 = vector.load %arg15[%c1_120, %c0_121, %c0_122] : memref<2x1x32xf32, #tpu.memory_space<vmem>>, vector<1x1x32xf32>
    %255 = vector.shape_cast %254 : vector<1x1x32xf32> to vector<1x32xf32>
    %cst_123 = arith.constant dense<0.000000e+00> : vector<16xf32>
    %256 = vector.multi_reduction <add>, %251, %cst_123 [1] : vector<16x32xf32> to vector<16xf32>
    %257 = vector.shape_cast %256 : vector<16xf32> to vector<16x1xf32>
    %cst_124 = arith.constant 3.200000e+01 : f32
    %258 = vector.broadcast %cst_124 : f32 to vector<16x1xf32>
    %259 = arith.divf %257, %258 : vector<16x1xf32>
    %260 = vector.broadcast %259 : vector<16x1xf32> to vector<16x32xf32>
    %261 = arith.subf %251, %260 : vector<16x32xf32>
    %262 = arith.mulf %261, %261 : vector<16x32xf32>
    %cst_125 = arith.constant dense<0.000000e+00> : vector<16xf32>
    %263 = vector.multi_reduction <add>, %262, %cst_125 [1] : vector<16x32xf32> to vector<16xf32>
    %264 = vector.shape_cast %263 : vector<16xf32> to vector<16x1xf32>
    %cst_126 = arith.constant 3.200000e+01 : f32
    %265 = vector.broadcast %cst_126 : f32 to vector<16x1xf32>
    %266 = arith.divf %264, %265 : vector<16x1xf32>
    %267 = vector.broadcast %259 : vector<16x1xf32> to vector<16x32xf32>
    %268 = arith.subf %251, %267 : vector<16x32xf32>
    %cst_127 = arith.constant 9.99999996E-13 : f32
    %269 = vector.broadcast %cst_127 : f32 to vector<16x1xf32>
    %270 = arith.addf %266, %269 : vector<16x1xf32>
    %271 = math.rsqrt %270 : vector<16x1xf32>
    %272 = vector.broadcast %271 : vector<16x1xf32> to vector<16x32xf32>
    %273 = arith.mulf %268, %272 : vector<16x32xf32>
    %274 = vector.broadcast %253 : vector<1x32xf32> to vector<16x32xf32>
    %275 = arith.mulf %273, %274 : vector<16x32xf32>
    %276 = vector.broadcast %255 : vector<1x32xf32> to vector<16x32xf32>
    %277 = arith.addf %275, %276 : vector<16x32xf32>
    %278 = vector.shape_cast %277 : vector<16x32xf32> to vector<2x8x32xf32>
    %279 = vector.extract_strided_slice %278 {offsets = [0, 0, 0], sizes = [2, 1, 32], strides = [1, 1, 1]} : vector<2x8x32xf32> to vector<2x1x32xf32>
    %280 = vector.shape_cast %279 : vector<2x1x32xf32> to vector<2x32xf32>
    %c0_128 = arith.constant 0 : index
    %c0_129 = arith.constant 0 : index
    %281 = vector.load %arg16[%c0_128, %c0_129] : memref<32x32xf32, #tpu.memory_space<vmem>>, vector<32x32xf32>
    %cst_130 = arith.constant dense<0.000000e+00> : vector<2x32xf32>
    %282 = tpu.matmul %280, %281, %cst_130 {dimension_numbers = #tpu.dot_dimension_numbers<[1], [0], [0], [1], [0, 0, 1, 1], [], []>} : vector<2x32xf32>, vector<32x32xf32>, vector<2x32xf32> -> vector<2x32xf32>
    %c0_131 = arith.constant 0 : index
    %c0_132 = arith.constant 0 : index
    %283 = vector.load %arg17[%c0_131, %c0_132] : memref<1x32xf32, #tpu.memory_space<vmem>>, vector<1x32xf32>
    %284 = vector.broadcast %283 : vector<1x32xf32> to vector<2x32xf32>
    %285 = arith.addf %282, %284 : vector<2x32xf32>
    %286 = math.tanh %285 : vector<2x32xf32>
    %c0_133 = arith.constant 0 : index
    %c0_134 = arith.constant 0 : index
    %287 = vector.load %arg18[%c0_133, %c0_134] : memref<2x12xf32, #tpu.memory_space<vmem>>, vector<2x12xf32>
    %c0_135 = arith.constant 0 : index
    %c0_136 = arith.constant 0 : index
    %288 = vector.load %arg20[%c0_135, %c0_136] : memref<16x64xf32, #tpu.memory_space<vmem>>, vector<16x64xf32>
    %289 = vector.shape_cast %287 : vector<2x12xf32> to vector<2x12x1xf32>
    %c0_137 = arith.constant 0 : index
    %c0_138 = arith.constant 0 : index
    %290 = vector.load %arg19[%c0_137, %c0_138] : memref<1x64xf32, #tpu.memory_space<vmem>>, vector<1x64xf32>
    %291 = vector.shape_cast %290 : vector<1x64xf32> to vector<1x1x64xf32>
    %292 = vector.broadcast %289 : vector<2x12x1xf32> to vector<2x12x64xf32>
    %293 = vector.broadcast %291 : vector<1x1x64xf32> to vector<2x12x64xf32>
    %294 = arith.mulf %292, %293 : vector<2x12x64xf32>
    %c0_139 = arith.constant 0 : index
    %c0_140 = arith.constant 0 : index
    %295 = vector.load %arg21[%c0_139, %c0_140] : memref<1x64xf32, #tpu.memory_space<vmem>>, vector<1x64xf32>
    %296 = vector.shape_cast %295 : vector<1x64xf32> to vector<1x1x64xf32>
    %297 = vector.broadcast %296 : vector<1x1x64xf32> to vector<2x12x64xf32>
    %298 = arith.addf %294, %297 : vector<2x12x64xf32>
    %cst_141 = arith.constant 0.000000e+00 : f32
    %299 = vector.broadcast %cst_141 : f32 to vector<2x16xf32>
    %cst_142 = arith.constant 0.000000e+00 : f32
    %300 = vector.broadcast %cst_142 : f32 to vector<2x16xf32>
    %301 = vector.extract_strided_slice %298 {offsets = [0, 0, 0], sizes = [2, 1, 64], strides = [1, 1, 1]} : vector<2x12x64xf32> to vector<2x1x64xf32>
    %302 = vector.shape_cast %301 : vector<2x1x64xf32> to vector<2x64xf32>
    %cst_143 = arith.constant dense<0.000000e+00> : vector<2x64xf32>
    %303 = tpu.matmul %299, %288, %cst_143 {dimension_numbers = #tpu.dot_dimension_numbers<[1], [0], [0], [1], [0, 0, 1, 1], [], []>} : vector<2x16xf32>, vector<16x64xf32>, vector<2x64xf32> -> vector<2x64xf32>
    %304 = arith.addf %302, %303 : vector<2x64xf32>
    %cst_144 = arith.constant 0.000000e+00 : f32
    %305 = vector.broadcast %cst_144 : f32 to vector<2x64xf32>
    %306 = arith.subf %305, %304 : vector<2x64xf32>
    %307 = math.exp %306 : vector<2x64xf32>
    %cst_145 = arith.constant 1.000000e+00 : f32
    %308 = vector.broadcast %cst_145 : f32 to vector<2x64xf32>
    %309 = arith.addf %308, %307 : vector<2x64xf32>
    %cst_146 = arith.constant 1.000000e+00 : f32
    %310 = vector.broadcast %cst_146 : f32 to vector<2x64xf32>
    %311 = arith.divf %310, %309 : vector<2x64xf32>
    %312 = math.tanh %304 : vector<2x64xf32>
    %313 = vector.extract_strided_slice %311 {offsets = [0, 0], sizes = [2, 16], strides = [1, 1]} : vector<2x64xf32> to vector<2x16xf32>
    %314 = vector.extract_strided_slice %311 {offsets = [0, 16], sizes = [2, 16], strides = [1, 1]} : vector<2x64xf32> to vector<2x16xf32>
    %315 = vector.extract_strided_slice %312 {offsets = [0, 32], sizes = [2, 16], strides = [1, 1]} : vector<2x64xf32> to vector<2x16xf32>
    %316 = vector.extract_strided_slice %311 {offsets = [0, 48], sizes = [2, 16], strides = [1, 1]} : vector<2x64xf32> to vector<2x16xf32>
    %317 = arith.mulf %314, %300 : vector<2x16xf32>
    %318 = arith.mulf %313, %315 : vector<2x16xf32>
    %319 = arith.addf %317, %318 : vector<2x16xf32>
    %320 = math.tanh %319 : vector<2x16xf32>
    %321 = arith.mulf %316, %320 : vector<2x16xf32>
    %322 = vector.extract_strided_slice %298 {offsets = [0, 1, 0], sizes = [2, 1, 64], strides = [1, 1, 1]} : vector<2x12x64xf32> to vector<2x1x64xf32>
    %323 = vector.shape_cast %322 : vector<2x1x64xf32> to vector<2x64xf32>
    %cst_147 = arith.constant dense<0.000000e+00> : vector<2x64xf32>
    %324 = tpu.matmul %321, %288, %cst_147 {dimension_numbers = #tpu.dot_dimension_numbers<[1], [0], [0], [1], [0, 0, 1, 1], [], []>} : vector<2x16xf32>, vector<16x64xf32>, vector<2x64xf32> -> vector<2x64xf32>
    %325 = arith.addf %323, %324 : vector<2x64xf32>
    %cst_148 = arith.constant 0.000000e+00 : f32
    %326 = vector.broadcast %cst_148 : f32 to vector<2x64xf32>
    %327 = arith.subf %326, %325 : vector<2x64xf32>
    %328 = math.exp %327 : vector<2x64xf32>
    %cst_149 = arith.constant 1.000000e+00 : f32
    %329 = vector.broadcast %cst_149 : f32 to vector<2x64xf32>
    %330 = arith.addf %329, %328 : vector<2x64xf32>
    %cst_150 = arith.constant 1.000000e+00 : f32
    %331 = vector.broadcast %cst_150 : f32 to vector<2x64xf32>
    %332 = arith.divf %331, %330 : vector<2x64xf32>
    %333 = math.tanh %325 : vector<2x64xf32>
    %334 = vector.extract_strided_slice %332 {offsets = [0, 0], sizes = [2, 16], strides = [1, 1]} : vector<2x64xf32> to vector<2x16xf32>
    %335 = vector.extract_strided_slice %332 {offsets = [0, 16], sizes = [2, 16], strides = [1, 1]} : vector<2x64xf32> to vector<2x16xf32>
    %336 = vector.extract_strided_slice %333 {offsets = [0, 32], sizes = [2, 16], strides = [1, 1]} : vector<2x64xf32> to vector<2x16xf32>
    %337 = vector.extract_strided_slice %332 {offsets = [0, 48], sizes = [2, 16], strides = [1, 1]} : vector<2x64xf32> to vector<2x16xf32>
    %338 = arith.mulf %335, %319 : vector<2x16xf32>
    %339 = arith.mulf %334, %336 : vector<2x16xf32>
    %340 = arith.addf %338, %339 : vector<2x16xf32>
    %341 = math.tanh %340 : vector<2x16xf32>
    %342 = arith.mulf %337, %341 : vector<2x16xf32>
    %343 = vector.extract_strided_slice %298 {offsets = [0, 2, 0], sizes = [2, 1, 64], strides = [1, 1, 1]} : vector<2x12x64xf32> to vector<2x1x64xf32>
    %344 = vector.shape_cast %343 : vector<2x1x64xf32> to vector<2x64xf32>
    %cst_151 = arith.constant dense<0.000000e+00> : vector<2x64xf32>
    %345 = tpu.matmul %342, %288, %cst_151 {dimension_numbers = #tpu.dot_dimension_numbers<[1], [0], [0], [1], [0, 0, 1, 1], [], []>} : vector<2x16xf32>, vector<16x64xf32>, vector<2x64xf32> -> vector<2x64xf32>
    %346 = arith.addf %344, %345 : vector<2x64xf32>
    %cst_152 = arith.constant 0.000000e+00 : f32
    %347 = vector.broadcast %cst_152 : f32 to vector<2x64xf32>
    %348 = arith.subf %347, %346 : vector<2x64xf32>
    %349 = math.exp %348 : vector<2x64xf32>
    %cst_153 = arith.constant 1.000000e+00 : f32
    %350 = vector.broadcast %cst_153 : f32 to vector<2x64xf32>
    %351 = arith.addf %350, %349 : vector<2x64xf32>
    %cst_154 = arith.constant 1.000000e+00 : f32
    %352 = vector.broadcast %cst_154 : f32 to vector<2x64xf32>
    %353 = arith.divf %352, %351 : vector<2x64xf32>
    %354 = math.tanh %346 : vector<2x64xf32>
    %355 = vector.extract_strided_slice %353 {offsets = [0, 0], sizes = [2, 16], strides = [1, 1]} : vector<2x64xf32> to vector<2x16xf32>
    %356 = vector.extract_strided_slice %353 {offsets = [0, 16], sizes = [2, 16], strides = [1, 1]} : vector<2x64xf32> to vector<2x16xf32>
    %357 = vector.extract_strided_slice %354 {offsets = [0, 32], sizes = [2, 16], strides = [1, 1]} : vector<2x64xf32> to vector<2x16xf32>
    %358 = vector.extract_strided_slice %353 {offsets = [0, 48], sizes = [2, 16], strides = [1, 1]} : vector<2x64xf32> to vector<2x16xf32>
    %359 = arith.mulf %356, %340 : vector<2x16xf32>
    %360 = arith.mulf %355, %357 : vector<2x16xf32>
    %361 = arith.addf %359, %360 : vector<2x16xf32>
    %362 = math.tanh %361 : vector<2x16xf32>
    %363 = arith.mulf %358, %362 : vector<2x16xf32>
    %364 = vector.extract_strided_slice %298 {offsets = [0, 3, 0], sizes = [2, 1, 64], strides = [1, 1, 1]} : vector<2x12x64xf32> to vector<2x1x64xf32>
    %365 = vector.shape_cast %364 : vector<2x1x64xf32> to vector<2x64xf32>
    %cst_155 = arith.constant dense<0.000000e+00> : vector<2x64xf32>
    %366 = tpu.matmul %363, %288, %cst_155 {dimension_numbers = #tpu.dot_dimension_numbers<[1], [0], [0], [1], [0, 0, 1, 1], [], []>} : vector<2x16xf32>, vector<16x64xf32>, vector<2x64xf32> -> vector<2x64xf32>
    %367 = arith.addf %365, %366 : vector<2x64xf32>
    %cst_156 = arith.constant 0.000000e+00 : f32
    %368 = vector.broadcast %cst_156 : f32 to vector<2x64xf32>
    %369 = arith.subf %368, %367 : vector<2x64xf32>
    %370 = math.exp %369 : vector<2x64xf32>
    %cst_157 = arith.constant 1.000000e+00 : f32
    %371 = vector.broadcast %cst_157 : f32 to vector<2x64xf32>
    %372 = arith.addf %371, %370 : vector<2x64xf32>
    %cst_158 = arith.constant 1.000000e+00 : f32
    %373 = vector.broadcast %cst_158 : f32 to vector<2x64xf32>
    %374 = arith.divf %373, %372 : vector<2x64xf32>
    %375 = math.tanh %367 : vector<2x64xf32>
    %376 = vector.extract_strided_slice %374 {offsets = [0, 0], sizes = [2, 16], strides = [1, 1]} : vector<2x64xf32> to vector<2x16xf32>
    %377 = vector.extract_strided_slice %374 {offsets = [0, 16], sizes = [2, 16], strides = [1, 1]} : vector<2x64xf32> to vector<2x16xf32>
    %378 = vector.extract_strided_slice %375 {offsets = [0, 32], sizes = [2, 16], strides = [1, 1]} : vector<2x64xf32> to vector<2x16xf32>
    %379 = vector.extract_strided_slice %374 {offsets = [0, 48], sizes = [2, 16], strides = [1, 1]} : vector<2x64xf32> to vector<2x16xf32>
    %380 = arith.mulf %377, %361 : vector<2x16xf32>
    %381 = arith.mulf %376, %378 : vector<2x16xf32>
    %382 = arith.addf %380, %381 : vector<2x16xf32>
    %383 = math.tanh %382 : vector<2x16xf32>
    %384 = arith.mulf %379, %383 : vector<2x16xf32>
    %385 = vector.extract_strided_slice %298 {offsets = [0, 4, 0], sizes = [2, 1, 64], strides = [1, 1, 1]} : vector<2x12x64xf32> to vector<2x1x64xf32>
    %386 = vector.shape_cast %385 : vector<2x1x64xf32> to vector<2x64xf32>
    %cst_159 = arith.constant dense<0.000000e+00> : vector<2x64xf32>
    %387 = tpu.matmul %384, %288, %cst_159 {dimension_numbers = #tpu.dot_dimension_numbers<[1], [0], [0], [1], [0, 0, 1, 1], [], []>} : vector<2x16xf32>, vector<16x64xf32>, vector<2x64xf32> -> vector<2x64xf32>
    %388 = arith.addf %386, %387 : vector<2x64xf32>
    %cst_160 = arith.constant 0.000000e+00 : f32
    %389 = vector.broadcast %cst_160 : f32 to vector<2x64xf32>
    %390 = arith.subf %389, %388 : vector<2x64xf32>
    %391 = math.exp %390 : vector<2x64xf32>
    %cst_161 = arith.constant 1.000000e+00 : f32
    %392 = vector.broadcast %cst_161 : f32 to vector<2x64xf32>
    %393 = arith.addf %392, %391 : vector<2x64xf32>
    %cst_162 = arith.constant 1.000000e+00 : f32
    %394 = vector.broadcast %cst_162 : f32 to vector<2x64xf32>
    %395 = arith.divf %394, %393 : vector<2x64xf32>
    %396 = math.tanh %388 : vector<2x64xf32>
    %397 = vector.extract_strided_slice %395 {offsets = [0, 0], sizes = [2, 16], strides = [1, 1]} : vector<2x64xf32> to vector<2x16xf32>
    %398 = vector.extract_strided_slice %395 {offsets = [0, 16], sizes = [2, 16], strides = [1, 1]} : vector<2x64xf32> to vector<2x16xf32>
    %399 = vector.extract_strided_slice %396 {offsets = [0, 32], sizes = [2, 16], strides = [1, 1]} : vector<2x64xf32> to vector<2x16xf32>
    %400 = vector.extract_strided_slice %395 {offsets = [0, 48], sizes = [2, 16], strides = [1, 1]} : vector<2x64xf32> to vector<2x16xf32>
    %401 = arith.mulf %398, %382 : vector<2x16xf32>
    %402 = arith.mulf %397, %399 : vector<2x16xf32>
    %403 = arith.addf %401, %402 : vector<2x16xf32>
    %404 = math.tanh %403 : vector<2x16xf32>
    %405 = arith.mulf %400, %404 : vector<2x16xf32>
    %406 = vector.extract_strided_slice %298 {offsets = [0, 5, 0], sizes = [2, 1, 64], strides = [1, 1, 1]} : vector<2x12x64xf32> to vector<2x1x64xf32>
    %407 = vector.shape_cast %406 : vector<2x1x64xf32> to vector<2x64xf32>
    %cst_163 = arith.constant dense<0.000000e+00> : vector<2x64xf32>
    %408 = tpu.matmul %405, %288, %cst_163 {dimension_numbers = #tpu.dot_dimension_numbers<[1], [0], [0], [1], [0, 0, 1, 1], [], []>} : vector<2x16xf32>, vector<16x64xf32>, vector<2x64xf32> -> vector<2x64xf32>
    %409 = arith.addf %407, %408 : vector<2x64xf32>
    %cst_164 = arith.constant 0.000000e+00 : f32
    %410 = vector.broadcast %cst_164 : f32 to vector<2x64xf32>
    %411 = arith.subf %410, %409 : vector<2x64xf32>
    %412 = math.exp %411 : vector<2x64xf32>
    %cst_165 = arith.constant 1.000000e+00 : f32
    %413 = vector.broadcast %cst_165 : f32 to vector<2x64xf32>
    %414 = arith.addf %413, %412 : vector<2x64xf32>
    %cst_166 = arith.constant 1.000000e+00 : f32
    %415 = vector.broadcast %cst_166 : f32 to vector<2x64xf32>
    %416 = arith.divf %415, %414 : vector<2x64xf32>
    %417 = math.tanh %409 : vector<2x64xf32>
    %418 = vector.extract_strided_slice %416 {offsets = [0, 0], sizes = [2, 16], strides = [1, 1]} : vector<2x64xf32> to vector<2x16xf32>
    %419 = vector.extract_strided_slice %416 {offsets = [0, 16], sizes = [2, 16], strides = [1, 1]} : vector<2x64xf32> to vector<2x16xf32>
    %420 = vector.extract_strided_slice %417 {offsets = [0, 32], sizes = [2, 16], strides = [1, 1]} : vector<2x64xf32> to vector<2x16xf32>
    %421 = vector.extract_strided_slice %416 {offsets = [0, 48], sizes = [2, 16], strides = [1, 1]} : vector<2x64xf32> to vector<2x16xf32>
    %422 = arith.mulf %419, %403 : vector<2x16xf32>
    %423 = arith.mulf %418, %420 : vector<2x16xf32>
    %424 = arith.addf %422, %423 : vector<2x16xf32>
    %425 = math.tanh %424 : vector<2x16xf32>
    %426 = arith.mulf %421, %425 : vector<2x16xf32>
    %427 = vector.extract_strided_slice %298 {offsets = [0, 6, 0], sizes = [2, 1, 64], strides = [1, 1, 1]} : vector<2x12x64xf32> to vector<2x1x64xf32>
    %428 = vector.shape_cast %427 : vector<2x1x64xf32> to vector<2x64xf32>
    %cst_167 = arith.constant dense<0.000000e+00> : vector<2x64xf32>
    %429 = tpu.matmul %426, %288, %cst_167 {dimension_numbers = #tpu.dot_dimension_numbers<[1], [0], [0], [1], [0, 0, 1, 1], [], []>} : vector<2x16xf32>, vector<16x64xf32>, vector<2x64xf32> -> vector<2x64xf32>
    %430 = arith.addf %428, %429 : vector<2x64xf32>
    %cst_168 = arith.constant 0.000000e+00 : f32
    %431 = vector.broadcast %cst_168 : f32 to vector<2x64xf32>
    %432 = arith.subf %431, %430 : vector<2x64xf32>
    %433 = math.exp %432 : vector<2x64xf32>
    %cst_169 = arith.constant 1.000000e+00 : f32
    %434 = vector.broadcast %cst_169 : f32 to vector<2x64xf32>
    %435 = arith.addf %434, %433 : vector<2x64xf32>
    %cst_170 = arith.constant 1.000000e+00 : f32
    %436 = vector.broadcast %cst_170 : f32 to vector<2x64xf32>
    %437 = arith.divf %436, %435 : vector<2x64xf32>
    %438 = math.tanh %430 : vector<2x64xf32>
    %439 = vector.extract_strided_slice %437 {offsets = [0, 0], sizes = [2, 16], strides = [1, 1]} : vector<2x64xf32> to vector<2x16xf32>
    %440 = vector.extract_strided_slice %437 {offsets = [0, 16], sizes = [2, 16], strides = [1, 1]} : vector<2x64xf32> to vector<2x16xf32>
    %441 = vector.extract_strided_slice %438 {offsets = [0, 32], sizes = [2, 16], strides = [1, 1]} : vector<2x64xf32> to vector<2x16xf32>
    %442 = vector.extract_strided_slice %437 {offsets = [0, 48], sizes = [2, 16], strides = [1, 1]} : vector<2x64xf32> to vector<2x16xf32>
    %443 = arith.mulf %440, %424 : vector<2x16xf32>
    %444 = arith.mulf %439, %441 : vector<2x16xf32>
    %445 = arith.addf %443, %444 : vector<2x16xf32>
    %446 = math.tanh %445 : vector<2x16xf32>
    %447 = arith.mulf %442, %446 : vector<2x16xf32>
    %448 = vector.extract_strided_slice %298 {offsets = [0, 7, 0], sizes = [2, 1, 64], strides = [1, 1, 1]} : vector<2x12x64xf32> to vector<2x1x64xf32>
    %449 = vector.shape_cast %448 : vector<2x1x64xf32> to vector<2x64xf32>
    %cst_171 = arith.constant dense<0.000000e+00> : vector<2x64xf32>
    %450 = tpu.matmul %447, %288, %cst_171 {dimension_numbers = #tpu.dot_dimension_numbers<[1], [0], [0], [1], [0, 0, 1, 1], [], []>} : vector<2x16xf32>, vector<16x64xf32>, vector<2x64xf32> -> vector<2x64xf32>
    %451 = arith.addf %449, %450 : vector<2x64xf32>
    %cst_172 = arith.constant 0.000000e+00 : f32
    %452 = vector.broadcast %cst_172 : f32 to vector<2x64xf32>
    %453 = arith.subf %452, %451 : vector<2x64xf32>
    %454 = math.exp %453 : vector<2x64xf32>
    %cst_173 = arith.constant 1.000000e+00 : f32
    %455 = vector.broadcast %cst_173 : f32 to vector<2x64xf32>
    %456 = arith.addf %455, %454 : vector<2x64xf32>
    %cst_174 = arith.constant 1.000000e+00 : f32
    %457 = vector.broadcast %cst_174 : f32 to vector<2x64xf32>
    %458 = arith.divf %457, %456 : vector<2x64xf32>
    %459 = math.tanh %451 : vector<2x64xf32>
    %460 = vector.extract_strided_slice %458 {offsets = [0, 0], sizes = [2, 16], strides = [1, 1]} : vector<2x64xf32> to vector<2x16xf32>
    %461 = vector.extract_strided_slice %458 {offsets = [0, 16], sizes = [2, 16], strides = [1, 1]} : vector<2x64xf32> to vector<2x16xf32>
    %462 = vector.extract_strided_slice %459 {offsets = [0, 32], sizes = [2, 16], strides = [1, 1]} : vector<2x64xf32> to vector<2x16xf32>
    %463 = vector.extract_strided_slice %458 {offsets = [0, 48], sizes = [2, 16], strides = [1, 1]} : vector<2x64xf32> to vector<2x16xf32>
    %464 = arith.mulf %461, %445 : vector<2x16xf32>
    %465 = arith.mulf %460, %462 : vector<2x16xf32>
    %466 = arith.addf %464, %465 : vector<2x16xf32>
    %467 = math.tanh %466 : vector<2x16xf32>
    %468 = arith.mulf %463, %467 : vector<2x16xf32>
    %469 = vector.extract_strided_slice %298 {offsets = [0, 8, 0], sizes = [2, 1, 64], strides = [1, 1, 1]} : vector<2x12x64xf32> to vector<2x1x64xf32>
    %470 = vector.shape_cast %469 : vector<2x1x64xf32> to vector<2x64xf32>
    %cst_175 = arith.constant dense<0.000000e+00> : vector<2x64xf32>
    %471 = tpu.matmul %468, %288, %cst_175 {dimension_numbers = #tpu.dot_dimension_numbers<[1], [0], [0], [1], [0, 0, 1, 1], [], []>} : vector<2x16xf32>, vector<16x64xf32>, vector<2x64xf32> -> vector<2x64xf32>
    %472 = arith.addf %470, %471 : vector<2x64xf32>
    %cst_176 = arith.constant 0.000000e+00 : f32
    %473 = vector.broadcast %cst_176 : f32 to vector<2x64xf32>
    %474 = arith.subf %473, %472 : vector<2x64xf32>
    %475 = math.exp %474 : vector<2x64xf32>
    %cst_177 = arith.constant 1.000000e+00 : f32
    %476 = vector.broadcast %cst_177 : f32 to vector<2x64xf32>
    %477 = arith.addf %476, %475 : vector<2x64xf32>
    %cst_178 = arith.constant 1.000000e+00 : f32
    %478 = vector.broadcast %cst_178 : f32 to vector<2x64xf32>
    %479 = arith.divf %478, %477 : vector<2x64xf32>
    %480 = math.tanh %472 : vector<2x64xf32>
    %481 = vector.extract_strided_slice %479 {offsets = [0, 0], sizes = [2, 16], strides = [1, 1]} : vector<2x64xf32> to vector<2x16xf32>
    %482 = vector.extract_strided_slice %479 {offsets = [0, 16], sizes = [2, 16], strides = [1, 1]} : vector<2x64xf32> to vector<2x16xf32>
    %483 = vector.extract_strided_slice %480 {offsets = [0, 32], sizes = [2, 16], strides = [1, 1]} : vector<2x64xf32> to vector<2x16xf32>
    %484 = vector.extract_strided_slice %479 {offsets = [0, 48], sizes = [2, 16], strides = [1, 1]} : vector<2x64xf32> to vector<2x16xf32>
    %485 = arith.mulf %482, %466 : vector<2x16xf32>
    %486 = arith.mulf %481, %483 : vector<2x16xf32>
    %487 = arith.addf %485, %486 : vector<2x16xf32>
    %488 = math.tanh %487 : vector<2x16xf32>
    %489 = arith.mulf %484, %488 : vector<2x16xf32>
    %490 = vector.extract_strided_slice %298 {offsets = [0, 9, 0], sizes = [2, 1, 64], strides = [1, 1, 1]} : vector<2x12x64xf32> to vector<2x1x64xf32>
    %491 = vector.shape_cast %490 : vector<2x1x64xf32> to vector<2x64xf32>
    %cst_179 = arith.constant dense<0.000000e+00> : vector<2x64xf32>
    %492 = tpu.matmul %489, %288, %cst_179 {dimension_numbers = #tpu.dot_dimension_numbers<[1], [0], [0], [1], [0, 0, 1, 1], [], []>} : vector<2x16xf32>, vector<16x64xf32>, vector<2x64xf32> -> vector<2x64xf32>
    %493 = arith.addf %491, %492 : vector<2x64xf32>
    %cst_180 = arith.constant 0.000000e+00 : f32
    %494 = vector.broadcast %cst_180 : f32 to vector<2x64xf32>
    %495 = arith.subf %494, %493 : vector<2x64xf32>
    %496 = math.exp %495 : vector<2x64xf32>
    %cst_181 = arith.constant 1.000000e+00 : f32
    %497 = vector.broadcast %cst_181 : f32 to vector<2x64xf32>
    %498 = arith.addf %497, %496 : vector<2x64xf32>
    %cst_182 = arith.constant 1.000000e+00 : f32
    %499 = vector.broadcast %cst_182 : f32 to vector<2x64xf32>
    %500 = arith.divf %499, %498 : vector<2x64xf32>
    %501 = math.tanh %493 : vector<2x64xf32>
    %502 = vector.extract_strided_slice %500 {offsets = [0, 0], sizes = [2, 16], strides = [1, 1]} : vector<2x64xf32> to vector<2x16xf32>
    %503 = vector.extract_strided_slice %500 {offsets = [0, 16], sizes = [2, 16], strides = [1, 1]} : vector<2x64xf32> to vector<2x16xf32>
    %504 = vector.extract_strided_slice %501 {offsets = [0, 32], sizes = [2, 16], strides = [1, 1]} : vector<2x64xf32> to vector<2x16xf32>
    %505 = vector.extract_strided_slice %500 {offsets = [0, 48], sizes = [2, 16], strides = [1, 1]} : vector<2x64xf32> to vector<2x16xf32>
    %506 = arith.mulf %503, %487 : vector<2x16xf32>
    %507 = arith.mulf %502, %504 : vector<2x16xf32>
    %508 = arith.addf %506, %507 : vector<2x16xf32>
    %509 = math.tanh %508 : vector<2x16xf32>
    %510 = arith.mulf %505, %509 : vector<2x16xf32>
    %511 = vector.extract_strided_slice %298 {offsets = [0, 10, 0], sizes = [2, 1, 64], strides = [1, 1, 1]} : vector<2x12x64xf32> to vector<2x1x64xf32>
    %512 = vector.shape_cast %511 : vector<2x1x64xf32> to vector<2x64xf32>
    %cst_183 = arith.constant dense<0.000000e+00> : vector<2x64xf32>
    %513 = tpu.matmul %510, %288, %cst_183 {dimension_numbers = #tpu.dot_dimension_numbers<[1], [0], [0], [1], [0, 0, 1, 1], [], []>} : vector<2x16xf32>, vector<16x64xf32>, vector<2x64xf32> -> vector<2x64xf32>
    %514 = arith.addf %512, %513 : vector<2x64xf32>
    %cst_184 = arith.constant 0.000000e+00 : f32
    %515 = vector.broadcast %cst_184 : f32 to vector<2x64xf32>
    %516 = arith.subf %515, %514 : vector<2x64xf32>
    %517 = math.exp %516 : vector<2x64xf32>
    %cst_185 = arith.constant 1.000000e+00 : f32
    %518 = vector.broadcast %cst_185 : f32 to vector<2x64xf32>
    %519 = arith.addf %518, %517 : vector<2x64xf32>
    %cst_186 = arith.constant 1.000000e+00 : f32
    %520 = vector.broadcast %cst_186 : f32 to vector<2x64xf32>
    %521 = arith.divf %520, %519 : vector<2x64xf32>
    %522 = math.tanh %514 : vector<2x64xf32>
    %523 = vector.extract_strided_slice %521 {offsets = [0, 0], sizes = [2, 16], strides = [1, 1]} : vector<2x64xf32> to vector<2x16xf32>
    %524 = vector.extract_strided_slice %521 {offsets = [0, 16], sizes = [2, 16], strides = [1, 1]} : vector<2x64xf32> to vector<2x16xf32>
    %525 = vector.extract_strided_slice %522 {offsets = [0, 32], sizes = [2, 16], strides = [1, 1]} : vector<2x64xf32> to vector<2x16xf32>
    %526 = vector.extract_strided_slice %521 {offsets = [0, 48], sizes = [2, 16], strides = [1, 1]} : vector<2x64xf32> to vector<2x16xf32>
    %527 = arith.mulf %524, %508 : vector<2x16xf32>
    %528 = arith.mulf %523, %525 : vector<2x16xf32>
    %529 = arith.addf %527, %528 : vector<2x16xf32>
    %530 = math.tanh %529 : vector<2x16xf32>
    %531 = arith.mulf %526, %530 : vector<2x16xf32>
    %532 = vector.extract_strided_slice %298 {offsets = [0, 11, 0], sizes = [2, 1, 64], strides = [1, 1, 1]} : vector<2x12x64xf32> to vector<2x1x64xf32>
    %533 = vector.shape_cast %532 : vector<2x1x64xf32> to vector<2x64xf32>
    %cst_187 = arith.constant dense<0.000000e+00> : vector<2x64xf32>
    %534 = tpu.matmul %531, %288, %cst_187 {dimension_numbers = #tpu.dot_dimension_numbers<[1], [0], [0], [1], [0, 0, 1, 1], [], []>} : vector<2x16xf32>, vector<16x64xf32>, vector<2x64xf32> -> vector<2x64xf32>
    %535 = arith.addf %533, %534 : vector<2x64xf32>
    %cst_188 = arith.constant 0.000000e+00 : f32
    %536 = vector.broadcast %cst_188 : f32 to vector<2x64xf32>
    %537 = arith.subf %536, %535 : vector<2x64xf32>
    %538 = math.exp %537 : vector<2x64xf32>
    %cst_189 = arith.constant 1.000000e+00 : f32
    %539 = vector.broadcast %cst_189 : f32 to vector<2x64xf32>
    %540 = arith.addf %539, %538 : vector<2x64xf32>
    %cst_190 = arith.constant 1.000000e+00 : f32
    %541 = vector.broadcast %cst_190 : f32 to vector<2x64xf32>
    %542 = arith.divf %541, %540 : vector<2x64xf32>
    %543 = math.tanh %535 : vector<2x64xf32>
    %544 = vector.extract_strided_slice %542 {offsets = [0, 0], sizes = [2, 16], strides = [1, 1]} : vector<2x64xf32> to vector<2x16xf32>
    %545 = vector.extract_strided_slice %542 {offsets = [0, 16], sizes = [2, 16], strides = [1, 1]} : vector<2x64xf32> to vector<2x16xf32>
    %546 = vector.extract_strided_slice %543 {offsets = [0, 32], sizes = [2, 16], strides = [1, 1]} : vector<2x64xf32> to vector<2x16xf32>
    %547 = vector.extract_strided_slice %542 {offsets = [0, 48], sizes = [2, 16], strides = [1, 1]} : vector<2x64xf32> to vector<2x16xf32>
    %548 = arith.mulf %545, %529 : vector<2x16xf32>
    %549 = arith.mulf %544, %546 : vector<2x16xf32>
    %550 = arith.addf %548, %549 : vector<2x16xf32>
    %551 = math.tanh %550 : vector<2x16xf32>
    %552 = arith.mulf %547, %551 : vector<2x16xf32>
    %c0_191 = arith.constant 0 : index
    %c0_192 = arith.constant 0 : index
    %553 = vector.load %arg22[%c0_191, %c0_192] : memref<32x3xf32, #tpu.memory_space<vmem>>, vector<32x3xf32>
    %cst_193 = arith.constant dense<0.000000e+00> : vector<2x3xf32>
    %554 = tpu.matmul %286, %553, %cst_193 {dimension_numbers = #tpu.dot_dimension_numbers<[1], [0], [0], [1], [0, 0, 1, 1], [], []>} : vector<2x32xf32>, vector<32x3xf32>, vector<2x3xf32> -> vector<2x3xf32>
    %c0_194 = arith.constant 0 : index
    %c0_195 = arith.constant 0 : index
    %555 = vector.load %arg23[%c0_194, %c0_195] : memref<16x3xf32, #tpu.memory_space<vmem>>, vector<16x3xf32>
    %cst_196 = arith.constant dense<0.000000e+00> : vector<2x3xf32>
    %556 = tpu.matmul %552, %555, %cst_196 {dimension_numbers = #tpu.dot_dimension_numbers<[1], [0], [0], [1], [0, 0, 1, 1], [], []>} : vector<2x16xf32>, vector<16x3xf32>, vector<2x3xf32> -> vector<2x3xf32>
    %557 = arith.addf %554, %556 : vector<2x3xf32>
    %c0_197 = arith.constant 0 : index
    %c0_198 = arith.constant 0 : index
    %558 = vector.load %arg24[%c0_197, %c0_198] : memref<1x3xf32, #tpu.memory_space<vmem>>, vector<1x3xf32>
    %559 = vector.broadcast %558 : vector<1x3xf32> to vector<2x3xf32>
    %560 = arith.addf %557, %559 : vector<2x3xf32>
    %c0_199 = arith.constant 0 : index
    %c0_200 = arith.constant 0 : index
    %561 = vector.load %arg25[%c0_199, %c0_200] : memref<2x3xf32, #tpu.memory_space<vmem>>, vector<2x3xf32>
    tpu.vector_store %arg25[%c0_199, %c0_200], %560 {strides = array<i32>} : memref<2x3xf32, #tpu.memory_space<vmem>>, vector<2x3xf32>,
    return
  }
}

</mosaic_0001>

<llo_original>
// kernel: bert_lstm_forward.1
$region0: #{bert_lstm_forward.1}
  #allocation0 [shape = 'u32[]', space=smem, size = 0x4, offset = 0x4, fixed_abs, tag = 'smem constant byte address 0x4 - core index']
  #allocation1 [shape = 'u32[72,128]{1,0:T(1,128)}', space=vmem, size = 0x9000, scoped, tag = 'internal scratch']
  %s0 = inlined_call_operand.vmem [shape: f32[16,32], index: 0, kind: input, shape index: {}]
  %s1 = inlined_call_operand.vmem [shape: f32[2,8], index: 1, kind: input, shape index: {}]
  %s2 = inlined_call_operand.vmem [shape: f32[1,32], index: 2, kind: input, shape index: {}]
  %s3 = inlined_call_operand.vmem [shape: f32[1,32], index: 3, kind: input, shape index: {}]
  %s4 = inlined_call_operand.vmem [shape: f32[2,32,96], index: 4, kind: input, shape index: {}]
  %s5 = inlined_call_operand.vmem [shape: f32[2,1,96], index: 5, kind: input, shape index: {}]
  %s6 = inlined_call_operand.vmem [shape: f32[2,32,32], index: 6, kind: input, shape index: {}]
  %s7 = inlined_call_operand.vmem [shape: f32[2,1,32], index: 7, kind: input, shape index: {}]
  %s8 = inlined_call_operand.vmem [shape: f32[2,1,32], index: 8, kind: input, shape index: {}]
  %s9 = inlined_call_operand.vmem [shape: f32[2,1,32], index: 9, kind: input, shape index: {}]
  %s10 = inlined_call_operand.vmem [shape: f32[2,32,64], index: 10, kind: input, shape index: {}]
  %s11 = inlined_call_operand.vmem [shape: f32[2,1,64], index: 11, kind: input, shape index: {}]
  %s12 = inlined_call_operand.vmem [shape: f32[2,64,32], index: 12, kind: input, shape index: {}]
  %s13 = inlined_call_operand.vmem [shape: f32[2,1,32], index: 13, kind: input, shape index: {}]
  %s14 = inlined_call_operand.vmem [shape: f32[2,1,32], index: 14, kind: input, shape index: {}]
  %s15 = inlined_call_operand.vmem [shape: f32[2,1,32], index: 15, kind: input, shape index: {}]
  %s16 = inlined_call_operand.vmem [shape: f32[32,32], index: 16, kind: input, shape index: {}]
  %s17 = inlined_call_operand.vmem [shape: f32[1,32], index: 17, kind: input, shape index: {}]
  %s18 = inlined_call_operand.vmem [shape: f32[2,12], index: 18, kind: input, shape index: {}]
  %s19 = inlined_call_operand.vmem [shape: f32[1,64], index: 19, kind: input, shape index: {}]
  %s20 = inlined_call_operand.vmem [shape: f32[16,64], index: 20, kind: input, shape index: {}]
  %s21 = inlined_call_operand.vmem [shape: f32[1,64], index: 21, kind: input, shape index: {}]
  %s22 = inlined_call_operand.vmem [shape: f32[32,3], index: 22, kind: input, shape index: {}]
  %s23 = inlined_call_operand.vmem [shape: f32[16,3], index: 23, kind: input, shape index: {}]
  %s24 = inlined_call_operand.vmem [shape: f32[1,3], index: 24, kind: input, shape index: {}]
  %s25 = inlined_call_operand.hbm [shape: f32[2,3], index: 25, kind: output, shape index: {}]
  %s26 = sld [smem:[#allocation0]]
  $region110: #{bert_lstm_forward.1} parent=0
    _
  %s28 = ssub.s32 1, %s26
  %s29 = scalar_select 0, %s28, %s26
  $region1: #{bert_lstm_forward.1} parent=0
    #allocation2 [shape = 'u8[1024]{0}', space=vmem, size = 0x400, scoped, tag = 'output window, operand 0, single buffered']
    #allocation3 [shape = 's32[1]{0}', space=sflag, size = 0x4, scoped, tag = 'scoped memory for bert_lstm_forward.1']
    %30 = vsyncpa [#allocation3], 0
    // Predicated region
    $region2: #{bert_lstm_forward.1} parent=1 // pred_check
      _
    $region3: #{bert_lstm_forward.1} parent=1 // pred_check_branch
      %32 = sbr.rel (0) target = $region5
    $region4: #{bert_lstm_forward.1} parent=1 // pred_region
      _
    $region5: #{bert_lstm_forward.1} parent=1 // pred_fallthru
      _
    // Predicated region
    $region6: #{bert_lstm_forward.1} parent=1 // pred_check
      _
    $region7: #{bert_lstm_forward.1} parent=1 // pred_check_branch
      %34 = sbr.rel (0) target = $region9
    $region8: #{bert_lstm_forward.1} parent=1 // pred_region
      _
    $region9: #{bert_lstm_forward.1} parent=1 // pred_fallthru
      _
    // Predicated region
    $region10: #{bert_lstm_forward.1} parent=1 // pred_check
      _
    $region11: #{bert_lstm_forward.1} parent=1 // pred_check_branch
      %36 = sbr.rel (0) target = $region13
    $region12: #{bert_lstm_forward.1} parent=1 // pred_region
      _
    $region13: #{bert_lstm_forward.1} parent=1 // pred_fallthru
      _
    // Predicated region
    $region14: #{bert_lstm_forward.1} parent=1 // pred_check
      _
    $region15: #{bert_lstm_forward.1} parent=1 // pred_check_branch
      %38 = sbr.rel (0) target = $region17
    $region16: #{bert_lstm_forward.1} parent=1 // pred_region
      _
    $region17: #{bert_lstm_forward.1} parent=1 // pred_fallthru
      _
    // Predicated region
    $region18: #{bert_lstm_forward.1} parent=1 // pred_check
      _
    $region19: #{bert_lstm_forward.1} parent=1 // pred_check_branch
      %40 = sbr.rel (0) target = $region21
    $region20: #{bert_lstm_forward.1} parent=1 // pred_region
      _
    $region21: #{bert_lstm_forward.1} parent=1 // pred_fallthru
      _
    // Predicated region
    $region22: #{bert_lstm_forward.1} parent=1 // pred_check
      _
    $region23: #{bert_lstm_forward.1} parent=1 // pred_check_branch
      %42 = sbr.rel (0) target = $region25
    $region24: #{bert_lstm_forward.1} parent=1 // pred_region
      _
    $region25: #{bert_lstm_forward.1} parent=1 // pred_fallthru
      _
    // Predicated region
    $region26: #{bert_lstm_forward.1} parent=1 // pred_check
      _
    $region27: #{bert_lstm_forward.1} parent=1 // pred_check_branch
      %44 = sbr.rel (0) target = $region29
    $region28: #{bert_lstm_forward.1} parent=1 // pred_region
      _
    $region29: #{bert_lstm_forward.1} parent=1 // pred_fallthru
      _
    // Predicated region
    $region30: #{bert_lstm_forward.1} parent=1 // pred_check
      _
    $region31: #{bert_lstm_forward.1} parent=1 // pred_check_branch
      %46 = sbr.rel (0) target = $region33
    $region32: #{bert_lstm_forward.1} parent=1 // pred_region
      _
    $region33: #{bert_lstm_forward.1} parent=1 // pred_fallthru
      _
    // Predicated region
    $region34: #{bert_lstm_forward.1} parent=1 // pred_check
      _
    $region35: #{bert_lstm_forward.1} parent=1 // pred_check_branch
      %48 = sbr.rel (0) target = $region37
    $region36: #{bert_lstm_forward.1} parent=1 // pred_region
      _
    $region37: #{bert_lstm_forward.1} parent=1 // pred_fallthru
      _
    // Predicated region
    $region38: #{bert_lstm_forward.1} parent=1 // pred_check
      _
    $region39: #{bert_lstm_forward.1} parent=1 // pred_check_branch
      %50 = sbr.rel (0) target = $region41
    $region40: #{bert_lstm_forward.1} parent=1 // pred_region
      _
    $region41: #{bert_lstm_forward.1} parent=1 // pred_fallthru
      _
    // Predicated region
    $region42: #{bert_lstm_forward.1} parent=1 // pred_check
      _
    $region43: #{bert_lstm_forward.1} parent=1 // pred_check_branch
      %52 = sbr.rel (0) target = $region45
    $region44: #{bert_lstm_forward.1} parent=1 // pred_region
      _
    $region45: #{bert_lstm_forward.1} parent=1 // pred_fallthru
      _
    // Predicated region
    $region46: #{bert_lstm_forward.1} parent=1 // pred_check
      _
    $region47: #{bert_lstm_forward.1} parent=1 // pred_check_branch
      %54 = sbr.rel (0) target = $region49
    $region48: #{bert_lstm_forward.1} parent=1 // pred_region
      _
    $region49: #{bert_lstm_forward.1} parent=1 // pred_fallthru
      _
    // Predicated region
    $region50: #{bert_lstm_forward.1} parent=1 // pred_check
      _
    $region51: #{bert_lstm_forward.1} parent=1 // pred_check_branch
      %56 = sbr.rel (0) target = $region53
    $region52: #{bert_lstm_forward.1} parent=1 // pred_region
      _
    $region53: #{bert_lstm_forward.1} parent=1 // pred_fallthru
      _
    // Predicated region
    $region54: #{bert_lstm_forward.1} parent=1 // pred_check
      _
    $region55: #{bert_lstm_forward.1} parent=1 // pred_check_branch
      %58 = sbr.rel (0) target = $region57
    $region56: #{bert_lstm_forward.1} parent=1 // pred_region
      _
    $region57: #{bert_lstm_forward.1} parent=1 // pred_fallthru
      _
    // Predicated region
    $region58: #{bert_lstm_forward.1} parent=1 // pred_check
      _
    $region59: #{bert_lstm_forward.1} parent=1 // pred_check_branch
      %60 = sbr.rel (0) target = $region61
    $region60: #{bert_lstm_forward.1} parent=1 // pred_region
      _
    $region61: #{bert_lstm_forward.1} parent=1 // pred_fallthru
      _
    // Predicated region
    $region62: #{bert_lstm_forward.1} parent=1 // pred_check
      _
    $region63: #{bert_lstm_forward.1} parent=1 // pred_check_branch
      %62 = sbr.rel (0) target = $region65
    $region64: #{bert_lstm_forward.1} parent=1 // pred_region
      _
    $region65: #{bert_lstm_forward.1} parent=1 // pred_fallthru
      _
    // Predicated region
    $region66: #{bert_lstm_forward.1} parent=1 // pred_check
      _
    $region67: #{bert_lstm_forward.1} parent=1 // pred_check_branch
      %64 = sbr.rel (0) target = $region69
    $region68: #{bert_lstm_forward.1} parent=1 // pred_region
      _
    $region69: #{bert_lstm_forward.1} parent=1 // pred_fallthru
      _
    // Predicated region
    $region70: #{bert_lstm_forward.1} parent=1 // pred_check
      _
    $region71: #{bert_lstm_forward.1} parent=1 // pred_check_branch
      %66 = sbr.rel (0) target = $region73
    $region72: #{bert_lstm_forward.1} parent=1 // pred_region
      _
    $region73: #{bert_lstm_forward.1} parent=1 // pred_fallthru
      _
    // Predicated region
    $region74: #{bert_lstm_forward.1} parent=1 // pred_check
      _
    $region75: #{bert_lstm_forward.1} parent=1 // pred_check_branch
      %68 = sbr.rel (0) target = $region77
    $region76: #{bert_lstm_forward.1} parent=1 // pred_region
      _
    $region77: #{bert_lstm_forward.1} parent=1 // pred_fallthru
      _
    // Predicated region
    $region78: #{bert_lstm_forward.1} parent=1 // pred_check
      _
    $region79: #{bert_lstm_forward.1} parent=1 // pred_check_branch
      %70 = sbr.rel (0) target = $region81
    $region80: #{bert_lstm_forward.1} parent=1 // pred_region
      _
    $region81: #{bert_lstm_forward.1} parent=1 // pred_fallthru
      _
    // Predicated region
    $region82: #{bert_lstm_forward.1} parent=1 // pred_check
      _
    $region83: #{bert_lstm_forward.1} parent=1 // pred_check_branch
      %72 = sbr.rel (0) target = $region85
    $region84: #{bert_lstm_forward.1} parent=1 // pred_region
      _
    $region85: #{bert_lstm_forward.1} parent=1 // pred_fallthru
      _
    // Predicated region
    $region86: #{bert_lstm_forward.1} parent=1 // pred_check
      _
    $region87: #{bert_lstm_forward.1} parent=1 // pred_check_branch
      %74 = sbr.rel (0) target = $region89
    $region88: #{bert_lstm_forward.1} parent=1 // pred_region
      _
    $region89: #{bert_lstm_forward.1} parent=1 // pred_fallthru
      _
    // Predicated region
    $region90: #{bert_lstm_forward.1} parent=1 // pred_check
      _
    $region91: #{bert_lstm_forward.1} parent=1 // pred_check_branch
      %76 = sbr.rel (0) target = $region93
    $region92: #{bert_lstm_forward.1} parent=1 // pred_region
      _
    $region93: #{bert_lstm_forward.1} parent=1 // pred_fallthru
      _
    // Predicated region
    $region94: #{bert_lstm_forward.1} parent=1 // pred_check
      _
    $region95: #{bert_lstm_forward.1} parent=1 // pred_check_branch
      %78 = sbr.rel (0) target = $region97
    $region96: #{bert_lstm_forward.1} parent=1 // pred_region
      _
    $region97: #{bert_lstm_forward.1} parent=1 // pred_fallthru
      _
    // Predicated region
    $region98: #{bert_lstm_forward.1} parent=1 // pred_check
      _
    $region99: #{bert_lstm_forward.1} parent=1 // pred_check_branch
      %80 = sbr.rel (0) target = $region101
    $region100: #{bert_lstm_forward.1} parent=1 // pred_region
      _
    $region101: #{bert_lstm_forward.1} parent=1 // pred_fallthru
      _
    %v81 = vld [vmem:[%s0] sm:$0xff]
    %v82 = vld [vmem:[%s0 + $0x8] sm:$0xff]
    %v83 = vld [vmem:[%s2] sm:$0x1]
    %v84 = vld [vmem:[%s3] sm:$0x1]
    %vm85 = vcmask 261120
    %v86 = vsel %vm85, %v81, 0.0
    %87 = vadd.xlane.f32.xlu0 %v86
    %v88 = vpop.xlane.xlu0 %87
    %v89 = vsel %vm85, %v82, 0.0
    %90 = vadd.xlane.f32.xlu0 %v89
    %v91 = vpop.xlane.xlu0 %90
    %v92 = vrcp.pop 32.0
    %v93 = vmul.f32 32.0, %v92
    %v94 = vsub.f32 1.0, %v93
    %v95 = vmul.f32 %v92, %v94
    %v96 = vadd.f32 %v92, %v95
    %vm97 = vweird.f32 %v92
    %v98 = vsel %vm97, %v92, %v96
    %v99 = vmul.f32 %v88, %v98
    %v100 = vmul.f32 %v91, %v98
    %v101 = vsub.f32 %v81, %v99
    %v102 = vsub.f32 %v82, %v100
    %v103 = vmul.f32 %v101, %v101
    %v104 = vmul.f32 %v102, %v102
    %v105 = vsel %vm85, %v103, 0.0
    %106 = vadd.xlane.f32.xlu0 %v105
    %v107 = vpop.xlane.xlu0 %106
    %v108 = vsel %vm85, %v104, 0.0
    %109 = vadd.xlane.f32.xlu0 %v108
    %v110 = vpop.xlane.xlu0 %109
    %v111 = vmul.f32 %v107, %v98
    %v112 = vmul.f32 %v110, %v98
    %v113 = vadd.f32 %v111, 1e-12
    %v114 = vadd.f32 %v112, 1e-12
    %v115 = vrsqrt.pop %v113
    %v116 = vmul.f32 %v115, %v113
    %v117 = vmul.f32 %v116, %v115
    %v118 = vmul.f32 0.5, %v117
    %v119 = vsub.f32 1.5, %v118
    %v120 = vmul.f32 %v115, %v119
    %vm121 = vweird.f32 %v113
    %vm122 = vweird.f32 %v115
    %vm123 = vmor %vm121, %vm122
    %v124 = vsel %vm123, %v115, %v120
    %v125 = vrsqrt.pop %v114
    %v126 = vmul.f32 %v125, %v114
    %v127 = vmul.f32 %v126, %v125
    %v128 = vmul.f32 0.5, %v127
    %v129 = vsub.f32 1.5, %v128
    %v130 = vmul.f32 %v125, %v129
    %vm131 = vweird.f32 %v114
    %vm132 = vweird.f32 %v125
    %vm133 = vmor %vm131, %vm132
    %v134 = vsel %vm133, %v125, %v130
    %v135 = vmul.f32 %v101, %v124
    %v136 = vmul.f32 %v102, %v134
    %v138 = vperm.slane %v83, 0
    %v140 = vmul.f32 %v135, %v138
    %v141 = vmul.f32 %v136, %v138
    %v143 = vperm.slane %v84, 0
    %v145 = vadd.f32 %v140, %v143
    %v146 = vadd.f32 %v141, %v143
    %v147 = vld [vmem:[%s1] sm:$0x3]
    %v149 = vrot.slane %v147, 1
    %v150 = vld [vmem:[%s4] sm:$0xff]
    %v151 = vld [vmem:[%s4 + $0x8] sm:$0xff]
    %v152 = vld [vmem:[%s4 + $0x10] sm:$0xff]
    %v153 = vld [vmem:[%s4 + $0x18] sm:$0xff]
    %v154 = vld [vmem:[%s5] sm:$0x1]
    %v156 = vperm.slane %v154, 0
    %v159 = vsel %vm85, %v145, 0
    %v162 = vsel %vm85, %v146, 0
    %164 = vmatpush.msra.mxu0 0.0
    %165 = vmatpush.msra.mxu0 0.0
    %166 = vmatpush.msra.mxu0 0.0
    %167 = vmatpush.msra.mxu0 0.0
    %168 = vmatpush.msra.mxu0 0.0
    %169 = vmatpush.msra.mxu0 0.0
    %170 = vmatpush.msra.mxu0 0.0
    %171 = vmatpush.msra.mxu0 0.0
    %172 = vmatpush.msra.mxu0 0.0
    %173 = vmatpush.msra.mxu0 0.0
    %174 = vmatpush.msra.mxu0 0.0
    %175 = vmatpush.msra.mxu0 0.0
    %176 = vmatpush.msra.mxu0 %v153
    %177 = vmatpush.msra.mxu0 %v152
    %178 = vmatpush.msra.mxu0 %v151
    %179 = vmatpush.msra.mxu0 %v150
    %180 = vmatmul.f32.gmra.mxu0 %v159
    %v181 = vpop.f32.mrf.mxu0
    %v182 = vadd.f32 %v156, %v181
    %183 = vmatmul.f32.gmra.mxu0 %v162
    %v184 = vpop.f32.mrf.mxu0
    %v185 = vadd.f32 %v156, %v184
    %186 = vdwg.mxu0
    %189 = vrot.lane.b32.xlu0 %v182, 112
    %v190 = vpop.permute.xlu0 %189
    %191 = vrot.lane.b32.xlu0 %v185, 112
    %v192 = vpop.permute.xlu0 %191
    %193 = vrot.lane.b32.xlu0 %v182, 96
    %v194 = vpop.permute.xlu0 %193
    %vm195 = vcmask 130048
    %v196 = vsel %vm195, %v182, 0
    %v198 = vsel %vm195, %v194, 0
    %200 = vmatpush.xpose.msra.mxu0 0.0
    %201 = vmatpush.xpose.msra.mxu0 0.0
    %202 = vmatpush.xpose.msra.mxu0 0.0
    %203 = vmatpush.xpose.msra.mxu0 0.0
    %204 = vmatpush.xpose.msra.mxu0 0.0
    %205 = vmatpush.xpose.msra.mxu0 0.0
    %206 = vmatpush.xpose.msra.mxu0 0.0
    %207 = vmatpush.xpose.msra.mxu0 0.0
    %208 = vmatpush.xpose.msra.mxu0 0.0
    %209 = vmatpush.xpose.msra.mxu0 0.0
    %210 = vmatpush.xpose.msra.mxu0 0.0
    %211 = vmatpush.xpose.msra.mxu0 0.0
    %212 = vmatpush.xpose.msra.mxu0 0.0
    %213 = vmatpush.xpose.msra.mxu0 0.0
    %214 = vmatpush.xpose.msra.mxu0 0.0
    %215 = vmatpush.xpose.msra.mxu0 %v198
    %216 = vmatmul.f32.gmra.mxu0 %v196
    %v217 = vpop.f32.mrf.mxu0
    %v218 = vadd.f32 0.0, %v217
    %219 = vdwg.mxu0
    %220 = vrot.lane.b32.xlu0 %v185, 96
    %v221 = vpop.permute.xlu0 %220
    %v222 = vsel %vm195, %v185, 0
    %v224 = vsel %vm195, %v221, 0
    %226 = vmatpush.xpose.msra.mxu0 0.0
    %227 = vmatpush.xpose.msra.mxu0 0.0
    %228 = vmatpush.xpose.msra.mxu0 0.0
    %229 = vmatpush.xpose.msra.mxu0 0.0
    %230 = vmatpush.xpose.msra.mxu0 0.0
    %231 = vmatpush.xpose.msra.mxu0 0.0
    %232 = vmatpush.xpose.msra.mxu0 0.0
    %233 = vmatpush.xpose.msra.mxu0 0.0
    %234 = vmatpush.xpose.msra.mxu0 0.0
    %235 = vmatpush.xpose.msra.mxu0 0.0
    %236 = vmatpush.xpose.msra.mxu0 0.0
    %237 = vmatpush.xpose.msra.mxu0 0.0
    %238 = vmatpush.xpose.msra.mxu0 0.0
    %239 = vmatpush.xpose.msra.mxu0 0.0
    %240 = vmatpush.xpose.msra.mxu0 0.0
    %241 = vmatpush.xpose.msra.mxu0 %v224
    %242 = vmatmul.f32.gmra.mxu0 %v222
    %v243 = vpop.f32.mrf.mxu0
    %v244 = vadd.f32 0.0, %v243
    %245 = vdwg.mxu0
    %246 = vrot.lane.b32.xlu0 %v190, 96
    %v247 = vpop.permute.xlu0 %246
    %v248 = vsel %vm195, %v190, 0
    %v250 = vsel %vm195, %v247, 0
    %252 = vmatpush.xpose.msra.mxu0 0.0
    %253 = vmatpush.xpose.msra.mxu0 0.0
    %254 = vmatpush.xpose.msra.mxu0 0.0
    %255 = vmatpush.xpose.msra.mxu0 0.0
    %256 = vmatpush.xpose.msra.mxu0 0.0
    %257 = vmatpush.xpose.msra.mxu0 0.0
    %258 = vmatpush.xpose.msra.mxu0 0.0
    %259 = vmatpush.xpose.msra.mxu0 0.0
    %260 = vmatpush.xpose.msra.mxu0 0.0
    %261 = vmatpush.xpose.msra.mxu0 0.0
    %262 = vmatpush.xpose.msra.mxu0 0.0
    %263 = vmatpush.xpose.msra.mxu0 0.0
    %264 = vmatpush.xpose.msra.mxu0 0.0
    %265 = vmatpush.xpose.msra.mxu0 0.0
    %266 = vmatpush.xpose.msra.mxu0 0.0
    %267 = vmatpush.xpose.msra.mxu0 %v250
    %268 = vmatmul.f32.gmra.mxu0 %v248
    %v269 = vpop.f32.mrf.mxu0
    %v270 = vadd.f32 0.0, %v269
    %271 = vdwg.mxu0
    %272 = vrot.lane.b32.xlu0 %v192, 96
    %v273 = vpop.permute.xlu0 %272
    %v274 = vsel %vm195, %v192, 0
    %v276 = vsel %vm195, %v273, 0
    %278 = vmatpush.xpose.msra.mxu0 0.0
    %279 = vmatpush.xpose.msra.mxu0 0.0
    %280 = vmatpush.xpose.msra.mxu0 0.0
    %281 = vmatpush.xpose.msra.mxu0 0.0
    %282 = vmatpush.xpose.msra.mxu0 0.0
    %283 = vmatpush.xpose.msra.mxu0 0.0
    %284 = vmatpush.xpose.msra.mxu0 0.0
    %285 = vmatpush.xpose.msra.mxu0 0.0
    %286 = vmatpush.xpose.msra.mxu0 0.0
    %287 = vmatpush.xpose.msra.mxu0 0.0
    %288 = vmatpush.xpose.msra.mxu0 0.0
    %289 = vmatpush.xpose.msra.mxu0 0.0
    %290 = vmatpush.xpose.msra.mxu0 0.0
    %291 = vmatpush.xpose.msra.mxu0 0.0
    %292 = vmatpush.xpose.msra.mxu0 0.0
    %293 = vmatpush.xpose.msra.mxu0 %v276
    %294 = vmatmul.f32.gmra.mxu0 %v274
    %v295 = vpop.f32.mrf.mxu0
    %v296 = vadd.f32 0.0, %v295
    %297 = vdwg.mxu0
    %v298 = vmul.f32 %v218, 0.25
    %v299 = vmul.f32 %v244, 0.25
    %v300 = vmul.f32 %v270, 0.25
    %v301 = vmul.f32 %v296, 0.25
    %v302 = vperm.slane %v147, 0
    %v303 = vperm.slane %v149, 0
    %v306 = vadd.f32 %v298, %v302
    %v307 = vadd.f32 %v299, %v303
    %v308 = vadd.f32 %v300, %v302
    %v309 = vadd.f32 %v301, %v303
    %vm310 = vcmask 64512
    %v311 = vsel %vm310, %v306, -inf
    %312 = vmax.xlane.f32.xlu0 %v311
    %v313 = vpop.xlane.xlu0 %312
    %v314 = vsel %vm310, %v307, -inf
    %315 = vmax.xlane.f32.xlu0 %v314
    %v316 = vpop.xlane.xlu0 %315
    %v317 = vsel %vm310, %v308, -inf
    %318 = vmax.xlane.f32.xlu0 %v317
    %v319 = vpop.xlane.xlu0 %318
    %v320 = vsel %vm310, %v309, -inf
    %321 = vmax.xlane.f32.xlu0 %v320
    %v322 = vpop.xlane.xlu0 %321
    %v323 = vsub.f32 %v306, %v313
    %v324 = vsub.f32 %v307, %v316
    %v325 = vsub.f32 %v308, %v319
    %v326 = vsub.f32 %v309, %v322
    %v327 = vmul.f32 %v323, 1.442695
    %v328 = vpow.pop %v327
    %v329 = vmul.f32 %v324, 1.442695
    %v330 = vpow.pop %v329
    %v331 = vmul.f32 %v325, 1.442695
    %v332 = vpow.pop %v331
    %v333 = vmul.f32 %v326, 1.442695
    %v334 = vpow.pop %v333
    %v335 = vsel %vm310, %v328, 0.0
    %336 = vadd.xlane.f32.xlu0 %v335
    %v337 = vpop.xlane.xlu0 %336
    %v338 = vsel %vm310, %v330, 0.0
    %339 = vadd.xlane.f32.xlu0 %v338
    %v340 = vpop.xlane.xlu0 %339
    %v341 = vsel %vm310, %v332, 0.0
    %342 = vadd.xlane.f32.xlu0 %v341
    %v343 = vpop.xlane.xlu0 %342
    %v344 = vsel %vm310, %v334, 0.0
    %345 = vadd.xlane.f32.xlu0 %v344
    %v346 = vpop.xlane.xlu0 %345
    %v347 = vrcp.pop %v337
    %v348 = vmul.f32 %v337, %v347
    %v349 = vsub.f32 1.0, %v348
    %v350 = vmul.f32 %v347, %v349
    %v351 = vadd.f32 %v347, %v350
    %vm352 = vweird.f32 %v337
    %vm353 = vweird.f32 %v347
    %vm354 = vmor %vm352, %vm353
    %v355 = vsel %vm354, %v347, %v351
    %v356 = vand.u32 2147483647, %v337
    %vm357 = vcmp.eq.f32.partialorder %v356, 8.507059e+37
    %v358 = vand.u32 %v337, 2147483648
    %v359 = vor.u32 1.1754944e-38, %v358
    %v360 = vsel %vm357, %v359, %v355
    %v361 = vmul.f32 %v328, %v360
    %v362 = vrcp.pop %v340
    %v363 = vmul.f32 %v340, %v362
    %v364 = vsub.f32 1.0, %v363
    %v365 = vmul.f32 %v362, %v364
    %v366 = vadd.f32 %v362, %v365
    %vm367 = vweird.f32 %v340
    %vm368 = vweird.f32 %v362
    %vm369 = vmor %vm367, %vm368
    %v370 = vsel %vm369, %v362, %v366
    %v371 = vand.u32 2147483647, %v340
    %vm372 = vcmp.eq.f32.partialorder %v371, 8.507059e+37
    %v373 = vand.u32 %v340, 2147483648
    %v374 = vor.u32 1.1754944e-38, %v373
    %v375 = vsel %vm372, %v374, %v370
    %v376 = vmul.f32 %v330, %v375
    %v377 = vrcp.pop %v343
    %v378 = vmul.f32 %v343, %v377
    %v379 = vsub.f32 1.0, %v378
    %v380 = vmul.f32 %v377, %v379
    %v381 = vadd.f32 %v377, %v380
    %vm382 = vweird.f32 %v343
    %vm383 = vweird.f32 %v377
    %vm384 = vmor %vm382, %vm383
    %v385 = vsel %vm384, %v377, %v381
    %v386 = vand.u32 2147483647, %v343
    %vm387 = vcmp.eq.f32.partialorder %v386, 8.507059e+37
    %v388 = vand.u32 %v343, 2147483648
    %v389 = vor.u32 1.1754944e-38, %v388
    %v390 = vsel %vm387, %v389, %v385
    %v391 = vmul.f32 %v332, %v390
    %v392 = vrcp.pop %v346
    %v393 = vmul.f32 %v346, %v392
    %v394 = vsub.f32 1.0, %v393
    %v395 = vmul.f32 %v392, %v394
    %v396 = vadd.f32 %v392, %v395
    %vm397 = vweird.f32 %v346
    %vm398 = vweird.f32 %v392
    %vm399 = vmor %vm397, %vm398
    %v400 = vsel %vm399, %v392, %v396
    %v401 = vand.u32 2147483647, %v346
    %vm402 = vcmp.eq.f32.partialorder %v401, 8.507059e+37
    %v403 = vand.u32 %v346, 2147483648
    %v404 = vor.u32 1.1754944e-38, %v403
    %v405 = vsel %vm402, %v404, %v400
    %v406 = vmul.f32 %v334, %v405
    %407 = vrot.lane.b32.xlu0 %v182, 64
    %v408 = vpop.permute.xlu0 %407
    %v411 = vsel %vm310, %v361, 0
    %413 = vmatpush.msra.mxu0 0.0
    %414 = vmatpush.msra.mxu0 0.0
    %415 = vmatpush.msra.mxu0 0.0
    %416 = vmatpush.msra.mxu0 0.0
    %417 = vmatpush.msra.mxu0 0.0
    %418 = vmatpush.msra.mxu0 0.0
    %419 = vmatpush.msra.mxu0 0.0
    %420 = vmatpush.msra.mxu0 0.0
    %421 = vmatpush.msra.mxu0 0.0
    %422 = vmatpush.msra.mxu0 0.0
    %423 = vmatpush.msra.mxu0 0.0
    %424 = vmatpush.msra.mxu0 0.0
    %425 = vmatpush.msra.mxu0 0.0
    %426 = vmatpush.msra.mxu0 0.0
    %427 = vmatpush.msra.mxu0 0.0
    %428 = vmatpush.msra.mxu0 %v408
    %429 = vmatmul.f32.gmra.mxu0 %v411
    %v430 = vpop.f32.mrf.mxu0
    %v431 = vadd.f32 0.0, %v430
    %432 = vdwg.mxu0
    %433 = vrot.lane.b32.xlu0 %v185, 64
    %v434 = vpop.permute.xlu0 %433
    %v437 = vsel %vm310, %v376, 0
    %439 = vmatpush.msra.mxu0 0.0
    %440 = vmatpush.msra.mxu0 0.0
    %441 = vmatpush.msra.mxu0 0.0
    %442 = vmatpush.msra.mxu0 0.0
    %443 = vmatpush.msra.mxu0 0.0
    %444 = vmatpush.msra.mxu0 0.0
    %445 = vmatpush.msra.mxu0 0.0
    %446 = vmatpush.msra.mxu0 0.0
    %447 = vmatpush.msra.mxu0 0.0
    %448 = vmatpush.msra.mxu0 0.0
    %449 = vmatpush.msra.mxu0 0.0
    %450 = vmatpush.msra.mxu0 0.0
    %451 = vmatpush.msra.mxu0 0.0
    %452 = vmatpush.msra.mxu0 0.0
    %453 = vmatpush.msra.mxu0 0.0
    %454 = vmatpush.msra.mxu0 %v434
    %455 = vmatmul.f32.gmra.mxu0 %v437
    %v456 = vpop.f32.mrf.mxu0
    %v457 = vadd.f32 0.0, %v456
    %458 = vdwg.mxu0
    %459 = vrot.lane.b32.xlu0 %v190, 64
    %v460 = vpop.permute.xlu0 %459
    %v463 = vsel %vm310, %v391, 0
    %465 = vmatpush.msra.mxu0 0.0
    %466 = vmatpush.msra.mxu0 0.0
    %467 = vmatpush.msra.mxu0 0.0
    %468 = vmatpush.msra.mxu0 0.0
    %469 = vmatpush.msra.mxu0 0.0
    %470 = vmatpush.msra.mxu0 0.0
    %471 = vmatpush.msra.mxu0 0.0
    %472 = vmatpush.msra.mxu0 0.0
    %473 = vmatpush.msra.mxu0 0.0
    %474 = vmatpush.msra.mxu0 0.0
    %475 = vmatpush.msra.mxu0 0.0
    %476 = vmatpush.msra.mxu0 0.0
    %477 = vmatpush.msra.mxu0 0.0
    %478 = vmatpush.msra.mxu0 0.0
    %479 = vmatpush.msra.mxu0 0.0
    %480 = vmatpush.msra.mxu0 %v460
    %481 = vmatmul.f32.gmra.mxu0 %v463
    %v482 = vpop.f32.mrf.mxu0
    %v483 = vadd.f32 0.0, %v482
    %484 = vdwg.mxu0
    %485 = vrot.lane.b32.xlu0 %v192, 64
    %v486 = vpop.permute.xlu0 %485
    %v489 = vsel %vm310, %v406, 0
    %491 = vmatpush.msra.mxu0 0.0
    %492 = vmatpush.msra.mxu0 0.0
    %493 = vmatpush.msra.mxu0 0.0
    %494 = vmatpush.msra.mxu0 0.0
    %495 = vmatpush.msra.mxu0 0.0
    %496 = vmatpush.msra.mxu0 0.0
    %497 = vmatpush.msra.mxu0 0.0
    %498 = vmatpush.msra.mxu0 0.0
    %499 = vmatpush.msra.mxu0 0.0
    %500 = vmatpush.msra.mxu0 0.0
    %501 = vmatpush.msra.mxu0 0.0
    %502 = vmatpush.msra.mxu0 0.0
    %503 = vmatpush.msra.mxu0 0.0
    %504 = vmatpush.msra.mxu0 0.0
    %505 = vmatpush.msra.mxu0 0.0
    %506 = vmatpush.msra.mxu0 %v486
    %507 = vmatmul.f32.gmra.mxu0 %v489
    %v508 = vpop.f32.mrf.mxu0
    %v509 = vadd.f32 0.0, %v508
    %510 = vdwg.mxu0
    %513 = vrot.lane.b32.xlu0 %v483, 16
    %v514 = vpop.permute.xlu0 %513
    %515 = vrot.lane.b32.xlu0 %v509, 16
    %v516 = vpop.permute.xlu0 %515
    %v519 = vsel %vm195, %v431, %v514
    %v520 = vsel %vm195, %v457, %v516
    %v521 = vld [vmem:[%s6] sm:$0xff]
    %v522 = vld [vmem:[%s6 + $0x8] sm:$0xff]
    %v523 = vld [vmem:[%s6 + $0x10] sm:$0xff]
    %v524 = vld [vmem:[%s6 + $0x18] sm:$0xff]
    %v525 = vld [vmem:[%s7] sm:$0x1]
    %v527 = vperm.slane %v525, 0
    %v530 = vsel %vm85, %v519, 0
    %v533 = vsel %vm85, %v520, 0
    %535 = vmatpush.msra.mxu0 0.0
    %536 = vmatpush.msra.mxu0 0.0
    %537 = vmatpush.msra.mxu0 0.0
    %538 = vmatpush.msra.mxu0 0.0
    %539 = vmatpush.msra.mxu0 0.0
    %540 = vmatpush.msra.mxu0 0.0
    %541 = vmatpush.msra.mxu0 0.0
    %542 = vmatpush.msra.mxu0 0.0
    %543 = vmatpush.msra.mxu0 0.0
    %544 = vmatpush.msra.mxu0 0.0
    %545 = vmatpush.msra.mxu0 0.0
    %546 = vmatpush.msra.mxu0 0.0
    %547 = vmatpush.msra.mxu0 %v524
    %548 = vmatpush.msra.mxu0 %v523
    %549 = vmatpush.msra.mxu0 %v522
    %550 = vmatpush.msra.mxu0 %v521
    %551 = vmatmul.f32.gmra.mxu0 %v530
    %v552 = vpop.f32.mrf.mxu0
    %v553 = vadd.f32 %v527, %v552
    %554 = vmatmul.f32.gmra.mxu0 %v533
    %v555 = vpop.f32.mrf.mxu0
    %v556 = vadd.f32 %v527, %v555
    %557 = vdwg.mxu0
    %v558 = vadd.f32 %v553, %v145
    %v559 = vadd.f32 %v556, %v146
    %v560 = vld [vmem:[%s8] sm:$0x1]
    %v561 = vld [vmem:[%s9] sm:$0x1]
    %v562 = vsel %vm85, %v558, 0.0
    %563 = vadd.xlane.f32.xlu0 %v562
    %v564 = vpop.xlane.xlu0 %563
    %v565 = vsel %vm85, %v559, 0.0
    %566 = vadd.xlane.f32.xlu0 %v565
    %v567 = vpop.xlane.xlu0 %566
    %v568 = vmul.f32 %v564, %v98
    %v569 = vmul.f32 %v567, %v98
    %v570 = vsub.f32 %v558, %v568
    %v571 = vsub.f32 %v559, %v569
    %v572 = vmul.f32 %v570, %v570
    %v573 = vmul.f32 %v571, %v571
    %v574 = vsel %vm85, %v572, 0.0
    %575 = vadd.xlane.f32.xlu0 %v574
    %v576 = vpop.xlane.xlu0 %575
    %v577 = vsel %vm85, %v573, 0.0
    %578 = vadd.xlane.f32.xlu0 %v577
    %v579 = vpop.xlane.xlu0 %578
    %v580 = vmul.f32 %v576, %v98
    %v581 = vmul.f32 %v579, %v98
    %v582 = vadd.f32 %v580, 1e-12
    %v583 = vadd.f32 %v581, 1e-12
    %v584 = vrsqrt.pop %v582
    %v585 = vmul.f32 %v584, %v582
    %v586 = vmul.f32 %v585, %v584
    %v587 = vmul.f32 0.5, %v586
    %v588 = vsub.f32 1.5, %v587
    %v589 = vmul.f32 %v584, %v588
    %vm590 = vweird.f32 %v582
    %vm591 = vweird.f32 %v584
    %vm592 = vmor %vm590, %vm591
    %v593 = vsel %vm592, %v584, %v589
    %v594 = vrsqrt.pop %v583
    %v595 = vmul.f32 %v594, %v583
    %v596 = vmul.f32 %v595, %v594
    %v597 = vmul.f32 0.5, %v596
    %v598 = vsub.f32 1.5, %v597
    %v599 = vmul.f32 %v594, %v598
    %vm600 = vweird.f32 %v583
    %vm601 = vweird.f32 %v594
    %vm602 = vmor %vm600, %vm601
    %v603 = vsel %vm602, %v594, %v599
    %v604 = vmul.f32 %v570, %v593
    %v605 = vmul.f32 %v571, %v603
    %v607 = vperm.slane %v560, 0
    %v609 = vmul.f32 %v604, %v607
    %v610 = vmul.f32 %v605, %v607
    %v612 = vperm.slane %v561, 0
    %v614 = vadd.f32 %v609, %v612
    %v615 = vadd.f32 %v610, %v612
    %v616 = vld [vmem:[%s10] sm:$0xff]
    %v617 = vld [vmem:[%s10 + $0x8] sm:$0xff]
    %v618 = vld [vmem:[%s10 + $0x10] sm:$0xff]
    %v619 = vld [vmem:[%s10 + $0x18] sm:$0xff]
    %v620 = vld [vmem:[%s11] sm:$0x1]
    %v622 = vperm.slane %v620, 0
    %v625 = vsel %vm85, %v614, 0
    %v628 = vsel %vm85, %v615, 0
    %630 = vmatpush.msra.mxu0 0.0
    %631 = vmatpush.msra.mxu0 0.0
    %632 = vmatpush.msra.mxu0 0.0
    %633 = vmatpush.msra.mxu0 0.0
    %634 = vmatpush.msra.mxu0 0.0
    %635 = vmatpush.msra.mxu0 0.0
    %636 = vmatpush.msra.mxu0 0.0
    %637 = vmatpush.msra.mxu0 0.0
    %638 = vmatpush.msra.mxu0 0.0
    %639 = vmatpush.msra.mxu0 0.0
    %640 = vmatpush.msra.mxu0 0.0
    %641 = vmatpush.msra.mxu0 0.0
    %642 = vmatpush.msra.mxu0 %v619
    %643 = vmatpush.msra.mxu0 %v618
    %644 = vmatpush.msra.mxu0 %v617
    %645 = vmatpush.msra.mxu0 %v616
    %646 = vmatmul.f32.gmra.mxu0 %v625
    %v647 = vpop.f32.mrf.mxu0
    %v648 = vadd.f32 %v622, %v647
    %649 = vmatmul.f32.gmra.mxu0 %v628
    %v650 = vpop.f32.mrf.mxu0
    %v651 = vadd.f32 %v622, %v650
    %652 = vdwg.mxu0
    %v653 = vmul.f32 %v648, 0.5
    %v654 = vmul.f32 %v651, 0.5
    %v655 = vmul.f32 %v648, 0.044715
    %v656 = vmul.f32 %v651, 0.044715
    %v657 = vmul.f32 %v655, %v648
    %v658 = vmul.f32 %v656, %v651
    %v659 = vmul.f32 %v657, %v648
    %v660 = vmul.f32 %v658, %v651
    %v661 = vadd.f32 %v648, %v659
    %v662 = vadd.f32 %v651, %v660
    %v663 = vmul.f32 %v661, 0.7978846
    %v664 = vmul.f32 %v662, 0.7978846
    %v665 = vtanh.pop %v663
    %v666 = vtanh.pop %v664
    %v667 = vadd.f32 %v665, 1.0
    %v668 = vadd.f32 %v666, 1.0
    %v669 = vmul.f32 %v653, %v667
    %v670 = vmul.f32 %v654, %v668
    %v671 = vld [vmem:[%s12] sm:$0xff]
    %v672 = vld [vmem:[%s12 + $0x8] sm:$0xff]
    %v673 = vld [vmem:[%s12 + $0x10] sm:$0xff]
    %v674 = vld [vmem:[%s12 + $0x18] sm:$0xff]
    %v675 = vld [vmem:[%s12 + $0x20] sm:$0xff]
    %v676 = vld [vmem:[%s12 + $0x28] sm:$0xff]
    %v677 = vld [vmem:[%s12 + $0x30] sm:$0xff]
    %v678 = vld [vmem:[%s12 + $0x38] sm:$0xff]
    %v679 = vld [vmem:[%s13] sm:$0x1]
    %v681 = vperm.slane %v679, 0
    %vm683 = vcmask 523264
    %v685 = vsel %vm683, %v669, 0
    %v688 = vsel %vm683, %v670, 0
    %690 = vmatpush.msra.mxu0 0.0
    %691 = vmatpush.msra.mxu0 0.0
    %692 = vmatpush.msra.mxu0 0.0
    %693 = vmatpush.msra.mxu0 0.0
    %694 = vmatpush.msra.mxu0 0.0
    %695 = vmatpush.msra.mxu0 0.0
    %696 = vmatpush.msra.mxu0 0.0
    %697 = vmatpush.msra.mxu0 0.0
    %698 = vmatpush.msra.mxu0 %v678
    %699 = vmatpush.msra.mxu0 %v677
    %700 = vmatpush.msra.mxu0 %v676
    %701 = vmatpush.msra.mxu0 %v675
    %702 = vmatpush.msra.mxu0 %v674
    %703 = vmatpush.msra.mxu0 %v673
    %704 = vmatpush.msra.mxu0 %v672
    %705 = vmatpush.msra.mxu0 %v671
    %706 = vmatmul.f32.gmra.mxu0 %v685
    %v707 = vpop.f32.mrf.mxu0
    %v708 = vadd.f32 %v681, %v707
    %709 = vmatmul.f32.gmra.mxu0 %v688
    %v710 = vpop.f32.mrf.mxu0
    %v711 = vadd.f32 %v681, %v710
    %712 = vdwg.mxu0
    %v713 = vadd.f32 %v708, %v614
    %v714 = vadd.f32 %v711, %v615
    %v715 = vld [vmem:[%s14] sm:$0x1]
    %v716 = vld [vmem:[%s15] sm:$0x1]
    %v717 = vsel %vm85, %v713, 0.0
    %718 = vadd.xlane.f32.xlu0 %v717
    %v719 = vpop.xlane.xlu0 %718
    %v720 = vsel %vm85, %v714, 0.0
    %721 = vadd.xlane.f32.xlu0 %v720
    %v722 = vpop.xlane.xlu0 %721
    %v723 = vmul.f32 %v719, %v98
    %v724 = vmul.f32 %v722, %v98
    %v725 = vsub.f32 %v713, %v723
    %v726 = vsub.f32 %v714, %v724
    %v727 = vmul.f32 %v725, %v725
    %v728 = vmul.f32 %v726, %v726
    %v729 = vsel %vm85, %v727, 0.0
    %730 = vadd.xlane.f32.xlu0 %v729
    %v731 = vpop.xlane.xlu0 %730
    %v732 = vsel %vm85, %v728, 0.0
    %733 = vadd.xlane.f32.xlu0 %v732
    %v734 = vpop.xlane.xlu0 %733
    %v735 = vmul.f32 %v731, %v98
    %v736 = vmul.f32 %v734, %v98
    %v737 = vadd.f32 %v735, 1e-12
    %v738 = vadd.f32 %v736, 1e-12
    %v739 = vrsqrt.pop %v737
    %v740 = vmul.f32 %v739, %v737
    %v741 = vmul.f32 %v740, %v739
    %v742 = vmul.f32 0.5, %v741
    %v743 = vsub.f32 1.5, %v742
    %v744 = vmul.f32 %v739, %v743
    %vm745 = vweird.f32 %v737
    %vm746 = vweird.f32 %v739
    %vm747 = vmor %vm745, %vm746
    %v748 = vsel %vm747, %v739, %v744
    %v749 = vrsqrt.pop %v738
    %v750 = vmul.f32 %v749, %v738
    %v751 = vmul.f32 %v750, %v749
    %v752 = vmul.f32 0.5, %v751
    %v753 = vsub.f32 1.5, %v752
    %v754 = vmul.f32 %v749, %v753
    %vm755 = vweird.f32 %v738
    %vm756 = vweird.f32 %v749
    %vm757 = vmor %vm755, %vm756
    %v758 = vsel %vm757, %v749, %v754
    %v759 = vmul.f32 %v725, %v748
    %v760 = vmul.f32 %v726, %v758
    %v762 = vperm.slane %v715, 0
    %v764 = vmul.f32 %v759, %v762
    %v765 = vmul.f32 %v760, %v762
    %v767 = vperm.slane %v716, 0
    %v769 = vadd.f32 %v764, %v767
    %v770 = vadd.f32 %v765, %v767
    %s771 = scalar_lea.vmem %s4, 32
    %v772 = vld [vmem:[%s771] sm:$0xff]
    %v773 = vld [vmem:[%s771 + $0x8] sm:$0xff]
    %v774 = vld [vmem:[%s771 + $0x10] sm:$0xff]
    %v775 = vld [vmem:[%s771 + $0x18] sm:$0xff]
    %s776 = scalar_lea.vmem %s5, 1
    %v777 = vld [vmem:[%s776] sm:$0x1]
    %v779 = vperm.slane %v777, 0
    %v782 = vsel %vm85, %v769, 0
    %v785 = vsel %vm85, %v770, 0
    %787 = vmatpush.msra.mxu0 0.0
    %788 = vmatpush.msra.mxu0 0.0
    %789 = vmatpush.msra.mxu0 0.0
    %790 = vmatpush.msra.mxu0 0.0
    %791 = vmatpush.msra.mxu0 0.0
    %792 = vmatpush.msra.mxu0 0.0
    %793 = vmatpush.msra.mxu0 0.0
    %794 = vmatpush.msra.mxu0 0.0
    %795 = vmatpush.msra.mxu0 0.0
    %796 = vmatpush.msra.mxu0 0.0
    %797 = vmatpush.msra.mxu0 0.0
    %798 = vmatpush.msra.mxu0 0.0
    %799 = vmatpush.msra.mxu0 %v775
    %800 = vmatpush.msra.mxu0 %v774
    %801 = vmatpush.msra.mxu0 %v773
    %802 = vmatpush.msra.mxu0 %v772
    %803 = vmatmul.f32.gmra.mxu0 %v782
    %v804 = vpop.f32.mrf.mxu0
    %v805 = vadd.f32 %v779, %v804
    %806 = vmatmul.f32.gmra.mxu0 %v785
    %v807 = vpop.f32.mrf.mxu0
    %v808 = vadd.f32 %v779, %v807
    %809 = vdwg.mxu0
    %812 = vrot.lane.b32.xlu0 %v805, 112
    %v813 = vpop.permute.xlu0 %812
    %814 = vrot.lane.b32.xlu0 %v808, 112
    %v815 = vpop.permute.xlu0 %814
    %816 = vrot.lane.b32.xlu0 %v805, 96
    %v817 = vpop.permute.xlu0 %816
    %v818 = vsel %vm195, %v805, 0
    %v820 = vsel %vm195, %v817, 0
    %822 = vmatpush.xpose.msra.mxu0 0.0
    %823 = vmatpush.xpose.msra.mxu0 0.0
    %824 = vmatpush.xpose.msra.mxu0 0.0
    %825 = vmatpush.xpose.msra.mxu0 0.0
    %826 = vmatpush.xpose.msra.mxu0 0.0
    %827 = vmatpush.xpose.msra.mxu0 0.0
    %828 = vmatpush.xpose.msra.mxu0 0.0
    %829 = vmatpush.xpose.msra.mxu0 0.0
    %830 = vmatpush.xpose.msra.mxu0 0.0
    %831 = vmatpush.xpose.msra.mxu0 0.0
    %832 = vmatpush.xpose.msra.mxu0 0.0
    %833 = vmatpush.xpose.msra.mxu0 0.0
    %834 = vmatpush.xpose.msra.mxu0 0.0
    %835 = vmatpush.xpose.msra.mxu0 0.0
    %836 = vmatpush.xpose.msra.mxu0 0.0
    %837 = vmatpush.xpose.msra.mxu0 %v820
    %838 = vmatmul.f32.gmra.mxu0 %v818
    %v839 = vpop.f32.mrf.mxu0
    %v840 = vadd.f32 0.0, %v839
    %841 = vdwg.mxu0
    %842 = vrot.lane.b32.xlu0 %v808, 96
    %v843 = vpop.permute.xlu0 %842
    %v844 = vsel %vm195, %v808, 0
    %v846 = vsel %vm195, %v843, 0
    %848 = vmatpush.xpose.msra.mxu0 0.0
    %849 = vmatpush.xpose.msra.mxu0 0.0
    %850 = vmatpush.xpose.msra.mxu0 0.0
    %851 = vmatpush.xpose.msra.mxu0 0.0
    %852 = vmatpush.xpose.msra.mxu0 0.0
    %853 = vmatpush.xpose.msra.mxu0 0.0
    %854 = vmatpush.xpose.msra.mxu0 0.0
    %855 = vmatpush.xpose.msra.mxu0 0.0
    %856 = vmatpush.xpose.msra.mxu0 0.0
    %857 = vmatpush.xpose.msra.mxu0 0.0
    %858 = vmatpush.xpose.msra.mxu0 0.0
    %859 = vmatpush.xpose.msra.mxu0 0.0
    %860 = vmatpush.xpose.msra.mxu0 0.0
    %861 = vmatpush.xpose.msra.mxu0 0.0
    %862 = vmatpush.xpose.msra.mxu0 0.0
    %863 = vmatpush.xpose.msra.mxu0 %v846
    %864 = vmatmul.f32.gmra.mxu0 %v844
    %v865 = vpop.f32.mrf.mxu0
    %v866 = vadd.f32 0.0, %v865
    %867 = vdwg.mxu0
    %868 = vrot.lane.b32.xlu0 %v813, 96
    %v869 = vpop.permute.xlu0 %868
    %v870 = vsel %vm195, %v813, 0
    %v872 = vsel %vm195, %v869, 0
    %874 = vmatpush.xpose.msra.mxu0 0.0
    %875 = vmatpush.xpose.msra.mxu0 0.0
    %876 = vmatpush.xpose.msra.mxu0 0.0
    %877 = vmatpush.xpose.msra.mxu0 0.0
    %878 = vmatpush.xpose.msra.mxu0 0.0
    %879 = vmatpush.xpose.msra.mxu0 0.0
    %880 = vmatpush.xpose.msra.mxu0 0.0
    %881 = vmatpush.xpose.msra.mxu0 0.0
    %882 = vmatpush.xpose.msra.mxu0 0.0
    %883 = vmatpush.xpose.msra.mxu0 0.0
    %884 = vmatpush.xpose.msra.mxu0 0.0
    %885 = vmatpush.xpose.msra.mxu0 0.0
    %886 = vmatpush.xpose.msra.mxu0 0.0
    %887 = vmatpush.xpose.msra.mxu0 0.0
    %888 = vmatpush.xpose.msra.mxu0 0.0
    %889 = vmatpush.xpose.msra.mxu0 %v872
    %890 = vmatmul.f32.gmra.mxu0 %v870
    %v891 = vpop.f32.mrf.mxu0
    %v892 = vadd.f32 0.0, %v891
    %893 = vdwg.mxu0
    %894 = vrot.lane.b32.xlu0 %v815, 96
    %v895 = vpop.permute.xlu0 %894
    %v896 = vsel %vm195, %v815, 0
    %v898 = vsel %vm195, %v895, 0
    %900 = vmatpush.xpose.msra.mxu0 0.0
    %901 = vmatpush.xpose.msra.mxu0 0.0
    %902 = vmatpush.xpose.msra.mxu0 0.0
    %903 = vmatpush.xpose.msra.mxu0 0.0
    %904 = vmatpush.xpose.msra.mxu0 0.0
    %905 = vmatpush.xpose.msra.mxu0 0.0
    %906 = vmatpush.xpose.msra.mxu0 0.0
    %907 = vmatpush.xpose.msra.mxu0 0.0
    %908 = vmatpush.xpose.msra.mxu0 0.0
    %909 = vmatpush.xpose.msra.mxu0 0.0
    %910 = vmatpush.xpose.msra.mxu0 0.0
    %911 = vmatpush.xpose.msra.mxu0 0.0
    %912 = vmatpush.xpose.msra.mxu0 0.0
    %913 = vmatpush.xpose.msra.mxu0 0.0
    %914 = vmatpush.xpose.msra.mxu0 0.0
    %915 = vmatpush.xpose.msra.mxu0 %v898
    %916 = vmatmul.f32.gmra.mxu0 %v896
    %v917 = vpop.f32.mrf.mxu0
    %v918 = vadd.f32 0.0, %v917
    %919 = vdwg.mxu0
    %v920 = vmul.f32 %v840, 0.25
    %v921 = vmul.f32 %v866, 0.25
    %v922 = vmul.f32 %v892, 0.25
    %v923 = vmul.f32 %v918, 0.25
    %v924 = vadd.f32 %v920, %v302
    %v925 = vadd.f32 %v921, %v303
    %v926 = vadd.f32 %v922, %v302
    %v927 = vadd.f32 %v923, %v303
    %v928 = vsel %vm310, %v924, -inf
    %929 = vmax.xlane.f32.xlu0 %v928
    %v930 = vpop.xlane.xlu0 %929
    %v931 = vsel %vm310, %v925, -inf
    %932 = vmax.xlane.f32.xlu0 %v931
    %v933 = vpop.xlane.xlu0 %932
    %v934 = vsel %vm310, %v926, -inf
    %935 = vmax.xlane.f32.xlu0 %v934
    %v936 = vpop.xlane.xlu0 %935
    %v937 = vsel %vm310, %v927, -inf
    %938 = vmax.xlane.f32.xlu0 %v937
    %v939 = vpop.xlane.xlu0 %938
    %v940 = vsub.f32 %v924, %v930
    %v941 = vsub.f32 %v925, %v933
    %v942 = vsub.f32 %v926, %v936
    %v943 = vsub.f32 %v927, %v939
    %v944 = vmul.f32 %v940, 1.442695
    %v945 = vpow.pop %v944
    %v946 = vmul.f32 %v941, 1.442695
    %v947 = vpow.pop %v946
    %v948 = vmul.f32 %v942, 1.442695
    %v949 = vpow.pop %v948
    %v950 = vmul.f32 %v943, 1.442695
    %v951 = vpow.pop %v950
    %v952 = vsel %vm310, %v945, 0.0
    %953 = vadd.xlane.f32.xlu0 %v952
    %v954 = vpop.xlane.xlu0 %953
    %v955 = vsel %vm310, %v947, 0.0
    %956 = vadd.xlane.f32.xlu0 %v955
    %v957 = vpop.xlane.xlu0 %956
    %v958 = vsel %vm310, %v949, 0.0
    %959 = vadd.xlane.f32.xlu0 %v958
    %v960 = vpop.xlane.xlu0 %959
    %v961 = vsel %vm310, %v951, 0.0
    %962 = vadd.xlane.f32.xlu0 %v961
    %v963 = vpop.xlane.xlu0 %962
    %v964 = vrcp.pop %v954
    %v965 = vmul.f32 %v954, %v964
    %v966 = vsub.f32 1.0, %v965
    %v967 = vmul.f32 %v964, %v966
    %v968 = vadd.f32 %v964, %v967
    %vm969 = vweird.f32 %v954
    %vm970 = vweird.f32 %v964
    %vm971 = vmor %vm969, %vm970
    %v972 = vsel %vm971, %v964, %v968
    %v973 = vand.u32 2147483647, %v954
    %vm974 = vcmp.eq.f32.partialorder %v973, 8.507059e+37
    %v975 = vand.u32 %v954, 2147483648
    %v976 = vor.u32 1.1754944e-38, %v975
    %v977 = vsel %vm974, %v976, %v972
    %v978 = vmul.f32 %v945, %v977
    %v979 = vrcp.pop %v957
    %v980 = vmul.f32 %v957, %v979
    %v981 = vsub.f32 1.0, %v980
    %v982 = vmul.f32 %v979, %v981
    %v983 = vadd.f32 %v979, %v982
    %vm984 = vweird.f32 %v957
    %vm985 = vweird.f32 %v979
    %vm986 = vmor %vm984, %vm985
    %v987 = vsel %vm986, %v979, %v983
    %v988 = vand.u32 2147483647, %v957
    %vm989 = vcmp.eq.f32.partialorder %v988, 8.507059e+37
    %v990 = vand.u32 %v957, 2147483648
    %v991 = vor.u32 1.1754944e-38, %v990
    %v992 = vsel %vm989, %v991, %v987
    %v993 = vmul.f32 %v947, %v992
    %v994 = vrcp.pop %v960
    %v995 = vmul.f32 %v960, %v994
    %v996 = vsub.f32 1.0, %v995
    %v997 = vmul.f32 %v994, %v996
    %v998 = vadd.f32 %v994, %v997
    %vm999 = vweird.f32 %v960
    %vm1000 = vweird.f32 %v994
    %vm1001 = vmor %vm999, %vm1000
    %v1002 = vsel %vm1001, %v994, %v998
    %v1003 = vand.u32 2147483647, %v960
    %vm1004 = vcmp.eq.f32.partialorder %v1003, 8.507059e+37
    %v1005 = vand.u32 %v960, 2147483648
    %v1006 = vor.u32 1.1754944e-38, %v1005
    %v1007 = vsel %vm1004, %v1006, %v1002
    %v1008 = vmul.f32 %v949, %v1007
    %v1009 = vrcp.pop %v963
    %v1010 = vmul.f32 %v963, %v1009
    %v1011 = vsub.f32 1.0, %v1010
    %v1012 = vmul.f32 %v1009, %v1011
    %v1013 = vadd.f32 %v1009, %v1012
    %vm1014 = vweird.f32 %v963
    %vm1015 = vweird.f32 %v1009
    %vm1016 = vmor %vm1014, %vm1015
    %v1017 = vsel %vm1016, %v1009, %v1013
    %v1018 = vand.u32 2147483647, %v963
    %vm1019 = vcmp.eq.f32.partialorder %v1018, 8.507059e+37
    %v1020 = vand.u32 %v963, 2147483648
    %v1021 = vor.u32 1.1754944e-38, %v1020
    %v1022 = vsel %vm1019, %v1021, %v1017
    %v1023 = vmul.f32 %v951, %v1022
    %1024 = vrot.lane.b32.xlu0 %v805, 64
    %v1025 = vpop.permute.xlu0 %1024
    %v1028 = vsel %vm310, %v978, 0
    %1030 = vmatpush.msra.mxu0 0.0
    %1031 = vmatpush.msra.mxu0 0.0
    %1032 = vmatpush.msra.mxu0 0.0
    %1033 = vmatpush.msra.mxu0 0.0
    %1034 = vmatpush.msra.mxu0 0.0
    %1035 = vmatpush.msra.mxu0 0.0
    %1036 = vmatpush.msra.mxu0 0.0
    %1037 = vmatpush.msra.mxu0 0.0
    %1038 = vmatpush.msra.mxu0 0.0
    %1039 = vmatpush.msra.mxu0 0.0
    %1040 = vmatpush.msra.mxu0 0.0
    %1041 = vmatpush.msra.mxu0 0.0
    %1042 = vmatpush.msra.mxu0 0.0
    %1043 = vmatpush.msra.mxu0 0.0
    %1044 = vmatpush.msra.mxu0 0.0
    %1045 = vmatpush.msra.mxu0 %v1025
    %1046 = vmatmul.f32.gmra.mxu0 %v1028
    %v1047 = vpop.f32.mrf.mxu0
    %v1048 = vadd.f32 0.0, %v1047
    %1049 = vdwg.mxu0
    %1050 = vrot.lane.b32.xlu0 %v808, 64
    %v1051 = vpop.permute.xlu0 %1050
    %v1054 = vsel %vm310, %v993, 0
    %1056 = vmatpush.msra.mxu0 0.0
    %1057 = vmatpush.msra.mxu0 0.0
    %1058 = vmatpush.msra.mxu0 0.0
    %1059 = vmatpush.msra.mxu0 0.0
    %1060 = vmatpush.msra.mxu0 0.0
    %1061 = vmatpush.msra.mxu0 0.0
    %1062 = vmatpush.msra.mxu0 0.0
    %1063 = vmatpush.msra.mxu0 0.0
    %1064 = vmatpush.msra.mxu0 0.0
    %1065 = vmatpush.msra.mxu0 0.0
    %1066 = vmatpush.msra.mxu0 0.0
    %1067 = vmatpush.msra.mxu0 0.0
    %1068 = vmatpush.msra.mxu0 0.0
    %1069 = vmatpush.msra.mxu0 0.0
    %1070 = vmatpush.msra.mxu0 0.0
    %1071 = vmatpush.msra.mxu0 %v1051
    %1072 = vmatmul.f32.gmra.mxu0 %v1054
    %v1073 = vpop.f32.mrf.mxu0
    %v1074 = vadd.f32 0.0, %v1073
    %1075 = vdwg.mxu0
    %1076 = vrot.lane.b32.xlu0 %v813, 64
    %v1077 = vpop.permute.xlu0 %1076
    %v1080 = vsel %vm310, %v1008, 0
    %1082 = vmatpush.msra.mxu0 0.0
    %1083 = vmatpush.msra.mxu0 0.0
    %1084 = vmatpush.msra.mxu0 0.0
    %1085 = vmatpush.msra.mxu0 0.0
    %1086 = vmatpush.msra.mxu0 0.0
    %1087 = vmatpush.msra.mxu0 0.0
    %1088 = vmatpush.msra.mxu0 0.0
    %1089 = vmatpush.msra.mxu0 0.0
    %1090 = vmatpush.msra.mxu0 0.0
    %1091 = vmatpush.msra.mxu0 0.0
    %1092 = vmatpush.msra.mxu0 0.0
    %1093 = vmatpush.msra.mxu0 0.0
    %1094 = vmatpush.msra.mxu0 0.0
    %1095 = vmatpush.msra.mxu0 0.0
    %1096 = vmatpush.msra.mxu0 0.0
    %1097 = vmatpush.msra.mxu0 %v1077
    %1098 = vmatmul.f32.gmra.mxu0 %v1080
    %v1099 = vpop.f32.mrf.mxu0
    %v1100 = vadd.f32 0.0, %v1099
    %1101 = vdwg.mxu0
    %1102 = vrot.lane.b32.xlu0 %v815, 64
    %v1103 = vpop.permute.xlu0 %1102
    %v1106 = vsel %vm310, %v1023, 0
    %1108 = vmatpush.msra.mxu0 0.0
    %1109 = vmatpush.msra.mxu0 0.0
    %1110 = vmatpush.msra.mxu0 0.0
    %1111 = vmatpush.msra.mxu0 0.0
    %1112 = vmatpush.msra.mxu0 0.0
    %1113 = vmatpush.msra.mxu0 0.0
    %1114 = vmatpush.msra.mxu0 0.0
    %1115 = vmatpush.msra.mxu0 0.0
    %1116 = vmatpush.msra.mxu0 0.0
    %1117 = vmatpush.msra.mxu0 0.0
    %1118 = vmatpush.msra.mxu0 0.0
    %1119 = vmatpush.msra.mxu0 0.0
    %1120 = vmatpush.msra.mxu0 0.0
    %1121 = vmatpush.msra.mxu0 0.0
    %1122 = vmatpush.msra.mxu0 0.0
    %1123 = vmatpush.msra.mxu0 %v1103
    %1124 = vmatmul.f32.gmra.mxu0 %v1106
    %v1125 = vpop.f32.mrf.mxu0
    %v1126 = vadd.f32 0.0, %v1125
    %1127 = vdwg.mxu0
    %1130 = vrot.lane.b32.xlu0 %v1100, 16
    %v1131 = vpop.permute.xlu0 %1130
    %1132 = vrot.lane.b32.xlu0 %v1126, 16
    %v1133 = vpop.permute.xlu0 %1132
    %v1136 = vsel %vm195, %v1048, %v1131
    %v1137 = vsel %vm195, %v1074, %v1133
    %s1138 = scalar_lea.vmem %s6, 32
    %v1139 = vld [vmem:[%s1138] sm:$0xff]
    %v1140 = vld [vmem:[%s1138 + $0x8] sm:$0xff]
    %v1141 = vld [vmem:[%s1138 + $0x10] sm:$0xff]
    %v1142 = vld [vmem:[%s1138 + $0x18] sm:$0xff]
    %s1143 = scalar_lea.vmem %s7, 1
    %v1144 = vld [vmem:[%s1143] sm:$0x1]
    %v1146 = vperm.slane %v1144, 0
    %v1149 = vsel %vm85, %v1136, 0
    %v1152 = vsel %vm85, %v1137, 0
    %1154 = vmatpush.msra.mxu0 0.0
    %1155 = vmatpush.msra.mxu0 0.0
    %1156 = vmatpush.msra.mxu0 0.0
    %1157 = vmatpush.msra.mxu0 0.0
    %1158 = vmatpush.msra.mxu0 0.0
    %1159 = vmatpush.msra.mxu0 0.0
    %1160 = vmatpush.msra.mxu0 0.0
    %1161 = vmatpush.msra.mxu0 0.0
    %1162 = vmatpush.msra.mxu0 0.0
    %1163 = vmatpush.msra.mxu0 0.0
    %1164 = vmatpush.msra.mxu0 0.0
    %1165 = vmatpush.msra.mxu0 0.0
    %1166 = vmatpush.msra.mxu0 %v1142
    %1167 = vmatpush.msra.mxu0 %v1141
    %1168 = vmatpush.msra.mxu0 %v1140
    %1169 = vmatpush.msra.mxu0 %v1139
    %1170 = vmatmul.f32.gmra.mxu0 %v1149
    %v1171 = vpop.f32.mrf.mxu0
    %v1172 = vadd.f32 %v1146, %v1171
    %1173 = vmatmul.f32.gmra.mxu0 %v1152
    %v1174 = vpop.f32.mrf.mxu0
    %v1175 = vadd.f32 %v1146, %v1174
    %1176 = vdwg.mxu0
    %v1177 = vadd.f32 %v1172, %v769
    %v1178 = vadd.f32 %v1175, %v770
    %s1179 = scalar_lea.vmem %s8, 1
    %v1180 = vld [vmem:[%s1179] sm:$0x1]
    %s1181 = scalar_lea.vmem %s9, 1
    %v1182 = vld [vmem:[%s1181] sm:$0x1]
    %v1183 = vsel %vm85, %v1177, 0.0
    %1184 = vadd.xlane.f32.xlu0 %v1183
    %v1185 = vpop.xlane.xlu0 %1184
    %v1186 = vsel %vm85, %v1178, 0.0
    %1187 = vadd.xlane.f32.xlu0 %v1186
    %v1188 = vpop.xlane.xlu0 %1187
    %v1189 = vmul.f32 %v1185, %v98
    %v1190 = vmul.f32 %v1188, %v98
    %v1191 = vsub.f32 %v1177, %v1189
    %v1192 = vsub.f32 %v1178, %v1190
    %v1193 = vmul.f32 %v1191, %v1191
    %v1194 = vmul.f32 %v1192, %v1192
    %v1195 = vsel %vm85, %v1193, 0.0
    %1196 = vadd.xlane.f32.xlu0 %v1195
    %v1197 = vpop.xlane.xlu0 %1196
    %v1198 = vsel %vm85, %v1194, 0.0
    %1199 = vadd.xlane.f32.xlu0 %v1198
    %v1200 = vpop.xlane.xlu0 %1199
    %v1201 = vmul.f32 %v1197, %v98
    %v1202 = vmul.f32 %v1200, %v98
    %v1203 = vadd.f32 %v1201, 1e-12
    %v1204 = vadd.f32 %v1202, 1e-12
    %v1205 = vrsqrt.pop %v1203
    %v1206 = vmul.f32 %v1205, %v1203
    %v1207 = vmul.f32 %v1206, %v1205
    %v1208 = vmul.f32 0.5, %v1207
    %v1209 = vsub.f32 1.5, %v1208
    %v1210 = vmul.f32 %v1205, %v1209
    %vm1211 = vweird.f32 %v1203
    %vm1212 = vweird.f32 %v1205
    %vm1213 = vmor %vm1211, %vm1212
    %v1214 = vsel %vm1213, %v1205, %v1210
    %v1215 = vrsqrt.pop %v1204
    %v1216 = vmul.f32 %v1215, %v1204
    %v1217 = vmul.f32 %v1216, %v1215
    %v1218 = vmul.f32 0.5, %v1217
    %v1219 = vsub.f32 1.5, %v1218
    %v1220 = vmul.f32 %v1215, %v1219
    %vm1221 = vweird.f32 %v1204
    %vm1222 = vweird.f32 %v1215
    %vm1223 = vmor %vm1221, %vm1222
    %v1224 = vsel %vm1223, %v1215, %v1220
    %v1225 = vmul.f32 %v1191, %v1214
    %v1226 = vmul.f32 %v1192, %v1224
    %v1228 = vperm.slane %v1180, 0
    %v1230 = vmul.f32 %v1225, %v1228
    %v1231 = vmul.f32 %v1226, %v1228
    %v1233 = vperm.slane %v1182, 0
    %v1235 = vadd.f32 %v1230, %v1233
    %v1236 = vadd.f32 %v1231, %v1233
    %s1237 = scalar_lea.vmem %s10, 32
    %v1238 = vld [vmem:[%s1237] sm:$0xff]
    %v1239 = vld [vmem:[%s1237 + $0x8] sm:$0xff]
    %v1240 = vld [vmem:[%s1237 + $0x10] sm:$0xff]
    %v1241 = vld [vmem:[%s1237 + $0x18] sm:$0xff]
    %s1242 = scalar_lea.vmem %s11, 1
    %v1243 = vld [vmem:[%s1242] sm:$0x1]
    %v1245 = vperm.slane %v1243, 0
    %v1248 = vsel %vm85, %v1235, 0
    %v1251 = vsel %vm85, %v1236, 0
    %1253 = vmatpush.msra.mxu0 0.0
    %1254 = vmatpush.msra.mxu0 0.0
    %1255 = vmatpush.msra.mxu0 0.0
    %1256 = vmatpush.msra.mxu0 0.0
    %1257 = vmatpush.msra.mxu0 0.0
    %1258 = vmatpush.msra.mxu0 0.0
    %1259 = vmatpush.msra.mxu0 0.0
    %1260 = vmatpush.msra.mxu0 0.0
    %1261 = vmatpush.msra.mxu0 0.0
    %1262 = vmatpush.msra.mxu0 0.0
    %1263 = vmatpush.msra.mxu0 0.0
    %1264 = vmatpush.msra.mxu0 0.0
    %1265 = vmatpush.msra.mxu0 %v1241
    %1266 = vmatpush.msra.mxu0 %v1240
    %1267 = vmatpush.msra.mxu0 %v1239
    %1268 = vmatpush.msra.mxu0 %v1238
    %1269 = vmatmul.f32.gmra.mxu0 %v1248
    %v1270 = vpop.f32.mrf.mxu0
    %v1271 = vadd.f32 %v1245, %v1270
    %1272 = vmatmul.f32.gmra.mxu0 %v1251
    %v1273 = vpop.f32.mrf.mxu0
    %v1274 = vadd.f32 %v1245, %v1273
    %1275 = vdwg.mxu0
    %v1276 = vmul.f32 %v1271, 0.5
    %v1277 = vmul.f32 %v1274, 0.5
    %v1278 = vmul.f32 %v1271, 0.044715
    %v1279 = vmul.f32 %v1274, 0.044715
    %v1280 = vmul.f32 %v1278, %v1271
    %v1281 = vmul.f32 %v1279, %v1274
    %v1282 = vmul.f32 %v1280, %v1271
    %v1283 = vmul.f32 %v1281, %v1274
    %v1284 = vadd.f32 %v1271, %v1282
    %v1285 = vadd.f32 %v1274, %v1283
    %v1286 = vmul.f32 %v1284, 0.7978846
    %v1287 = vmul.f32 %v1285, 0.7978846
    %v1288 = vtanh.pop %v1286
    %v1289 = vtanh.pop %v1287
    %v1290 = vadd.f32 %v1288, 1.0
    %v1291 = vadd.f32 %v1289, 1.0
    %v1292 = vmul.f32 %v1276, %v1290
    %v1293 = vmul.f32 %v1277, %v1291
    %s1294 = scalar_lea.vmem %s12, 64
    %v1295 = vld [vmem:[%s1294] sm:$0xff]
    %v1296 = vld [vmem:[%s1294 + $0x8] sm:$0xff]
    %v1297 = vld [vmem:[%s1294 + $0x10] sm:$0xff]
    %v1298 = vld [vmem:[%s1294 + $0x18] sm:$0xff]
    %v1299 = vld [vmem:[%s1294 + $0x20] sm:$0xff]
    %v1300 = vld [vmem:[%s1294 + $0x28] sm:$0xff]
    %v1301 = vld [vmem:[%s1294 + $0x30] sm:$0xff]
    %v1302 = vld [vmem:[%s1294 + $0x38] sm:$0xff]
    %s1303 = scalar_lea.vmem %s13, 1
    %v1304 = vld [vmem:[%s1303] sm:$0x1]
    %v1306 = vperm.slane %v1304, 0
    %v1309 = vsel %vm683, %v1292, 0
    %v1312 = vsel %vm683, %v1293, 0
    %1314 = vmatpush.msra.mxu0 0.0
    %1315 = vmatpush.msra.mxu0 0.0
    %1316 = vmatpush.msra.mxu0 0.0
    %1317 = vmatpush.msra.mxu0 0.0
    %1318 = vmatpush.msra.mxu0 0.0
    %1319 = vmatpush.msra.mxu0 0.0
    %1320 = vmatpush.msra.mxu0 0.0
    %1321 = vmatpush.msra.mxu0 0.0
    %1322 = vmatpush.msra.mxu0 %v1302
    %1323 = vmatpush.msra.mxu0 %v1301
    %1324 = vmatpush.msra.mxu0 %v1300
    %1325 = vmatpush.msra.mxu0 %v1299
    %1326 = vmatpush.msra.mxu0 %v1298
    %1327 = vmatpush.msra.mxu0 %v1297
    %1328 = vmatpush.msra.mxu0 %v1296
    %1329 = vmatpush.msra.mxu0 %v1295
    %1330 = vmatmul.f32.gmra.mxu0 %v1309
    %v1331 = vpop.f32.mrf.mxu0
    %v1332 = vadd.f32 %v1306, %v1331
    %1333 = vmatmul.f32.gmra.mxu0 %v1312
    %v1334 = vpop.f32.mrf.mxu0
    %v1335 = vadd.f32 %v1306, %v1334
    %1336 = vdwg.mxu0
    %v1337 = vadd.f32 %v1332, %v1235
    %v1338 = vadd.f32 %v1335, %v1236
    %s1339 = scalar_lea.vmem %s14, 1
    %v1340 = vld [vmem:[%s1339] sm:$0x1]
    %s1341 = scalar_lea.vmem %s15, 1
    %v1342 = vld [vmem:[%s1341] sm:$0x1]
    %v1343 = vsel %vm85, %v1337, 0.0
    %1344 = vadd.xlane.f32.xlu0 %v1343
    %v1345 = vpop.xlane.xlu0 %1344
    %v1346 = vsel %vm85, %v1338, 0.0
    %1347 = vadd.xlane.f32.xlu0 %v1346
    %v1348 = vpop.xlane.xlu0 %1347
    %v1349 = vmul.f32 %v1345, %v98
    %v1350 = vmul.f32 %v1348, %v98
    %v1351 = vsub.f32 %v1337, %v1349
    %v1352 = vsub.f32 %v1338, %v1350
    %v1353 = vmul.f32 %v1351, %v1351
    %v1354 = vmul.f32 %v1352, %v1352
    %v1355 = vsel %vm85, %v1353, 0.0
    %1356 = vadd.xlane.f32.xlu0 %v1355
    %v1357 = vpop.xlane.xlu0 %1356
    %v1358 = vsel %vm85, %v1354, 0.0
    %1359 = vadd.xlane.f32.xlu0 %v1358
    %v1360 = vpop.xlane.xlu0 %1359
    %v1361 = vmul.f32 %v1357, %v98
    %v1362 = vmul.f32 %v1360, %v98
    %v1363 = vadd.f32 %v1361, 1e-12
    %v1364 = vadd.f32 %v1362, 1e-12
    %v1365 = vrsqrt.pop %v1363
    %v1366 = vmul.f32 %v1365, %v1363
    %v1367 = vmul.f32 %v1366, %v1365
    %v1368 = vmul.f32 0.5, %v1367
    %v1369 = vsub.f32 1.5, %v1368
    %v1370 = vmul.f32 %v1365, %v1369
    %vm1371 = vweird.f32 %v1363
    %vm1372 = vweird.f32 %v1365
    %vm1373 = vmor %vm1371, %vm1372
    %v1374 = vsel %vm1373, %v1365, %v1370
    %v1375 = vrsqrt.pop %v1364
    %v1376 = vmul.f32 %v1375, %v1364
    %v1377 = vmul.f32 %v1376, %v1375
    %v1378 = vmul.f32 0.5, %v1377
    %v1379 = vsub.f32 1.5, %v1378
    %v1380 = vmul.f32 %v1375, %v1379
    %vm1381 = vweird.f32 %v1364
    %vm1382 = vweird.f32 %v1375
    %vm1383 = vmor %vm1381, %vm1382
    %v1384 = vsel %vm1383, %v1375, %v1380
    %v1385 = vmul.f32 %v1351, %v1374
    %v1386 = vmul.f32 %v1352, %v1384
    %v1388 = vperm.slane %v1340, 0
    %v1390 = vmul.f32 %v1385, %v1388
    %v1391 = vmul.f32 %v1386, %v1388
    %v1393 = vperm.slane %v1342, 0
    %v1395 = vadd.f32 %v1390, %v1393
    %v1396 = vadd.f32 %v1391, %v1393
    %v1397 = vld [vmem:[%s16] sm:$0xff]
    %v1398 = vld [vmem:[%s16 + $0x8] sm:$0xff]
    %v1399 = vld [vmem:[%s16 + $0x10] sm:$0xff]
    %v1400 = vld [vmem:[%s16 + $0x18] sm:$0xff]
    %v1401 = vld [vmem:[%s17] sm:$0x1]
    %v1403 = vperm.slane %v1401, 0
    %v1407 = vrot.slane %v1396, 7
    %vm1408 = vcmask 1041409
    %v1409 = vsel %vm1408, %v1407, %v1395
    %v1410 = vsel %vm85, %v1409, 0
    %1412 = vmatpush.msra.mxu0 0.0
    %1413 = vmatpush.msra.mxu0 0.0
    %1414 = vmatpush.msra.mxu0 0.0
    %1415 = vmatpush.msra.mxu0 0.0
    %1416 = vmatpush.msra.mxu0 0.0
    %1417 = vmatpush.msra.mxu0 0.0
    %1418 = vmatpush.msra.mxu0 0.0
    %1419 = vmatpush.msra.mxu0 0.0
    %1420 = vmatpush.msra.mxu0 0.0
    %1421 = vmatpush.msra.mxu0 0.0
    %1422 = vmatpush.msra.mxu0 0.0
    %1423 = vmatpush.msra.mxu0 0.0
    %1424 = vmatpush.msra.mxu0 %v1400
    %1425 = vmatpush.msra.mxu0 %v1399
    %1426 = vmatpush.msra.mxu0 %v1398
    %1427 = vmatpush.msra.mxu0 %v1397
    %1428 = vmatmul.f32.gmra.mxu0 %v1410
    %v1429 = vpop.f32.mrf.mxu0
    %v1430 = vadd.f32 %v1403, %v1429
    %1431 = vdwg.mxu0
    %v1432 = vtanh.pop %v1430
    %v1433 = vld [vmem:[%s18] sm:$0x3]
    %v1434 = vld [vmem:[%s20] sm:$0xff]
    %v1435 = vld [vmem:[%s20 + $0x8] sm:$0xff]
    %v1436 = vperm.slane %v1433, 0
    %v1437 = vlaneseq
    %v1438 = vshrl.u32 %v1437, 7
    %1440 = vset.pattern.permute.xlu0 %v1438
    %1441 = vperm.xlu0 %1440, %v1436
    %v1442 = vpop.permute.xlu0 %1441
    %v1443 = vlaneseq
    %v1444 = vshrl.u32 %v1443, 7
    %v1445 = vadd.s32 %v1444, 8
    %1446 = vset.pattern.permute.xlu0 %v1445
    %1447 = vperm.xlu0 %1446, %v1436
    %v1448 = vpop.permute.xlu0 %1447
    %v1449 = vperm.slane %v1433, 1
    %v1450 = vlaneseq
    %v1451 = vshrl.u32 %v1450, 7
    %1453 = vset.pattern.permute.xlu0 %v1451
    %1454 = vperm.xlu0 %1453, %v1449
    %v1455 = vpop.permute.xlu0 %1454
    %v1456 = vlaneseq
    %v1457 = vshrl.u32 %v1456, 7
    %v1458 = vadd.s32 %v1457, 8
    %1459 = vset.pattern.permute.xlu0 %v1458
    %1460 = vperm.xlu0 %1459, %v1449
    %v1461 = vpop.permute.xlu0 %1460
    %v1462 = vld [vmem:[%s19] sm:$0x1]
    %v1464 = vperm.slane %v1462, 0
    %v1466 = vmul.f32 %v1442, %v1464
    %v1467 = vmul.f32 %v1448, %v1464
    %v1468 = vmul.f32 %v1455, %v1464
    %v1469 = vmul.f32 %v1461, %v1464
    %v1470 = vld [vmem:[%s21] sm:$0x1]
    %v1472 = vperm.slane %v1470, 0
    %v1474 = vadd.f32 %v1466, %v1472
    %v1475 = vadd.f32 %v1467, %v1472
    %v1476 = vadd.f32 %v1468, %v1472
    %v1477 = vadd.f32 %v1469, %v1472
    %v1479 = vsel %vm195, 0.0, 0
    %1481 = vmatpush.msra.mxu0 0.0
    %1482 = vmatpush.msra.mxu0 0.0
    %1483 = vmatpush.msra.mxu0 0.0
    %1484 = vmatpush.msra.mxu0 0.0
    %1485 = vmatpush.msra.mxu0 0.0
    %1486 = vmatpush.msra.mxu0 0.0
    %1487 = vmatpush.msra.mxu0 0.0
    %1488 = vmatpush.msra.mxu0 0.0
    %1489 = vmatpush.msra.mxu0 0.0
    %1490 = vmatpush.msra.mxu0 0.0
    %1491 = vmatpush.msra.mxu0 0.0
    %1492 = vmatpush.msra.mxu0 0.0
    %1493 = vmatpush.msra.mxu0 0.0
    %1494 = vmatpush.msra.mxu0 0.0
    %1495 = vmatpush.msra.mxu0 %v1435
    %1496 = vmatpush.msra.mxu0 %v1434
    %1497 = vmatmul.f32.gmra.mxu0 %v1479
    %v1498 = vpop.f32.mrf.mxu0
    %v1499 = vadd.f32 0.0, %v1498
    %1500 = vdwg.mxu0
    %v1502 = vrot.slane %v1499, 1
    %v1505 = vadd.f32 %v1474, %v1499
    %v1506 = vadd.f32 %v1476, %v1502
    %v1507 = vsub.f32 0.0, %v1505
    %v1508 = vsub.f32 0.0, %v1506
    %v1509 = vmul.f32 %v1507, 1.442695
    %v1510 = vpow.pop %v1509
    %v1511 = vmul.f32 %v1508, 1.442695
    %v1512 = vpow.pop %v1511
    %v1513 = vadd.f32 %v1510, 1.0
    %v1514 = vadd.f32 %v1512, 1.0
    %v1515 = vrcp.pop %v1513
    %v1516 = vmul.f32 %v1513, %v1515
    %v1517 = vsub.f32 1.0, %v1516
    %v1518 = vmul.f32 %v1515, %v1517
    %v1519 = vadd.f32 %v1515, %v1518
    %vm1520 = vweird.f32 %v1513
    %vm1521 = vweird.f32 %v1515
    %vm1522 = vmor %vm1520, %vm1521
    %v1523 = vsel %vm1522, %v1515, %v1519
    %v1524 = vand.u32 2147483647, %v1513
    %vm1525 = vcmp.eq.f32.partialorder %v1524, 8.507059e+37
    %v1526 = vand.u32 %v1513, 2147483648
    %v1527 = vor.u32 1.1754944e-38, %v1526
    %v1528 = vsel %vm1525, %v1527, %v1523
    %v1529 = vmul.f32 1.0, %v1528
    %v1530 = vrcp.pop %v1514
    %v1531 = vmul.f32 %v1514, %v1530
    %v1532 = vsub.f32 1.0, %v1531
    %v1533 = vmul.f32 %v1530, %v1532
    %v1534 = vadd.f32 %v1530, %v1533
    %vm1535 = vweird.f32 %v1514
    %vm1536 = vweird.f32 %v1530
    %vm1537 = vmor %vm1535, %vm1536
    %v1538 = vsel %vm1537, %v1530, %v1534
    %v1539 = vand.u32 2147483647, %v1514
    %vm1540 = vcmp.eq.f32.partialorder %v1539, 8.507059e+37
    %v1541 = vand.u32 %v1514, 2147483648
    %v1542 = vor.u32 1.1754944e-38, %v1541
    %v1543 = vsel %vm1540, %v1542, %v1538
    %v1544 = vmul.f32 1.0, %v1543
    %v1545 = vtanh.pop %v1505
    %v1546 = vtanh.pop %v1506
    %v1547 = vmul.f32 %v1529, 0.0
    %v1548 = vmul.f32 %v1544, 0.0
    %1551 = vrot.lane.b32.xlu0 %v1545, 96
    %v1552 = vpop.permute.xlu0 %1551
    %1553 = vrot.lane.b32.xlu0 %v1546, 96
    %v1554 = vpop.permute.xlu0 %1553
    %v1557 = vmul.f32 %v1529, %v1552
    %v1558 = vmul.f32 %v1544, %v1554
    %1561 = vrot.lane.b32.xlu0 %v1557, 16
    %v1562 = vpop.permute.xlu0 %1561
    %1563 = vrot.lane.b32.xlu0 %v1558, 16
    %v1564 = vpop.permute.xlu0 %1563
    %v1567 = vadd.f32 %v1547, %v1562
    %v1568 = vadd.f32 %v1548, %v1564
    %v1569 = vtanh.pop %v1567
    %v1570 = vtanh.pop %v1568
    %1573 = vrot.lane.b32.xlu0 %v1569, 32
    %v1574 = vpop.permute.xlu0 %1573
    %1575 = vrot.lane.b32.xlu0 %v1570, 32
    %v1576 = vpop.permute.xlu0 %1575
    %v1579 = vmul.f32 %v1529, %v1574
    %v1580 = vmul.f32 %v1544, %v1576
    %v1583 = vrot.slane %v1580, 7
    %v1584 = vsel %vm1408, %v1583, %v1579
    %1585 = vrot.lane.b32.xlu0 %v1584, 80
    %v1586 = vpop.permute.xlu0 %1585
    %v1587 = vsel %vm195, %v1586, 0
    %1589 = vmatpush.msra.mxu0 0.0
    %1590 = vmatpush.msra.mxu0 0.0
    %1591 = vmatpush.msra.mxu0 0.0
    %1592 = vmatpush.msra.mxu0 0.0
    %1593 = vmatpush.msra.mxu0 0.0
    %1594 = vmatpush.msra.mxu0 0.0
    %1595 = vmatpush.msra.mxu0 0.0
    %1596 = vmatpush.msra.mxu0 0.0
    %1597 = vmatpush.msra.mxu0 0.0
    %1598 = vmatpush.msra.mxu0 0.0
    %1599 = vmatpush.msra.mxu0 0.0
    %1600 = vmatpush.msra.mxu0 0.0
    %1601 = vmatpush.msra.mxu0 0.0
    %1602 = vmatpush.msra.mxu0 0.0
    %1603 = vmatpush.msra.mxu0 %v1435
    %1604 = vmatpush.msra.mxu0 %v1434
    %1605 = vmatmul.f32.gmra.mxu0 %v1587
    %v1606 = vpop.f32.mrf.mxu0
    %v1607 = vadd.f32 0.0, %v1606
    %1608 = vdwg.mxu0
    %v1610 = vrot.slane %v1607, 7
    %v1613 = vadd.f32 %v1474, %v1610
    %v1614 = vadd.f32 %v1476, %v1607
    %v1615 = vsub.f32 0.0, %v1613
    %v1616 = vsub.f32 0.0, %v1614
    %v1617 = vmul.f32 %v1615, 1.442695
    %v1618 = vpow.pop %v1617
    %v1619 = vmul.f32 %v1616, 1.442695
    %v1620 = vpow.pop %v1619
    %v1621 = vadd.f32 %v1618, 1.0
    %v1622 = vadd.f32 %v1620, 1.0
    %v1623 = vrcp.pop %v1621
    %v1624 = vmul.f32 %v1621, %v1623
    %v1625 = vsub.f32 1.0, %v1624
    %v1626 = vmul.f32 %v1623, %v1625
    %v1627 = vadd.f32 %v1623, %v1626
    %vm1628 = vweird.f32 %v1621
    %vm1629 = vweird.f32 %v1623
    %vm1630 = vmor %vm1628, %vm1629
    %v1631 = vsel %vm1630, %v1623, %v1627
    %v1632 = vand.u32 2147483647, %v1621
    %vm1633 = vcmp.eq.f32.partialorder %v1632, 8.507059e+37
    %v1634 = vand.u32 %v1621, 2147483648
    %v1635 = vor.u32 1.1754944e-38, %v1634
    %v1636 = vsel %vm1633, %v1635, %v1631
    %v1637 = vmul.f32 1.0, %v1636
    %v1638 = vrcp.pop %v1622
    %v1639 = vmul.f32 %v1622, %v1638
    %v1640 = vsub.f32 1.0, %v1639
    %v1641 = vmul.f32 %v1638, %v1640
    %v1642 = vadd.f32 %v1638, %v1641
    %vm1643 = vweird.f32 %v1622
    %vm1644 = vweird.f32 %v1638
    %vm1645 = vmor %vm1643, %vm1644
    %v1646 = vsel %vm1645, %v1638, %v1642
    %v1647 = vand.u32 2147483647, %v1622
    %vm1648 = vcmp.eq.f32.partialorder %v1647, 8.507059e+37
    %v1649 = vand.u32 %v1622, 2147483648
    %v1650 = vor.u32 1.1754944e-38, %v1649
    %v1651 = vsel %vm1648, %v1650, %v1646
    %v1652 = vmul.f32 1.0, %v1651
    %v1653 = vtanh.pop %v1613
    %v1654 = vtanh.pop %v1614
    %v1657 = vrot.slane %v1567, 7
    %v1658 = vrot.slane %v1568, 7
    %v1661 = vmul.f32 %v1637, %v1657
    %v1662 = vmul.f32 %v1652, %v1658
    %1665 = vrot.lane.b32.xlu0 %v1653, 96
    %v1666 = vpop.permute.xlu0 %1665
    %1667 = vrot.lane.b32.xlu0 %v1654, 96
    %v1668 = vpop.permute.xlu0 %1667
    %v1671 = vmul.f32 %v1637, %v1666
    %v1672 = vmul.f32 %v1652, %v1668
    %1675 = vrot.lane.b32.xlu0 %v1671, 16
    %v1676 = vpop.permute.xlu0 %1675
    %1677 = vrot.lane.b32.xlu0 %v1672, 16
    %v1678 = vpop.permute.xlu0 %1677
    %v1681 = vadd.f32 %v1661, %v1676
    %v1682 = vadd.f32 %v1662, %v1678
    %v1683 = vtanh.pop %v1681
    %v1684 = vtanh.pop %v1682
    %1687 = vrot.lane.b32.xlu0 %v1683, 32
    %v1688 = vpop.permute.xlu0 %1687
    %1689 = vrot.lane.b32.xlu0 %v1684, 32
    %v1690 = vpop.permute.xlu0 %1689
    %v1693 = vmul.f32 %v1637, %v1688
    %v1694 = vmul.f32 %v1652, %v1690
    %v1697 = vrot.slane %v1693, 1
    %v1698 = vsel %vm1408, %v1694, %v1697
    %1699 = vrot.lane.b32.xlu0 %v1698, 80
    %v1700 = vpop.permute.xlu0 %1699
    %v1701 = vsel %vm195, %v1700, 0
    %1703 = vmatpush.msra.mxu0 0.0
    %1704 = vmatpush.msra.mxu0 0.0
    %1705 = vmatpush.msra.mxu0 0.0
    %1706 = vmatpush.msra.mxu0 0.0
    %1707 = vmatpush.msra.mxu0 0.0
    %1708 = vmatpush.msra.mxu0 0.0
    %1709 = vmatpush.msra.mxu0 0.0
    %1710 = vmatpush.msra.mxu0 0.0
    %1711 = vmatpush.msra.mxu0 0.0
    %1712 = vmatpush.msra.mxu0 0.0
    %1713 = vmatpush.msra.mxu0 0.0
    %1714 = vmatpush.msra.mxu0 0.0
    %1715 = vmatpush.msra.mxu0 0.0
    %1716 = vmatpush.msra.mxu0 0.0
    %1717 = vmatpush.msra.mxu0 %v1435
    %1718 = vmatpush.msra.mxu0 %v1434
    %1719 = vmatmul.f32.gmra.mxu0 %v1701
    %v1720 = vpop.f32.mrf.mxu0
    %v1721 = vadd.f32 0.0, %v1720
    %1722 = vdwg.mxu0
    %v1724 = vrot.slane %v1721, 6
    %v1725 = vrot.slane %v1721, 7
    %v1728 = vadd.f32 %v1474, %v1724
    %v1729 = vadd.f32 %v1476, %v1725
    %v1730 = vsub.f32 0.0, %v1728
    %v1731 = vsub.f32 0.0, %v1729
    %v1732 = vmul.f32 %v1730, 1.442695
    %v1733 = vpow.pop %v1732
    %v1734 = vmul.f32 %v1731, 1.442695
    %v1735 = vpow.pop %v1734
    %v1736 = vadd.f32 %v1733, 1.0
    %v1737 = vadd.f32 %v1735, 1.0
    %v1738 = vrcp.pop %v1736
    %v1739 = vmul.f32 %v1736, %v1738
    %v1740 = vsub.f32 1.0, %v1739
    %v1741 = vmul.f32 %v1738, %v1740
    %v1742 = vadd.f32 %v1738, %v1741
    %vm1743 = vweird.f32 %v1736
    %vm1744 = vweird.f32 %v1738
    %vm1745 = vmor %vm1743, %vm1744
    %v1746 = vsel %vm1745, %v1738, %v1742
    %v1747 = vand.u32 2147483647, %v1736
    %vm1748 = vcmp.eq.f32.partialorder %v1747, 8.507059e+37
    %v1749 = vand.u32 %v1736, 2147483648
    %v1750 = vor.u32 1.1754944e-38, %v1749
    %v1751 = vsel %vm1748, %v1750, %v1746
    %v1752 = vmul.f32 1.0, %v1751
    %v1753 = vrcp.pop %v1737
    %v1754 = vmul.f32 %v1737, %v1753
    %v1755 = vsub.f32 1.0, %v1754
    %v1756 = vmul.f32 %v1753, %v1755
    %v1757 = vadd.f32 %v1753, %v1756
    %vm1758 = vweird.f32 %v1737
    %vm1759 = vweird.f32 %v1753
    %vm1760 = vmor %vm1758, %vm1759
    %v1761 = vsel %vm1760, %v1753, %v1757
    %v1762 = vand.u32 2147483647, %v1737
    %vm1763 = vcmp.eq.f32.partialorder %v1762, 8.507059e+37
    %v1764 = vand.u32 %v1737, 2147483648
    %v1765 = vor.u32 1.1754944e-38, %v1764
    %v1766 = vsel %vm1763, %v1765, %v1761
    %v1767 = vmul.f32 1.0, %v1766
    %v1768 = vtanh.pop %v1728
    %v1769 = vtanh.pop %v1729
    %v1772 = vrot.slane %v1681, 7
    %v1773 = vrot.slane %v1682, 7
    %v1776 = vmul.f32 %v1752, %v1772
    %v1777 = vmul.f32 %v1767, %v1773
    %1780 = vrot.lane.b32.xlu0 %v1768, 96
    %v1781 = vpop.permute.xlu0 %1780
    %1782 = vrot.lane.b32.xlu0 %v1769, 96
    %v1783 = vpop.permute.xlu0 %1782
    %v1786 = vmul.f32 %v1752, %v1781
    %v1787 = vmul.f32 %v1767, %v1783
    %1790 = vrot.lane.b32.xlu0 %v1786, 16
    %v1791 = vpop.permute.xlu0 %1790
    %1792 = vrot.lane.b32.xlu0 %v1787, 16
    %v1793 = vpop.permute.xlu0 %1792
    %v1796 = vadd.f32 %v1776, %v1791
    %v1797 = vadd.f32 %v1777, %v1793
    %v1798 = vtanh.pop %v1796
    %v1799 = vtanh.pop %v1797
    %1802 = vrot.lane.b32.xlu0 %v1798, 32
    %v1803 = vpop.permute.xlu0 %1802
    %1804 = vrot.lane.b32.xlu0 %v1799, 32
    %v1805 = vpop.permute.xlu0 %1804
    %v1808 = vmul.f32 %v1752, %v1803
    %v1809 = vmul.f32 %v1767, %v1805
    %v1812 = vrot.slane %v1808, 2
    %v1813 = vrot.slane %v1809, 1
    %v1814 = vsel %vm1408, %v1813, %v1812
    %1815 = vrot.lane.b32.xlu0 %v1814, 80
    %v1816 = vpop.permute.xlu0 %1815
    %v1817 = vsel %vm195, %v1816, 0
    %1819 = vmatpush.msra.mxu0 0.0
    %1820 = vmatpush.msra.mxu0 0.0
    %1821 = vmatpush.msra.mxu0 0.0
    %1822 = vmatpush.msra.mxu0 0.0
    %1823 = vmatpush.msra.mxu0 0.0
    %1824 = vmatpush.msra.mxu0 0.0
    %1825 = vmatpush.msra.mxu0 0.0
    %1826 = vmatpush.msra.mxu0 0.0
    %1827 = vmatpush.msra.mxu0 0.0
    %1828 = vmatpush.msra.mxu0 0.0
    %1829 = vmatpush.msra.mxu0 0.0
    %1830 = vmatpush.msra.mxu0 0.0
    %1831 = vmatpush.msra.mxu0 0.0
    %1832 = vmatpush.msra.mxu0 0.0
    %1833 = vmatpush.msra.mxu0 %v1435
    %1834 = vmatpush.msra.mxu0 %v1434
    %1835 = vmatmul.f32.gmra.mxu0 %v1817
    %v1836 = vpop.f32.mrf.mxu0
    %v1837 = vadd.f32 0.0, %v1836
    %1838 = vdwg.mxu0
    %v1840 = vrot.slane %v1837, 5
    %v1841 = vrot.slane %v1837, 6
    %v1844 = vadd.f32 %v1474, %v1840
    %v1845 = vadd.f32 %v1476, %v1841
    %v1846 = vsub.f32 0.0, %v1844
    %v1847 = vsub.f32 0.0, %v1845
    %v1848 = vmul.f32 %v1846, 1.442695
    %v1849 = vpow.pop %v1848
    %v1850 = vmul.f32 %v1847, 1.442695
    %v1851 = vpow.pop %v1850
    %v1852 = vadd.f32 %v1849, 1.0
    %v1853 = vadd.f32 %v1851, 1.0
    %v1854 = vrcp.pop %v1852
    %v1855 = vmul.f32 %v1852, %v1854
    %v1856 = vsub.f32 1.0, %v1855
    %v1857 = vmul.f32 %v1854, %v1856
    %v1858 = vadd.f32 %v1854, %v1857
    %vm1859 = vweird.f32 %v1852
    %vm1860 = vweird.f32 %v1854
    %vm1861 = vmor %vm1859, %vm1860
    %v1862 = vsel %vm1861, %v1854, %v1858
    %v1863 = vand.u32 2147483647, %v1852
    %vm1864 = vcmp.eq.f32.partialorder %v1863, 8.507059e+37
    %v1865 = vand.u32 %v1852, 2147483648
    %v1866 = vor.u32 1.1754944e-38, %v1865
    %v1867 = vsel %vm1864, %v1866, %v1862
    %v1868 = vmul.f32 1.0, %v1867
    %v1869 = vrcp.pop %v1853
    %v1870 = vmul.f32 %v1853, %v1869
    %v1871 = vsub.f32 1.0, %v1870
    %v1872 = vmul.f32 %v1869, %v1871
    %v1873 = vadd.f32 %v1869, %v1872
    %vm1874 = vweird.f32 %v1853
    %vm1875 = vweird.f32 %v1869
    %vm1876 = vmor %vm1874, %vm1875
    %v1877 = vsel %vm1876, %v1869, %v1873
    %v1878 = vand.u32 2147483647, %v1853
    %vm1879 = vcmp.eq.f32.partialorder %v1878, 8.507059e+37
    %v1880 = vand.u32 %v1853, 2147483648
    %v1881 = vor.u32 1.1754944e-38, %v1880
    %v1882 = vsel %vm1879, %v1881, %v1877
    %v1883 = vmul.f32 1.0, %v1882
    %v1884 = vtanh.pop %v1844
    %v1885 = vtanh.pop %v1845
    %v1888 = vrot.slane %v1796, 7
    %v1889 = vrot.slane %v1797, 7
    %v1892 = vmul.f32 %v1868, %v1888
    %v1893 = vmul.f32 %v1883, %v1889
    %1896 = vrot.lane.b32.xlu0 %v1884, 96
    %v1897 = vpop.permute.xlu0 %1896
    %1898 = vrot.lane.b32.xlu0 %v1885, 96
    %v1899 = vpop.permute.xlu0 %1898
    %v1902 = vmul.f32 %v1868, %v1897
    %v1903 = vmul.f32 %v1883, %v1899
    %1906 = vrot.lane.b32.xlu0 %v1902, 16
    %v1907 = vpop.permute.xlu0 %1906
    %1908 = vrot.lane.b32.xlu0 %v1903, 16
    %v1909 = vpop.permute.xlu0 %1908
    %v1912 = vadd.f32 %v1892, %v1907
    %v1913 = vadd.f32 %v1893, %v1909
    %v1914 = vtanh.pop %v1912
    %v1915 = vtanh.pop %v1913
    %1918 = vrot.lane.b32.xlu0 %v1914, 32
    %v1919 = vpop.permute.xlu0 %1918
    %1920 = vrot.lane.b32.xlu0 %v1915, 32
    %v1921 = vpop.permute.xlu0 %1920
    %v1924 = vmul.f32 %v1868, %v1919
    %v1925 = vmul.f32 %v1883, %v1921
    %v1928 = vrot.slane %v1924, 3
    %v1929 = vrot.slane %v1925, 2
    %v1930 = vsel %vm1408, %v1929, %v1928
    %1931 = vrot.lane.b32.xlu0 %v1930, 80
    %v1932 = vpop.permute.xlu0 %1931
    %v1933 = vsel %vm195, %v1932, 0
    %1935 = vmatpush.msra.mxu0 0.0
    %1936 = vmatpush.msra.mxu0 0.0
    %1937 = vmatpush.msra.mxu0 0.0
    %1938 = vmatpush.msra.mxu0 0.0
    %1939 = vmatpush.msra.mxu0 0.0
    %1940 = vmatpush.msra.mxu0 0.0
    %1941 = vmatpush.msra.mxu0 0.0
    %1942 = vmatpush.msra.mxu0 0.0
    %1943 = vmatpush.msra.mxu0 0.0
    %1944 = vmatpush.msra.mxu0 0.0
    %1945 = vmatpush.msra.mxu0 0.0
    %1946 = vmatpush.msra.mxu0 0.0
    %1947 = vmatpush.msra.mxu0 0.0
    %1948 = vmatpush.msra.mxu0 0.0
    %1949 = vmatpush.msra.mxu0 %v1435
    %1950 = vmatpush.msra.mxu0 %v1434
    %1951 = vmatmul.f32.gmra.mxu0 %v1933
    %v1952 = vpop.f32.mrf.mxu0
    %v1953 = vadd.f32 0.0, %v1952
    %1954 = vdwg.mxu0
    %v1956 = vrot.slane %v1953, 4
    %v1957 = vrot.slane %v1953, 5
    %v1960 = vadd.f32 %v1474, %v1956
    %v1961 = vadd.f32 %v1476, %v1957
    %v1962 = vsub.f32 0.0, %v1960
    %v1963 = vsub.f32 0.0, %v1961
    %v1964 = vmul.f32 %v1962, 1.442695
    %v1965 = vpow.pop %v1964
    %v1966 = vmul.f32 %v1963, 1.442695
    %v1967 = vpow.pop %v1966
    %v1968 = vadd.f32 %v1965, 1.0
    %v1969 = vadd.f32 %v1967, 1.0
    %v1970 = vrcp.pop %v1968
    %v1971 = vmul.f32 %v1968, %v1970
    %v1972 = vsub.f32 1.0, %v1971
    %v1973 = vmul.f32 %v1970, %v1972
    %v1974 = vadd.f32 %v1970, %v1973
    %vm1975 = vweird.f32 %v1968
    %vm1976 = vweird.f32 %v1970
    %vm1977 = vmor %vm1975, %vm1976
    %v1978 = vsel %vm1977, %v1970, %v1974
    %v1979 = vand.u32 2147483647, %v1968
    %vm1980 = vcmp.eq.f32.partialorder %v1979, 8.507059e+37
    %v1981 = vand.u32 %v1968, 2147483648
    %v1982 = vor.u32 1.1754944e-38, %v1981
    %v1983 = vsel %vm1980, %v1982, %v1978
    %v1984 = vmul.f32 1.0, %v1983
    %v1985 = vrcp.pop %v1969
    %v1986 = vmul.f32 %v1969, %v1985
    %v1987 = vsub.f32 1.0, %v1986
    %v1988 = vmul.f32 %v1985, %v1987
    %v1989 = vadd.f32 %v1985, %v1988
    %vm1990 = vweird.f32 %v1969
    %vm1991 = vweird.f32 %v1985
    %vm1992 = vmor %vm1990, %vm1991
    %v1993 = vsel %vm1992, %v1985, %v1989
    %v1994 = vand.u32 2147483647, %v1969
    %vm1995 = vcmp.eq.f32.partialorder %v1994, 8.507059e+37
    %v1996 = vand.u32 %v1969, 2147483648
    %v1997 = vor.u32 1.1754944e-38, %v1996
    %v1998 = vsel %vm1995, %v1997, %v1993
    %v1999 = vmul.f32 1.0, %v1998
    %v2000 = vtanh.pop %v1960
    %v2001 = vtanh.pop %v1961
    %v2004 = vrot.slane %v1912, 7
    %v2005 = vrot.slane %v1913, 7
    %v2008 = vmul.f32 %v1984, %v2004
    %v2009 = vmul.f32 %v1999, %v2005
    %2012 = vrot.lane.b32.xlu0 %v2000, 96
    %v2013 = vpop.permute.xlu0 %2012
    %2014 = vrot.lane.b32.xlu0 %v2001, 96
    %v2015 = vpop.permute.xlu0 %2014
    %v2018 = vmul.f32 %v1984, %v2013
    %v2019 = vmul.f32 %v1999, %v2015
    %2022 = vrot.lane.b32.xlu0 %v2018, 16
    %v2023 = vpop.permute.xlu0 %2022
    %2024 = vrot.lane.b32.xlu0 %v2019, 16
    %v2025 = vpop.permute.xlu0 %2024
    %v2028 = vadd.f32 %v2008, %v2023
    %v2029 = vadd.f32 %v2009, %v2025
    %v2030 = vtanh.pop %v2028
    %v2031 = vtanh.pop %v2029
    %2034 = vrot.lane.b32.xlu0 %v2030, 32
    %v2035 = vpop.permute.xlu0 %2034
    %2036 = vrot.lane.b32.xlu0 %v2031, 32
    %v2037 = vpop.permute.xlu0 %2036
    %v2040 = vmul.f32 %v1984, %v2035
    %v2041 = vmul.f32 %v1999, %v2037
    %v2044 = vrot.slane %v2040, 4
    %v2045 = vrot.slane %v2041, 3
    %v2046 = vsel %vm1408, %v2045, %v2044
    %2047 = vrot.lane.b32.xlu0 %v2046, 80
    %v2048 = vpop.permute.xlu0 %2047
    %v2049 = vsel %vm195, %v2048, 0
    %2051 = vmatpush.msra.mxu0 0.0
    %2052 = vmatpush.msra.mxu0 0.0
    %2053 = vmatpush.msra.mxu0 0.0
    %2054 = vmatpush.msra.mxu0 0.0
    %2055 = vmatpush.msra.mxu0 0.0
    %2056 = vmatpush.msra.mxu0 0.0
    %2057 = vmatpush.msra.mxu0 0.0
    %2058 = vmatpush.msra.mxu0 0.0
    %2059 = vmatpush.msra.mxu0 0.0
    %2060 = vmatpush.msra.mxu0 0.0
    %2061 = vmatpush.msra.mxu0 0.0
    %2062 = vmatpush.msra.mxu0 0.0
    %2063 = vmatpush.msra.mxu0 0.0
    %2064 = vmatpush.msra.mxu0 0.0
    %2065 = vmatpush.msra.mxu0 %v1435
    %2066 = vmatpush.msra.mxu0 %v1434
    %2067 = vmatmul.f32.gmra.mxu0 %v2049
    %v2068 = vpop.f32.mrf.mxu0
    %v2069 = vadd.f32 0.0, %v2068
    %2070 = vdwg.mxu0
    %v2072 = vrot.slane %v2069, 3
    %v2073 = vrot.slane %v2069, 4
    %v2076 = vadd.f32 %v1474, %v2072
    %v2077 = vadd.f32 %v1476, %v2073
    %v2078 = vsub.f32 0.0, %v2076
    %v2079 = vsub.f32 0.0, %v2077
    %v2080 = vmul.f32 %v2078, 1.442695
    %v2081 = vpow.pop %v2080
    %v2082 = vmul.f32 %v2079, 1.442695
    %v2083 = vpow.pop %v2082
    %v2084 = vadd.f32 %v2081, 1.0
    %v2085 = vadd.f32 %v2083, 1.0
    %v2086 = vrcp.pop %v2084
    %v2087 = vmul.f32 %v2084, %v2086
    %v2088 = vsub.f32 1.0, %v2087
    %v2089 = vmul.f32 %v2086, %v2088
    %v2090 = vadd.f32 %v2086, %v2089
    %vm2091 = vweird.f32 %v2084
    %vm2092 = vweird.f32 %v2086
    %vm2093 = vmor %vm2091, %vm2092
    %v2094 = vsel %vm2093, %v2086, %v2090
    %v2095 = vand.u32 2147483647, %v2084
    %vm2096 = vcmp.eq.f32.partialorder %v2095, 8.507059e+37
    %v2097 = vand.u32 %v2084, 2147483648
    %v2098 = vor.u32 1.1754944e-38, %v2097
    %v2099 = vsel %vm2096, %v2098, %v2094
    %v2100 = vmul.f32 1.0, %v2099
    %v2101 = vrcp.pop %v2085
    %v2102 = vmul.f32 %v2085, %v2101
    %v2103 = vsub.f32 1.0, %v2102
    %v2104 = vmul.f32 %v2101, %v2103
    %v2105 = vadd.f32 %v2101, %v2104
    %vm2106 = vweird.f32 %v2085
    %vm2107 = vweird.f32 %v2101
    %vm2108 = vmor %vm2106, %vm2107
    %v2109 = vsel %vm2108, %v2101, %v2105
    %v2110 = vand.u32 2147483647, %v2085
    %vm2111 = vcmp.eq.f32.partialorder %v2110, 8.507059e+37
    %v2112 = vand.u32 %v2085, 2147483648
    %v2113 = vor.u32 1.1754944e-38, %v2112
    %v2114 = vsel %vm2111, %v2113, %v2109
    %v2115 = vmul.f32 1.0, %v2114
    %v2116 = vtanh.pop %v2076
    %v2117 = vtanh.pop %v2077
    %v2120 = vrot.slane %v2028, 7
    %v2121 = vrot.slane %v2029, 7
    %v2124 = vmul.f32 %v2100, %v2120
    %v2125 = vmul.f32 %v2115, %v2121
    %2128 = vrot.lane.b32.xlu0 %v2116, 96
    %v2129 = vpop.permute.xlu0 %2128
    %2130 = vrot.lane.b32.xlu0 %v2117, 96
    %v2131 = vpop.permute.xlu0 %2130
    %v2134 = vmul.f32 %v2100, %v2129
    %v2135 = vmul.f32 %v2115, %v2131
    %2138 = vrot.lane.b32.xlu0 %v2134, 16
    %v2139 = vpop.permute.xlu0 %2138
    %2140 = vrot.lane.b32.xlu0 %v2135, 16
    %v2141 = vpop.permute.xlu0 %2140
    %v2144 = vadd.f32 %v2124, %v2139
    %v2145 = vadd.f32 %v2125, %v2141
    %v2146 = vtanh.pop %v2144
    %v2147 = vtanh.pop %v2145
    %2150 = vrot.lane.b32.xlu0 %v2146, 32
    %v2151 = vpop.permute.xlu0 %2150
    %2152 = vrot.lane.b32.xlu0 %v2147, 32
    %v2153 = vpop.permute.xlu0 %2152
    %v2156 = vmul.f32 %v2100, %v2151
    %v2157 = vmul.f32 %v2115, %v2153
    %v2160 = vrot.slane %v2156, 5
    %v2161 = vrot.slane %v2157, 4
    %v2162 = vsel %vm1408, %v2161, %v2160
    %2163 = vrot.lane.b32.xlu0 %v2162, 80
    %v2164 = vpop.permute.xlu0 %2163
    %v2165 = vsel %vm195, %v2164, 0
    %2167 = vmatpush.msra.mxu0 0.0
    %2168 = vmatpush.msra.mxu0 0.0
    %2169 = vmatpush.msra.mxu0 0.0
    %2170 = vmatpush.msra.mxu0 0.0
    %2171 = vmatpush.msra.mxu0 0.0
    %2172 = vmatpush.msra.mxu0 0.0
    %2173 = vmatpush.msra.mxu0 0.0
    %2174 = vmatpush.msra.mxu0 0.0
    %2175 = vmatpush.msra.mxu0 0.0
    %2176 = vmatpush.msra.mxu0 0.0
    %2177 = vmatpush.msra.mxu0 0.0
    %2178 = vmatpush.msra.mxu0 0.0
    %2179 = vmatpush.msra.mxu0 0.0
    %2180 = vmatpush.msra.mxu0 0.0
    %2181 = vmatpush.msra.mxu0 %v1435
    %2182 = vmatpush.msra.mxu0 %v1434
    %2183 = vmatmul.f32.gmra.mxu0 %v2165
    %v2184 = vpop.f32.mrf.mxu0
    %v2185 = vadd.f32 0.0, %v2184
    %2186 = vdwg.mxu0
    %v2188 = vrot.slane %v2185, 2
    %v2189 = vrot.slane %v2185, 3
    %v2192 = vadd.f32 %v1474, %v2188
    %v2193 = vadd.f32 %v1476, %v2189
    %v2194 = vsub.f32 0.0, %v2192
    %v2195 = vsub.f32 0.0, %v2193
    %v2196 = vmul.f32 %v2194, 1.442695
    %v2197 = vpow.pop %v2196
    %v2198 = vmul.f32 %v2195, 1.442695
    %v2199 = vpow.pop %v2198
    %v2200 = vadd.f32 %v2197, 1.0
    %v2201 = vadd.f32 %v2199, 1.0
    %v2202 = vrcp.pop %v2200
    %v2203 = vmul.f32 %v2200, %v2202
    %v2204 = vsub.f32 1.0, %v2203
    %v2205 = vmul.f32 %v2202, %v2204
    %v2206 = vadd.f32 %v2202, %v2205
    %vm2207 = vweird.f32 %v2200
    %vm2208 = vweird.f32 %v2202
    %vm2209 = vmor %vm2207, %vm2208
    %v2210 = vsel %vm2209, %v2202, %v2206
    %v2211 = vand.u32 2147483647, %v2200
    %vm2212 = vcmp.eq.f32.partialorder %v2211, 8.507059e+37
    %v2213 = vand.u32 %v2200, 2147483648
    %v2214 = vor.u32 1.1754944e-38, %v2213
    %v2215 = vsel %vm2212, %v2214, %v2210
    %v2216 = vmul.f32 1.0, %v2215
    %v2217 = vrcp.pop %v2201
    %v2218 = vmul.f32 %v2201, %v2217
    %v2219 = vsub.f32 1.0, %v2218
    %v2220 = vmul.f32 %v2217, %v2219
    %v2221 = vadd.f32 %v2217, %v2220
    %vm2222 = vweird.f32 %v2201
    %vm2223 = vweird.f32 %v2217
    %vm2224 = vmor %vm2222, %vm2223
    %v2225 = vsel %vm2224, %v2217, %v2221
    %v2226 = vand.u32 2147483647, %v2201
    %vm2227 = vcmp.eq.f32.partialorder %v2226, 8.507059e+37
    %v2228 = vand.u32 %v2201, 2147483648
    %v2229 = vor.u32 1.1754944e-38, %v2228
    %v2230 = vsel %vm2227, %v2229, %v2225
    %v2231 = vmul.f32 1.0, %v2230
    %v2232 = vtanh.pop %v2192
    %v2233 = vtanh.pop %v2193
    %v2236 = vrot.slane %v2144, 7
    %v2237 = vrot.slane %v2145, 7
    %v2240 = vmul.f32 %v2216, %v2236
    %v2241 = vmul.f32 %v2231, %v2237
    %2244 = vrot.lane.b32.xlu0 %v2232, 96
    %v2245 = vpop.permute.xlu0 %2244
    %2246 = vrot.lane.b32.xlu0 %v2233, 96
    %v2247 = vpop.permute.xlu0 %2246
    %v2250 = vmul.f32 %v2216, %v2245
    %v2251 = vmul.f32 %v2231, %v2247
    %2254 = vrot.lane.b32.xlu0 %v2250, 16
    %v2255 = vpop.permute.xlu0 %2254
    %2256 = vrot.lane.b32.xlu0 %v2251, 16
    %v2257 = vpop.permute.xlu0 %2256
    %v2260 = vadd.f32 %v2240, %v2255
    %v2261 = vadd.f32 %v2241, %v2257
    %v2262 = vtanh.pop %v2260
    %v2263 = vtanh.pop %v2261
    %2266 = vrot.lane.b32.xlu0 %v2262, 32
    %v2267 = vpop.permute.xlu0 %2266
    %2268 = vrot.lane.b32.xlu0 %v2263, 32
    %v2269 = vpop.permute.xlu0 %2268
    %v2272 = vmul.f32 %v2216, %v2267
    %v2273 = vmul.f32 %v2231, %v2269
    %v2276 = vrot.slane %v2272, 6
    %v2277 = vrot.slane %v2273, 5
    %v2278 = vsel %vm1408, %v2277, %v2276
    %2279 = vrot.lane.b32.xlu0 %v2278, 80
    %v2280 = vpop.permute.xlu0 %2279
    %v2281 = vsel %vm195, %v2280, 0
    %2283 = vmatpush.msra.mxu0 0.0
    %2284 = vmatpush.msra.mxu0 0.0
    %2285 = vmatpush.msra.mxu0 0.0
    %2286 = vmatpush.msra.mxu0 0.0
    %2287 = vmatpush.msra.mxu0 0.0
    %2288 = vmatpush.msra.mxu0 0.0
    %2289 = vmatpush.msra.mxu0 0.0
    %2290 = vmatpush.msra.mxu0 0.0
    %2291 = vmatpush.msra.mxu0 0.0
    %2292 = vmatpush.msra.mxu0 0.0
    %2293 = vmatpush.msra.mxu0 0.0
    %2294 = vmatpush.msra.mxu0 0.0
    %2295 = vmatpush.msra.mxu0 0.0
    %2296 = vmatpush.msra.mxu0 0.0
    %2297 = vmatpush.msra.mxu0 %v1435
    %2298 = vmatpush.msra.mxu0 %v1434
    %2299 = vmatmul.f32.gmra.mxu0 %v2281
    %v2300 = vpop.f32.mrf.mxu0
    %v2301 = vadd.f32 0.0, %v2300
    %2302 = vdwg.mxu0
    %v2304 = vrot.slane %v2301, 1
    %v2305 = vrot.slane %v2301, 2
    %v2308 = vadd.f32 %v1474, %v2304
    %v2309 = vadd.f32 %v1476, %v2305
    %v2310 = vsub.f32 0.0, %v2308
    %v2311 = vsub.f32 0.0, %v2309
    %v2312 = vmul.f32 %v2310, 1.442695
    %v2313 = vpow.pop %v2312
    %v2314 = vmul.f32 %v2311, 1.442695
    %v2315 = vpow.pop %v2314
    %v2316 = vadd.f32 %v2313, 1.0
    %v2317 = vadd.f32 %v2315, 1.0
    %v2318 = vrcp.pop %v2316
    %v2319 = vmul.f32 %v2316, %v2318
    %v2320 = vsub.f32 1.0, %v2319
    %v2321 = vmul.f32 %v2318, %v2320
    %v2322 = vadd.f32 %v2318, %v2321
    %vm2323 = vweird.f32 %v2316
    %vm2324 = vweird.f32 %v2318
    %vm2325 = vmor %vm2323, %vm2324
    %v2326 = vsel %vm2325, %v2318, %v2322
    %v2327 = vand.u32 2147483647, %v2316
    %vm2328 = vcmp.eq.f32.partialorder %v2327, 8.507059e+37
    %v2329 = vand.u32 %v2316, 2147483648
    %v2330 = vor.u32 1.1754944e-38, %v2329
    %v2331 = vsel %vm2328, %v2330, %v2326
    %v2332 = vmul.f32 1.0, %v2331
    %v2333 = vrcp.pop %v2317
    %v2334 = vmul.f32 %v2317, %v2333
    %v2335 = vsub.f32 1.0, %v2334
    %v2336 = vmul.f32 %v2333, %v2335
    %v2337 = vadd.f32 %v2333, %v2336
    %vm2338 = vweird.f32 %v2317
    %vm2339 = vweird.f32 %v2333
    %vm2340 = vmor %vm2338, %vm2339
    %v2341 = vsel %vm2340, %v2333, %v2337
    %v2342 = vand.u32 2147483647, %v2317
    %vm2343 = vcmp.eq.f32.partialorder %v2342, 8.507059e+37
    %v2344 = vand.u32 %v2317, 2147483648
    %v2345 = vor.u32 1.1754944e-38, %v2344
    %v2346 = vsel %vm2343, %v2345, %v2341
    %v2347 = vmul.f32 1.0, %v2346
    %v2348 = vtanh.pop %v2308
    %v2349 = vtanh.pop %v2309
    %v2352 = vrot.slane %v2260, 7
    %v2353 = vrot.slane %v2261, 7
    %v2356 = vmul.f32 %v2332, %v2352
    %v2357 = vmul.f32 %v2347, %v2353
    %2360 = vrot.lane.b32.xlu0 %v2348, 96
    %v2361 = vpop.permute.xlu0 %2360
    %2362 = vrot.lane.b32.xlu0 %v2349, 96
    %v2363 = vpop.permute.xlu0 %2362
    %v2366 = vmul.f32 %v2332, %v2361
    %v2367 = vmul.f32 %v2347, %v2363
    %2370 = vrot.lane.b32.xlu0 %v2366, 16
    %v2371 = vpop.permute.xlu0 %2370
    %2372 = vrot.lane.b32.xlu0 %v2367, 16
    %v2373 = vpop.permute.xlu0 %2372
    %v2376 = vadd.f32 %v2356, %v2371
    %v2377 = vadd.f32 %v2357, %v2373
    %v2378 = vtanh.pop %v2376
    %v2379 = vtanh.pop %v2377
    %2382 = vrot.lane.b32.xlu0 %v2378, 32
    %v2383 = vpop.permute.xlu0 %2382
    %2384 = vrot.lane.b32.xlu0 %v2379, 32
    %v2385 = vpop.permute.xlu0 %2384
    %v2388 = vmul.f32 %v2332, %v2383
    %v2389 = vmul.f32 %v2347, %v2385
    %v2392 = vrot.slane %v2388, 7
    %v2393 = vrot.slane %v2389, 6
    %v2394 = vsel %vm1408, %v2393, %v2392
    %2395 = vrot.lane.b32.xlu0 %v2394, 80
    %v2396 = vpop.permute.xlu0 %2395
    %v2397 = vsel %vm195, %v2396, 0
    %2399 = vmatpush.msra.mxu0 0.0
    %2400 = vmatpush.msra.mxu0 0.0
    %2401 = vmatpush.msra.mxu0 0.0
    %2402 = vmatpush.msra.mxu0 0.0
    %2403 = vmatpush.msra.mxu0 0.0
    %2404 = vmatpush.msra.mxu0 0.0
    %2405 = vmatpush.msra.mxu0 0.0
    %2406 = vmatpush.msra.mxu0 0.0
    %2407 = vmatpush.msra.mxu0 0.0
    %2408 = vmatpush.msra.mxu0 0.0
    %2409 = vmatpush.msra.mxu0 0.0
    %2410 = vmatpush.msra.mxu0 0.0
    %2411 = vmatpush.msra.mxu0 0.0
    %2412 = vmatpush.msra.mxu0 0.0
    %2413 = vmatpush.msra.mxu0 %v1435
    %2414 = vmatpush.msra.mxu0 %v1434
    %2415 = vmatmul.f32.gmra.mxu0 %v2397
    %v2416 = vpop.f32.mrf.mxu0
    %v2417 = vadd.f32 0.0, %v2416
    %2418 = vdwg.mxu0
    %v2420 = vrot.slane %v2417, 1
    %v2423 = vadd.f32 %v1475, %v2417
    %v2424 = vadd.f32 %v1477, %v2420
    %v2425 = vsub.f32 0.0, %v2423
    %v2426 = vsub.f32 0.0, %v2424
    %v2427 = vmul.f32 %v2425, 1.442695
    %v2428 = vpow.pop %v2427
    %v2429 = vmul.f32 %v2426, 1.442695
    %v2430 = vpow.pop %v2429
    %v2431 = vadd.f32 %v2428, 1.0
    %v2432 = vadd.f32 %v2430, 1.0
    %v2433 = vrcp.pop %v2431
    %v2434 = vmul.f32 %v2431, %v2433
    %v2435 = vsub.f32 1.0, %v2434
    %v2436 = vmul.f32 %v2433, %v2435
    %v2437 = vadd.f32 %v2433, %v2436
    %vm2438 = vweird.f32 %v2431
    %vm2439 = vweird.f32 %v2433
    %vm2440 = vmor %vm2438, %vm2439
    %v2441 = vsel %vm2440, %v2433, %v2437
    %v2442 = vand.u32 2147483647, %v2431
    %vm2443 = vcmp.eq.f32.partialorder %v2442, 8.507059e+37
    %v2444 = vand.u32 %v2431, 2147483648
    %v2445 = vor.u32 1.1754944e-38, %v2444
    %v2446 = vsel %vm2443, %v2445, %v2441
    %v2447 = vmul.f32 1.0, %v2446
    %v2448 = vrcp.pop %v2432
    %v2449 = vmul.f32 %v2432, %v2448
    %v2450 = vsub.f32 1.0, %v2449
    %v2451 = vmul.f32 %v2448, %v2450
    %v2452 = vadd.f32 %v2448, %v2451
    %vm2453 = vweird.f32 %v2432
    %vm2454 = vweird.f32 %v2448
    %vm2455 = vmor %vm2453, %vm2454
    %v2456 = vsel %vm2455, %v2448, %v2452
    %v2457 = vand.u32 2147483647, %v2432
    %vm2458 = vcmp.eq.f32.partialorder %v2457, 8.507059e+37
    %v2459 = vand.u32 %v2432, 2147483648
    %v2460 = vor.u32 1.1754944e-38, %v2459
    %v2461 = vsel %vm2458, %v2460, %v2456
    %v2462 = vmul.f32 1.0, %v2461
    %v2463 = vtanh.pop %v2423
    %v2464 = vtanh.pop %v2424
    %v2467 = vrot.slane %v2376, 7
    %v2468 = vrot.slane %v2377, 7
    %v2471 = vmul.f32 %v2447, %v2467
    %v2472 = vmul.f32 %v2462, %v2468
    %2475 = vrot.lane.b32.xlu0 %v2463, 96
    %v2476 = vpop.permute.xlu0 %2475
    %2477 = vrot.lane.b32.xlu0 %v2464, 96
    %v2478 = vpop.permute.xlu0 %2477
    %v2481 = vmul.f32 %v2447, %v2476
    %v2482 = vmul.f32 %v2462, %v2478
    %2485 = vrot.lane.b32.xlu0 %v2481, 16
    %v2486 = vpop.permute.xlu0 %2485
    %2487 = vrot.lane.b32.xlu0 %v2482, 16
    %v2488 = vpop.permute.xlu0 %2487
    %v2491 = vadd.f32 %v2471, %v2486
    %v2492 = vadd.f32 %v2472, %v2488
    %v2493 = vtanh.pop %v2491
    %v2494 = vtanh.pop %v2492
    %2497 = vrot.lane.b32.xlu0 %v2493, 32
    %v2498 = vpop.permute.xlu0 %2497
    %2499 = vrot.lane.b32.xlu0 %v2494, 32
    %v2500 = vpop.permute.xlu0 %2499
    %v2503 = vmul.f32 %v2447, %v2498
    %v2504 = vmul.f32 %v2462, %v2500
    %v2507 = vrot.slane %v2504, 7
    %v2508 = vsel %vm1408, %v2507, %v2503
    %2509 = vrot.lane.b32.xlu0 %v2508, 80
    %v2510 = vpop.permute.xlu0 %2509
    %v2511 = vsel %vm195, %v2510, 0
    %2513 = vmatpush.msra.mxu0 0.0
    %2514 = vmatpush.msra.mxu0 0.0
    %2515 = vmatpush.msra.mxu0 0.0
    %2516 = vmatpush.msra.mxu0 0.0
    %2517 = vmatpush.msra.mxu0 0.0
    %2518 = vmatpush.msra.mxu0 0.0
    %2519 = vmatpush.msra.mxu0 0.0
    %2520 = vmatpush.msra.mxu0 0.0
    %2521 = vmatpush.msra.mxu0 0.0
    %2522 = vmatpush.msra.mxu0 0.0
    %2523 = vmatpush.msra.mxu0 0.0
    %2524 = vmatpush.msra.mxu0 0.0
    %2525 = vmatpush.msra.mxu0 0.0
    %2526 = vmatpush.msra.mxu0 0.0
    %2527 = vmatpush.msra.mxu0 %v1435
    %2528 = vmatpush.msra.mxu0 %v1434
    %2529 = vmatmul.f32.gmra.mxu0 %v2511
    %v2530 = vpop.f32.mrf.mxu0
    %v2531 = vadd.f32 0.0, %v2530
    %2532 = vdwg.mxu0
    %v2534 = vrot.slane %v2531, 7
    %v2537 = vadd.f32 %v1475, %v2534
    %v2538 = vadd.f32 %v1477, %v2531
    %v2539 = vsub.f32 0.0, %v2537
    %v2540 = vsub.f32 0.0, %v2538
    %v2541 = vmul.f32 %v2539, 1.442695
    %v2542 = vpow.pop %v2541
    %v2543 = vmul.f32 %v2540, 1.442695
    %v2544 = vpow.pop %v2543
    %v2545 = vadd.f32 %v2542, 1.0
    %v2546 = vadd.f32 %v2544, 1.0
    %v2547 = vrcp.pop %v2545
    %v2548 = vmul.f32 %v2545, %v2547
    %v2549 = vsub.f32 1.0, %v2548
    %v2550 = vmul.f32 %v2547, %v2549
    %v2551 = vadd.f32 %v2547, %v2550
    %vm2552 = vweird.f32 %v2545
    %vm2553 = vweird.f32 %v2547
    %vm2554 = vmor %vm2552, %vm2553
    %v2555 = vsel %vm2554, %v2547, %v2551
    %v2556 = vand.u32 2147483647, %v2545
    %vm2557 = vcmp.eq.f32.partialorder %v2556, 8.507059e+37
    %v2558 = vand.u32 %v2545, 2147483648
    %v2559 = vor.u32 1.1754944e-38, %v2558
    %v2560 = vsel %vm2557, %v2559, %v2555
    %v2561 = vmul.f32 1.0, %v2560
    %v2562 = vrcp.pop %v2546
    %v2563 = vmul.f32 %v2546, %v2562
    %v2564 = vsub.f32 1.0, %v2563
    %v2565 = vmul.f32 %v2562, %v2564
    %v2566 = vadd.f32 %v2562, %v2565
    %vm2567 = vweird.f32 %v2546
    %vm2568 = vweird.f32 %v2562
    %vm2569 = vmor %vm2567, %vm2568
    %v2570 = vsel %vm2569, %v2562, %v2566
    %v2571 = vand.u32 2147483647, %v2546
    %vm2572 = vcmp.eq.f32.partialorder %v2571, 8.507059e+37
    %v2573 = vand.u32 %v2546, 2147483648
    %v2574 = vor.u32 1.1754944e-38, %v2573
    %v2575 = vsel %vm2572, %v2574, %v2570
    %v2576 = vmul.f32 1.0, %v2575
    %v2577 = vtanh.pop %v2537
    %v2578 = vtanh.pop %v2538
    %v2581 = vrot.slane %v2491, 7
    %v2582 = vrot.slane %v2492, 7
    %v2585 = vmul.f32 %v2561, %v2581
    %v2586 = vmul.f32 %v2576, %v2582
    %2589 = vrot.lane.b32.xlu0 %v2577, 96
    %v2590 = vpop.permute.xlu0 %2589
    %2591 = vrot.lane.b32.xlu0 %v2578, 96
    %v2592 = vpop.permute.xlu0 %2591
    %v2595 = vmul.f32 %v2561, %v2590
    %v2596 = vmul.f32 %v2576, %v2592
    %2599 = vrot.lane.b32.xlu0 %v2595, 16
    %v2600 = vpop.permute.xlu0 %2599
    %2601 = vrot.lane.b32.xlu0 %v2596, 16
    %v2602 = vpop.permute.xlu0 %2601
    %v2605 = vadd.f32 %v2585, %v2600
    %v2606 = vadd.f32 %v2586, %v2602
    %v2607 = vtanh.pop %v2605
    %v2608 = vtanh.pop %v2606
    %2611 = vrot.lane.b32.xlu0 %v2607, 32
    %v2612 = vpop.permute.xlu0 %2611
    %2613 = vrot.lane.b32.xlu0 %v2608, 32
    %v2614 = vpop.permute.xlu0 %2613
    %v2617 = vmul.f32 %v2561, %v2612
    %v2618 = vmul.f32 %v2576, %v2614
    %v2621 = vrot.slane %v2617, 1
    %v2622 = vsel %vm1408, %v2618, %v2621
    %2623 = vrot.lane.b32.xlu0 %v2622, 80
    %v2624 = vpop.permute.xlu0 %2623
    %v2625 = vsel %vm195, %v2624, 0
    %2627 = vmatpush.msra.mxu0 0.0
    %2628 = vmatpush.msra.mxu0 0.0
    %2629 = vmatpush.msra.mxu0 0.0
    %2630 = vmatpush.msra.mxu0 0.0
    %2631 = vmatpush.msra.mxu0 0.0
    %2632 = vmatpush.msra.mxu0 0.0
    %2633 = vmatpush.msra.mxu0 0.0
    %2634 = vmatpush.msra.mxu0 0.0
    %2635 = vmatpush.msra.mxu0 0.0
    %2636 = vmatpush.msra.mxu0 0.0
    %2637 = vmatpush.msra.mxu0 0.0
    %2638 = vmatpush.msra.mxu0 0.0
    %2639 = vmatpush.msra.mxu0 0.0
    %2640 = vmatpush.msra.mxu0 0.0
    %2641 = vmatpush.msra.mxu0 %v1435
    %2642 = vmatpush.msra.mxu0 %v1434
    %2643 = vmatmul.f32.gmra.mxu0 %v2625
    %v2644 = vpop.f32.mrf.mxu0
    %v2645 = vadd.f32 0.0, %v2644
    %2646 = vdwg.mxu0
    %v2648 = vrot.slane %v2645, 6
    %v2649 = vrot.slane %v2645, 7
    %v2652 = vadd.f32 %v1475, %v2648
    %v2653 = vadd.f32 %v1477, %v2649
    %v2654 = vsub.f32 0.0, %v2652
    %v2655 = vsub.f32 0.0, %v2653
    %v2656 = vmul.f32 %v2654, 1.442695
    %v2657 = vpow.pop %v2656
    %v2658 = vmul.f32 %v2655, 1.442695
    %v2659 = vpow.pop %v2658
    %v2660 = vadd.f32 %v2657, 1.0
    %v2661 = vadd.f32 %v2659, 1.0
    %v2662 = vrcp.pop %v2660
    %v2663 = vmul.f32 %v2660, %v2662
    %v2664 = vsub.f32 1.0, %v2663
    %v2665 = vmul.f32 %v2662, %v2664
    %v2666 = vadd.f32 %v2662, %v2665
    %vm2667 = vweird.f32 %v2660
    %vm2668 = vweird.f32 %v2662
    %vm2669 = vmor %vm2667, %vm2668
    %v2670 = vsel %vm2669, %v2662, %v2666
    %v2671 = vand.u32 2147483647, %v2660
    %vm2672 = vcmp.eq.f32.partialorder %v2671, 8.507059e+37
    %v2673 = vand.u32 %v2660, 2147483648
    %v2674 = vor.u32 1.1754944e-38, %v2673
    %v2675 = vsel %vm2672, %v2674, %v2670
    %v2676 = vmul.f32 1.0, %v2675
    %v2677 = vrcp.pop %v2661
    %v2678 = vmul.f32 %v2661, %v2677
    %v2679 = vsub.f32 1.0, %v2678
    %v2680 = vmul.f32 %v2677, %v2679
    %v2681 = vadd.f32 %v2677, %v2680
    %vm2682 = vweird.f32 %v2661
    %vm2683 = vweird.f32 %v2677
    %vm2684 = vmor %vm2682, %vm2683
    %v2685 = vsel %vm2684, %v2677, %v2681
    %v2686 = vand.u32 2147483647, %v2661
    %vm2687 = vcmp.eq.f32.partialorder %v2686, 8.507059e+37
    %v2688 = vand.u32 %v2661, 2147483648
    %v2689 = vor.u32 1.1754944e-38, %v2688
    %v2690 = vsel %vm2687, %v2689, %v2685
    %v2691 = vmul.f32 1.0, %v2690
    %v2692 = vtanh.pop %v2652
    %v2693 = vtanh.pop %v2653
    %v2696 = vrot.slane %v2605, 7
    %v2697 = vrot.slane %v2606, 7
    %v2700 = vmul.f32 %v2676, %v2696
    %v2701 = vmul.f32 %v2691, %v2697
    %2704 = vrot.lane.b32.xlu0 %v2692, 96
    %v2705 = vpop.permute.xlu0 %2704
    %2706 = vrot.lane.b32.xlu0 %v2693, 96
    %v2707 = vpop.permute.xlu0 %2706
    %v2710 = vmul.f32 %v2676, %v2705
    %v2711 = vmul.f32 %v2691, %v2707
    %2714 = vrot.lane.b32.xlu0 %v2710, 16
    %v2715 = vpop.permute.xlu0 %2714
    %2716 = vrot.lane.b32.xlu0 %v2711, 16
    %v2717 = vpop.permute.xlu0 %2716
    %v2720 = vadd.f32 %v2700, %v2715
    %v2721 = vadd.f32 %v2701, %v2717
    %v2722 = vtanh.pop %v2720
    %v2723 = vtanh.pop %v2721
    %2726 = vrot.lane.b32.xlu0 %v2722, 32
    %v2727 = vpop.permute.xlu0 %2726
    %2728 = vrot.lane.b32.xlu0 %v2723, 32
    %v2729 = vpop.permute.xlu0 %2728
    %v2732 = vmul.f32 %v2676, %v2727
    %v2733 = vmul.f32 %v2691, %v2729
    %v2736 = vrot.slane %v2732, 2
    %v2737 = vrot.slane %v2733, 1
    %v2738 = vsel %vm1408, %v2737, %v2736
    %2739 = vrot.lane.b32.xlu0 %v2738, 80
    %v2740 = vpop.permute.xlu0 %2739
    %v2741 = vsel %vm195, %v2740, 0
    %2743 = vmatpush.msra.mxu0 0.0
    %2744 = vmatpush.msra.mxu0 0.0
    %2745 = vmatpush.msra.mxu0 0.0
    %2746 = vmatpush.msra.mxu0 0.0
    %2747 = vmatpush.msra.mxu0 0.0
    %2748 = vmatpush.msra.mxu0 0.0
    %2749 = vmatpush.msra.mxu0 0.0
    %2750 = vmatpush.msra.mxu0 0.0
    %2751 = vmatpush.msra.mxu0 0.0
    %2752 = vmatpush.msra.mxu0 0.0
    %2753 = vmatpush.msra.mxu0 0.0
    %2754 = vmatpush.msra.mxu0 0.0
    %2755 = vmatpush.msra.mxu0 0.0
    %2756 = vmatpush.msra.mxu0 0.0
    %2757 = vmatpush.msra.mxu0 %v1435
    %2758 = vmatpush.msra.mxu0 %v1434
    %2759 = vmatmul.f32.gmra.mxu0 %v2741
    %v2760 = vpop.f32.mrf.mxu0
    %v2761 = vadd.f32 0.0, %v2760
    %2762 = vdwg.mxu0
    %v2764 = vrot.slane %v2761, 5
    %v2765 = vrot.slane %v2761, 6
    %v2768 = vadd.f32 %v1475, %v2764
    %v2769 = vadd.f32 %v1477, %v2765
    %v2770 = vsub.f32 0.0, %v2768
    %v2771 = vsub.f32 0.0, %v2769
    %v2772 = vmul.f32 %v2770, 1.442695
    %v2773 = vpow.pop %v2772
    %v2774 = vmul.f32 %v2771, 1.442695
    %v2775 = vpow.pop %v2774
    %v2776 = vadd.f32 %v2773, 1.0
    %v2777 = vadd.f32 %v2775, 1.0
    %v2778 = vrcp.pop %v2776
    %v2779 = vmul.f32 %v2776, %v2778
    %v2780 = vsub.f32 1.0, %v2779
    %v2781 = vmul.f32 %v2778, %v2780
    %v2782 = vadd.f32 %v2778, %v2781
    %vm2783 = vweird.f32 %v2776
    %vm2784 = vweird.f32 %v2778
    %vm2785 = vmor %vm2783, %vm2784
    %v2786 = vsel %vm2785, %v2778, %v2782
    %v2787 = vand.u32 2147483647, %v2776
    %vm2788 = vcmp.eq.f32.partialorder %v2787, 8.507059e+37
    %v2789 = vand.u32 %v2776, 2147483648
    %v2790 = vor.u32 1.1754944e-38, %v2789
    %v2791 = vsel %vm2788, %v2790, %v2786
    %v2792 = vmul.f32 1.0, %v2791
    %v2793 = vrcp.pop %v2777
    %v2794 = vmul.f32 %v2777, %v2793
    %v2795 = vsub.f32 1.0, %v2794
    %v2796 = vmul.f32 %v2793, %v2795
    %v2797 = vadd.f32 %v2793, %v2796
    %vm2798 = vweird.f32 %v2777
    %vm2799 = vweird.f32 %v2793
    %vm2800 = vmor %vm2798, %vm2799
    %v2801 = vsel %vm2800, %v2793, %v2797
    %v2802 = vand.u32 2147483647, %v2777
    %vm2803 = vcmp.eq.f32.partialorder %v2802, 8.507059e+37
    %v2804 = vand.u32 %v2777, 2147483648
    %v2805 = vor.u32 1.1754944e-38, %v2804
    %v2806 = vsel %vm2803, %v2805, %v2801
    %v2807 = vmul.f32 1.0, %v2806
    %v2808 = vtanh.pop %v2768
    %v2809 = vtanh.pop %v2769
    %v2812 = vrot.slane %v2720, 7
    %v2813 = vrot.slane %v2721, 7
    %v2816 = vmul.f32 %v2792, %v2812
    %v2817 = vmul.f32 %v2807, %v2813
    %2820 = vrot.lane.b32.xlu0 %v2808, 96
    %v2821 = vpop.permute.xlu0 %2820
    %2822 = vrot.lane.b32.xlu0 %v2809, 96
    %v2823 = vpop.permute.xlu0 %2822
    %v2826 = vmul.f32 %v2792, %v2821
    %v2827 = vmul.f32 %v2807, %v2823
    %2830 = vrot.lane.b32.xlu0 %v2826, 16
    %v2831 = vpop.permute.xlu0 %2830
    %2832 = vrot.lane.b32.xlu0 %v2827, 16
    %v2833 = vpop.permute.xlu0 %2832
    %v2836 = vadd.f32 %v2816, %v2831
    %v2837 = vadd.f32 %v2817, %v2833
    %v2838 = vtanh.pop %v2836
    %v2839 = vtanh.pop %v2837
    %2842 = vrot.lane.b32.xlu0 %v2838, 32
    %v2843 = vpop.permute.xlu0 %2842
    %2844 = vrot.lane.b32.xlu0 %v2839, 32
    %v2845 = vpop.permute.xlu0 %2844
    %v2848 = vmul.f32 %v2792, %v2843
    %v2849 = vmul.f32 %v2807, %v2845
    %v2850 = vld [vmem:[%s22] sm:$0xff]
    %v2851 = vld [vmem:[%s22 + $0x8] sm:$0xff]
    %v2852 = vld [vmem:[%s22 + $0x10] sm:$0xff]
    %v2853 = vld [vmem:[%s22 + $0x18] sm:$0xff]
    %v2854 = vld [vmem:[%s23] sm:$0xff]
    %v2855 = vld [vmem:[%s23 + $0x8] sm:$0xff]
    %v2858 = vrot.slane %v2848, 3
    %v2859 = vrot.slane %v2849, 2
    %v2860 = vsel %vm1408, %v2859, %v2858
    %2861 = vrot.lane.b32.xlu0 %v2860, 80
    %v2862 = vpop.permute.xlu0 %2861
    %v2863 = vsel %vm195, %v2862, 0
    %2865 = vmatpush.msra.mxu0 0.0
    %2866 = vmatpush.msra.mxu0 0.0
    %2867 = vmatpush.msra.mxu0 0.0
    %2868 = vmatpush.msra.mxu0 0.0
    %2869 = vmatpush.msra.mxu0 0.0
    %2870 = vmatpush.msra.mxu0 0.0
    %2871 = vmatpush.msra.mxu0 0.0
    %2872 = vmatpush.msra.mxu0 0.0
    %2873 = vmatpush.msra.mxu0 0.0
    %2874 = vmatpush.msra.mxu0 0.0
    %2875 = vmatpush.msra.mxu0 0.0
    %2876 = vmatpush.msra.mxu0 0.0
    %2877 = vmatpush.msra.mxu0 0.0
    %2878 = vmatpush.msra.mxu0 0.0
    %2879 = vmatpush.msra.mxu0 %v2855
    %2880 = vmatpush.msra.mxu0 %v2854
    %2881 = vmatmul.f32.gmra.mxu0 %v2863
    %v2882 = vpop.f32.mrf.mxu0
    %v2883 = vadd.f32 0.0, %v2882
    %2884 = vdwg.mxu0
    %v2886 = vsel %vm85, %v1432, 0
    %2888 = vmatpush.msra.mxu0 0.0
    %2889 = vmatpush.msra.mxu0 0.0
    %2890 = vmatpush.msra.mxu0 0.0
    %2891 = vmatpush.msra.mxu0 0.0
    %2892 = vmatpush.msra.mxu0 0.0
    %2893 = vmatpush.msra.mxu0 0.0
    %2894 = vmatpush.msra.mxu0 0.0
    %2895 = vmatpush.msra.mxu0 0.0
    %2896 = vmatpush.msra.mxu0 0.0
    %2897 = vmatpush.msra.mxu0 0.0
    %2898 = vmatpush.msra.mxu0 0.0
    %2899 = vmatpush.msra.mxu0 0.0
    %2900 = vmatpush.msra.mxu0 %v2853
    %2901 = vmatpush.msra.mxu0 %v2852
    %2902 = vmatpush.msra.mxu0 %v2851
    %2903 = vmatpush.msra.mxu0 %v2850
    %2904 = vmatmul.f32.gmra.mxu0 %v2886
    %v2905 = vpop.f32.mrf.mxu0
    %v2906 = vadd.f32 %v2883, %v2905
    %2907 = vdwg.mxu0
    %v2908 = vld [vmem:[%s24] sm:$0x1]
    %v2910 = vperm.slane %v2908, 0
    %v2912 = vadd.f32 %v2906, %v2910
    %vm2913 = vcmask 17408
    %2914 = vst.msk [vmem:[#allocation2] sm:$0x3] %vm2913, %v2912
    // Predicated region
    $region102: #{bert_lstm_forward.1} parent=1 // pred_check
      _
    $region103: #{bert_lstm_forward.1} parent=1 // pred_check_branch
      %2916 = sbr.rel (0) target = $region105
    $region104: #{bert_lstm_forward.1} parent=1 // pred_region
      %2918 = vsyncadd [#allocation3], 0
      %s2920 = sshll.u32 [#allocation2], 4
      %s2921 = int_to_ptr.vmem [resolvable:$true] %s2920
      %s2922 = sshll.u32 %s25, 4
      %s2923 = int_to_ptr.hbm [resolvable:$true] %s2922
      %2925 = dma.vmem_to_hbm [thread:$0]  %s2921, 32, %s2923, [#allocation3]
    $region105: #{bert_lstm_forward.1} parent=1 // pred_fallthru
      _
    // Predicated region
    $region106: #{bert_lstm_forward.1} parent=1 // pred_check
      _
    $region107: #{bert_lstm_forward.1} parent=1 // pred_check_branch
      %2927 = sbr.rel (0) target = $region109
    $region108: #{bert_lstm_forward.1} parent=1 // pred_region
      %2929 = dma.done [#allocation3], 32
    $region109: #{bert_lstm_forward.1} parent=1 // pred_fallthru
      _
    %2930 = vsyncpa [#allocation3], 1

</llo_original>
